<compile_context>
chip_gen: v5e
topology: v5e:2x2
jax: 0.10.0
libtpu: 0.0.40
codegen_flags: <defaults>
</compile_context>

<pallas_src>
import functools

import numpy as np
import jax
import jax.numpy as jnp
from jax import lax
from jax.experimental import pallas as pl
from jax.experimental.pallas import tpu as pltpu


C1 = 16        # conv1 output channels
C2 = 32        # conv2 output channels
KSZ = 5        # conv kernel size
D_OUT = 10
DP = 128       # D_out padded to a full lane width
HP = 256       # fc1 hidden (200) padded to a lane multiple
TB = 8         # batch tile (multiple of the 8-sublane hardware tile)


# ------------------------------- Pallas kernel ------------------------------ #

def fused_kernel(pxc_ref, pxs_ref, w1_ref, b1_ref, swp_ref, w2_ref, b2_ref,
                 fc1w_ref, fc2w_ref, zb_ref, out_ref, p1pad_ref, *, n):
    """Whole ConvLassoNet forward for one batch tile of n samples.

    pxc_ref : (16n, 64)      conv1 8x8 input windows, rows (u, v, sample)
    pxs_ref : (n, 1024)      same windows, sample-major (for the folded skip)
    w1_ref  : (64, 256)      block-conv1 weight, cols (pool-comp | phase | ch)
    b1_ref  : (1, 64)        conv1 bias tiled over the 4 pool phases
    swp_ref : (1024, 128)    skip weight folded onto the input windows
    w2_ref  : (576, 128)     block-conv2 weight, rows (3x3 block | phase | cin)
    b2_ref  : (1, 32)        conv2 bias
    fc1w_ref: (16, 32, 256)  fc1 weight per pooled position (padded hidden)
    fc2w_ref: (256, 128)
    zb_ref  : (1, 128)       skip_b + fc2_b + folded b1/fc1_b contributions
    out_ref : (n, 128)
    p1pad_ref: (6, 6n, 64)   zero-padded pooled conv1 map (halo buffer)
    """
    f32 = jnp.float32

    # ---- conv1: one (16n,64)x(64,256) MXU call (bias folded downstream) ----
    o1 = jnp.dot(pxc_ref[...], w1_ref[...], preferred_element_type=f32)

    # ---- LassoNet skip folded onto the raw input windows: one long-K dot ----
    z = jnp.dot(pxs_ref[...], swp_ref[...], preferred_element_type=f32)  # (n,128)

    # ---- relu + 2x2 maxpool == max over 4 contiguous 64-lane comp blocks ----
    m = jnp.maximum(jnp.maximum(o1[:, 0:64], o1[:, 64:128]),
                    jnp.maximum(o1[:, 128:192], o1[:, 192:256]))
    p1 = jnp.maximum(m + b1_ref[...], 0.0)          # (16n, 64), lanes=(phase,ch)

    # ---- scatter pooled phases into the zero-padded halo buffer ----
    p1pad_ref[...] = jnp.zeros((6, 6 * n, 4 * C1), f32)
    for u in range(4):
        p1pad_ref[1 + u, n:5 * n, :] = p1[u * 4 * n:(u + 1) * 4 * n, :]

    # ---- conv2 (+pool +fc1), per coarse output row; conv2 patches are read
    #      directly as lane-aligned 64-wide slabs (no gather/copy pass) ----
    h = jnp.zeros((n, HP), f32)
    for up in range(4):
        o2 = jnp.zeros((4 * n, 4 * C2), f32)
        for ea in range(3):
            for fb in range(3):
                r0 = (ea * 3 + fb) * 64
                o2 = o2 + jnp.dot(p1pad_ref[up + ea, fb * n:(fb + 4) * n, :],
                                  w2_ref[r0:r0 + 64, :],
                                  preferred_element_type=f32)
        m2 = jnp.maximum(jnp.maximum(o2[:, 0:32], o2[:, 32:64]),
                         jnp.maximum(o2[:, 64:96], o2[:, 96:128]))
        p2 = jnp.maximum(m2 + b2_ref[...], 0.0)      # (4n, C2)
        # TODO(synk): nn.Dropout reproduced as identity (eval mode); stochastic
        # training-mode dropout is not replicated.
        for vp in range(4):
            h = h + jnp.dot(p2[vp * n:(vp + 1) * n, :],
                            fc1w_ref[up * 4 + vp],
                            preferred_element_type=f32)

    # ---- fc2 + skip + all folded biases ----
    out_ref[...] = (z + jnp.dot(h, fc2w_ref[...], preferred_element_type=f32)
                    + zb_ref[...])


# -------------------------- prep-time weight folding ------------------------ #

def prep_params(params):
    """Permute / fold / zero-pad all weights (pure numpy, outside the graph)."""
    w1 = np.asarray(params["conv1_w"], np.float32)    # (C1, 1, 5, 5)
    b1 = np.asarray(params["conv1_b"], np.float32)
    sw = np.asarray(params["skip_w"], np.float32)     # (10, C1*16*16)
    sb = np.asarray(params["skip_b"], np.float32)
    w2 = np.asarray(params["conv2_w"], np.float32)    # (C2, C1, 5, 5)
    b2 = np.asarray(params["conv2_b"], np.float32)
    f1w = np.asarray(params["fc1_w"], np.float32)     # (200, C2*16)
    f1b = np.asarray(params["fc1_b"], np.float32)
    f2w = np.asarray(params["fc2_w"], np.float32)     # (10, 200)
    f2b = np.asarray(params["fc2_b"], np.float32)

    def col1(r, s):
        # conv1 output column: (pool-component i2,j2 | pool-phase qa,qb | ch)
        qa, i2 = divmod(r, 2)
        qb, j2 = divmod(s, 2)
        return (i2 * 2 + j2) * 64 + (qa * 2 + qb) * C1

    # conv1 block weight: rows = 8x8 input window (a,b), cols as above.
    w1big = np.zeros((64, 16 * C1), np.float32)
    for r in range(4):
        for s in range(4):
            c0 = col1(r, s)
            for di in range(KSZ):
                for dj in range(KSZ):
                    w1big[(r + di) * 8 + (s + dj), c0:c0 + C1] = w1[:, 0, di, dj]

    # conv1 bias, applied after pooling, tiled over the 4 pool phases.
    b1vec = np.tile(b1, 4)[None, :]                           # (1, 64)

    # Skip weight folded onto the raw 8x8 input windows (sample-major layout).
    sw4 = sw.reshape(D_OUT, C1, 16, 16)
    swp = np.zeros((16 * 64, DP), np.float32)
    for u in range(4):
        for v in range(4):
            S = np.zeros((16 * C1, D_OUT), np.float32)
            for r in range(4):
                for s in range(4):
                    S[col1(r, s):col1(r, s) + C1, :] = \
                        sw4[:, :, 4 * u + r, 4 * v + s].T
            swp[(u * 4 + v) * 64:(u * 4 + v + 1) * 64, :D_OUT] = w1big @ S

    # conv2 block weight: rows = (3x3 coarse block | phase | cin),
    # cols = (pool-component rho,sig | cout).
    w2big = np.zeros((9 * 64, 4 * C2), np.float32)
    for rho in range(2):
        for sig in range(2):
            for di in range(KSZ):
                for dj in range(KSZ):
                    ea, ia = divmod(rho + di, 2)
                    fb, ib = divmod(sig + dj, 2)
                    r0 = (ea * 3 + fb) * 64 + (ia * 2 + ib) * C1
                    c0 = (rho * 2 + sig) * C2
                    w2big[r0:r0 + C1, c0:c0 + C2] = w2[:, :, di, dj].T
    b2vec = b2[None, :]                                       # (1, 32)

    # fc1 weight per pooled position (NCHW flatten folded in), hidden padded.
    fc1p = np.zeros((16, C2, HP), np.float32)
    f1w3 = f1w.reshape(200, C2, 16)
    for pos2 in range(16):
        fc1p[pos2, :, :200] = f1w3[:, :, pos2].T

    fc2p = np.zeros((HP, DP), np.float32)
    fc2p[:200, :D_OUT] = f2w.T

    # Combined output bias: skip_b + fc2_b + (b1 through the skip) +
    # (fc1_b through fc2).  Dropout is identity in eval mode, so this is exact.
    zb = np.zeros((1, DP), np.float32)
    zb[0, :D_OUT] = sb + f2b + sw4.sum(axis=(2, 3)) @ b1 + f1b @ f2w.T

    prepped = dict(w1big=w1big, b1vec=b1vec, swp=swp, w2big=w2big, b2vec=b2vec,
                   fc1p=fc1p, fc2p=fc2p, zb=zb)
    return {k: jnp.asarray(v) for k, v in prepped.items()}


# --------------------------------- wrapper ---------------------------------- #

def _resident_spec(shape):
    nd = len(shape)
    return pl.BlockSpec(tuple(shape), lambda b, _nd=nd: (0,) * _nd)


def conv_lassonet_forward(prepped, x):
    """x: (N, 1, 16, 16) float32 -> (N, D_OUT)."""
    batch = x.shape[0]
    n_pad = ((batch + TB - 1) // TB) * TB
    nt = n_pad // TB
    if n_pad != batch:
        x = jnp.pad(x, ((0, n_pad - batch), (0, 0), (0, 0), (0, 0)))

    # 8x8 / stride-4 input windows for the block conv: one fused XLA op.
    patches = lax.conv_general_dilated_patches(
        x, filter_shape=(8, 8), window_strides=(4, 4),
        padding=((2, 2), (2, 2)))                       # (n_pad, 64, 4, 4)
    # conv layout: batch-tile major, then rows (u, v, sample-in-tile).
    pxc = (patches.transpose(2, 3, 0, 1)                # (4, 4, n_pad, 64)
           .reshape(4, 4, nt, TB, 64)
           .transpose(2, 0, 1, 3, 4)
           .reshape(nt * 16 * TB, 64))
    # skip layout: sample-major, lanes (pos | window element).
    pxs = patches.transpose(0, 2, 3, 1).reshape(n_pad, 16 * 64)

    weights = (prepped["w1big"], prepped["b1vec"], prepped["swp"],
               prepped["w2big"], prepped["b2vec"], prepped["fc1p"],
               prepped["fc2p"], prepped["zb"])

    out = pl.pallas_call(
        functools.partial(fused_kernel, n=TB),
        out_shape=jax.ShapeDtypeStruct((n_pad, DP), jnp.float32),
        grid=(nt,),
        in_specs=[pl.BlockSpec((16 * TB, 64), lambda b: (b, 0)),
                  pl.BlockSpec((TB, 16 * 64), lambda b: (b, 0))]
                 + [_resident_spec(w.shape) for w in weights],
        out_specs=pl.BlockSpec((TB, DP), lambda b: (b, 0)),
        scratch_shapes=[
            pltpu.VMEM((6, 6 * TB, 4 * C1), jnp.float32),   # padded pool1 halo
        ],
        compiler_params=pltpu.CompilerParams(
            dimension_semantics=("parallel",)),
    )(pxc, pxs, *weights)
    return out[:batch, :D_OUT]


# --------------------------- pure-JAX reference ----------------------------- #

def ref_forward(params, x):
    dn = ("NCHW", "OIHW", "NCHW")
    N = x.shape[0]
    o1 = lax.conv_general_dilated(x, params["conv1_w"], (1, 1),
                                  ((2, 2), (2, 2)), dimension_numbers=dn)
    o1 = o1 + params["conv1_b"][None, :, None, None]
    z1 = o1.reshape(N, -1) @ params["skip_w"].T + params["skip_b"]
    a1 = jnp.maximum(o1, 0.0)
    _, Ca, Ha, Wa = a1.shape
    p1 = a1.reshape(N, Ca, Ha // 2, 2, Wa // 2, 2).max(axis=(3, 5))
    o2 = lax.conv_general_dilated(p1, params["conv2_w"], (1, 1),
                                  ((2, 2), (2, 2)), dimension_numbers=dn)
    o2 = o2 + params["conv2_b"][None, :, None, None]
    a2 = jnp.maximum(o2, 0.0)
    _, Cb, Hb, Wb = a2.shape
    p2 = a2.reshape(N, Cb, Hb // 2, 2, Wb // 2, 2).max(axis=(3, 5))
    h = p2.reshape(N, -1) @ params["fc1_w"].T + params["fc1_b"]
    z2 = h @ params["fc2_w"].T + params["fc2_b"]
    return z1 + z2


# ----------------------------------- main ----------------------------------- #

def init_params(key, D_in=(16, 16), D_out=10):
    c1, c2, k = C1, C2, KSZ
    h_out, w_out = D_in
    f_skip = c1 * h_out * w_out
    f_fc1 = (D_in[0] * D_in[1] // 16) * c2
    keys = jax.random.split(key, 10)
    s = 0.05
    return {
        "conv1_w": s * jax.random.normal(keys[0], (c1, 1, k, k), jnp.float32),
        "conv1_b": s * jax.random.normal(keys[1], (c1,), jnp.float32),
        "skip_w":  s * jax.random.normal(keys[2], (D_out, f_skip), jnp.float32),
        "skip_b":  s * jax.random.normal(keys[3], (D_out,), jnp.float32),
        "conv2_w": s * jax.random.normal(keys[4], (c2, c1, k, k), jnp.float32),
        "conv2_b": s * jax.random.normal(keys[5], (c2,), jnp.float32),
        "fc1_w":   s * jax.random.normal(keys[6], (200, f_fc1), jnp.float32),
        "fc1_b":   s * jax.random.normal(keys[7], (200,), jnp.float32),
        "fc2_w":   s * jax.random.normal(keys[8], (D_out, 200), jnp.float32),
        "fc2_b":   s * jax.random.normal(keys[9], (D_out,), jnp.float32),
    }


if __name__ == "__main__":
    key = jax.random.PRNGKey(0)
    pkey, xkey = jax.random.split(key)

    D_in = (16, 16)
    batch = 2

    params = init_params(pkey, D_in=D_in, D_out=D_OUT)
    prepped = prep_params(params)
    x = jax.random.normal(xkey, (batch, 1, D_in[0], D_in[1]), jnp.float32)

    fwd = jax.jit(conv_lassonet_forward)
    out = jax.block_until_ready(fwd(prepped, x))

    ref = ref_forward(params, x)
    assert out.shape == (batch, D_OUT), out.shape
    err = jnp.max(jnp.abs(out - ref))
    assert jnp.allclose(out, ref, rtol=1e-3, atol=1e-3), f"max abs err {err}"

    print("KERNEL_OK")
</pallas_src>

<mosaic_0001>
module attributes {stable_mosaic.version = 11 : i64} {
  func.func @fused_kernel(%arg0: i32, %arg1: memref<128x64xf32, #tpu.memory_space<vmem>>, %arg2: memref<8x1024xf32, #tpu.memory_space<vmem>>, %arg3: memref<64x256xf32, #tpu.memory_space<vmem>>, %arg4: memref<1x64xf32, #tpu.memory_space<vmem>>, %arg5: memref<1024x128xf32, #tpu.memory_space<vmem>>, %arg6: memref<576x128xf32, #tpu.memory_space<vmem>>, %arg7: memref<1x32xf32, #tpu.memory_space<vmem>>, %arg8: memref<16x32x256xf32, #tpu.memory_space<vmem>>, %arg9: memref<256x128xf32, #tpu.memory_space<vmem>>, %arg10: memref<1x128xf32, #tpu.memory_space<vmem>>, %arg11: memref<8x128xf32, #tpu.memory_space<vmem>>, %arg12: memref<6x48x64xf32, #tpu.memory_space<vmem>>) attributes {dimension_semantics = [#tpu.dimension_semantics<parallel>], iteration_bounds = array<i64: 1>, scalar_prefetch = 0 : i64, scratch_operands = 1 : i64, tpu.core_type = #tpu.core_type<tc>, window_params = [{transform_indices = @transform_0, window_bounds = array<i64: 128, 64>}, {transform_indices = @transform_1, window_bounds = array<i64: 8, 1024>}, {pipeline_mode = #tpu.pipeline_mode<synchronous>, transform_indices = @transform_2, window_bounds = array<i64: 64, 256>}, {pipeline_mode = #tpu.pipeline_mode<synchronous>, transform_indices = @transform_3, window_bounds = array<i64: 1, 64>}, {pipeline_mode = #tpu.pipeline_mode<synchronous>, transform_indices = @transform_4, window_bounds = array<i64: 1024, 128>}, {pipeline_mode = #tpu.pipeline_mode<synchronous>, transform_indices = @transform_5, window_bounds = array<i64: 576, 128>}, {pipeline_mode = #tpu.pipeline_mode<synchronous>, transform_indices = @transform_6, window_bounds = array<i64: 1, 32>}, {pipeline_mode = #tpu.pipeline_mode<synchronous>, transform_indices = @transform_7, window_bounds = array<i64: 16, 32, 256>}, {pipeline_mode = #tpu.pipeline_mode<synchronous>, transform_indices = @transform_8, window_bounds = array<i64: 256, 128>}, {pipeline_mode = #tpu.pipeline_mode<synchronous>, transform_indices = @transform_9, window_bounds = array<i64: 1, 128>}, {transform_indices = @transform_10, window_bounds = array<i64: 8, 128>}]} {
    %c0 = arith.constant 0 : index
    %c0_0 = arith.constant 0 : index
    %0 = vector.load %arg1[%c0, %c0_0] : memref<128x64xf32, #tpu.memory_space<vmem>>, vector<128x64xf32>
    %c0_1 = arith.constant 0 : index
    %c0_2 = arith.constant 0 : index
    %1 = vector.load %arg3[%c0_1, %c0_2] : memref<64x256xf32, #tpu.memory_space<vmem>>, vector<64x256xf32>
    %cst = arith.constant dense<0.000000e+00> : vector<128x256xf32>
    %2 = tpu.matmul %0, %1, %cst {dimension_numbers = #tpu.dot_dimension_numbers<[1], [0], [0], [1], [0, 0, 1, 1], [], []>} : vector<128x64xf32>, vector<64x256xf32>, vector<128x256xf32> -> vector<128x256xf32>
    %c0_3 = arith.constant 0 : index
    %c0_4 = arith.constant 0 : index
    %3 = vector.load %arg2[%c0_3, %c0_4] : memref<8x1024xf32, #tpu.memory_space<vmem>>, vector<8x1024xf32>
    %c0_5 = arith.constant 0 : index
    %c0_6 = arith.constant 0 : index
    %4 = vector.load %arg5[%c0_5, %c0_6] : memref<1024x128xf32, #tpu.memory_space<vmem>>, vector<1024x128xf32>
    %cst_7 = arith.constant dense<0.000000e+00> : vector<8x128xf32>
    %5 = tpu.matmul %3, %4, %cst_7 {dimension_numbers = #tpu.dot_dimension_numbers<[1], [0], [0], [1], [0, 0, 1, 1], [], []>} : vector<8x1024xf32>, vector<1024x128xf32>, vector<8x128xf32> -> vector<8x128xf32>
    %6 = vector.extract_strided_slice %2 {offsets = [0, 0], sizes = [128, 64], strides = [1, 1]} : vector<128x256xf32> to vector<128x64xf32>
    %7 = vector.extract_strided_slice %2 {offsets = [0, 64], sizes = [128, 64], strides = [1, 1]} : vector<128x256xf32> to vector<128x64xf32>
    %8 = arith.maximumf %6, %7 : vector<128x64xf32>
    %9 = vector.extract_strided_slice %2 {offsets = [0, 128], sizes = [128, 64], strides = [1, 1]} : vector<128x256xf32> to vector<128x64xf32>
    %10 = vector.extract_strided_slice %2 {offsets = [0, 192], sizes = [128, 64], strides = [1, 1]} : vector<128x256xf32> to vector<128x64xf32>
    %11 = arith.maximumf %9, %10 : vector<128x64xf32>
    %12 = arith.maximumf %8, %11 : vector<128x64xf32>
    %c0_8 = arith.constant 0 : index
    %c0_9 = arith.constant 0 : index
    %13 = vector.load %arg4[%c0_8, %c0_9] : memref<1x64xf32, #tpu.memory_space<vmem>>, vector<1x64xf32>
    %14 = vector.broadcast %13 : vector<1x64xf32> to vector<128x64xf32>
    %15 = arith.addf %12, %14 : vector<128x64xf32>
    %cst_10 = arith.constant 0.000000e+00 : f32
    %16 = vector.broadcast %cst_10 : f32 to vector<128x64xf32>
    %17 = arith.maximumf %15, %16 : vector<128x64xf32>
    %cst_11 = arith.constant 0.000000e+00 : f32
    %18 = vector.broadcast %cst_11 : f32 to vector<6x48x64xf32>
    %c0_12 = arith.constant 0 : index
    %c0_13 = arith.constant 0 : index
    %c0_14 = arith.constant 0 : index
    %19 = vector.load %arg12[%c0_12, %c0_13, %c0_14] : memref<6x48x64xf32, #tpu.memory_space<vmem>>, vector<6x48x64xf32>
    tpu.vector_store %arg12[%c0_12, %c0_13, %c0_14], %18 {strides = array<i32>} : memref<6x48x64xf32, #tpu.memory_space<vmem>>, vector<6x48x64xf32>,
    %20 = vector.extract_strided_slice %17 {offsets = [0, 0], sizes = [32, 64], strides = [1, 1]} : vector<128x64xf32> to vector<32x64xf32>
    %c1 = arith.constant 1 : index
    %c8 = arith.constant 8 : index
    %c0_15 = arith.constant 0 : index
    %21 = vector.load %arg12[%c1, %c8, %c0_15] : memref<6x48x64xf32, #tpu.memory_space<vmem>>, vector<1x32x64xf32>
    %22 = vector.shape_cast %21 : vector<1x32x64xf32> to vector<32x64xf32>
    %23 = vector.shape_cast %20 : vector<32x64xf32> to vector<1x32x64xf32>
    tpu.vector_store %arg12[%c1, %c8, %c0_15], %23 {strides = array<i32>} : memref<6x48x64xf32, #tpu.memory_space<vmem>>, vector<1x32x64xf32>,
    %24 = vector.extract_strided_slice %17 {offsets = [32, 0], sizes = [32, 64], strides = [1, 1]} : vector<128x64xf32> to vector<32x64xf32>
    %c2 = arith.constant 2 : index
    %c8_16 = arith.constant 8 : index
    %c0_17 = arith.constant 0 : index
    %25 = vector.load %arg12[%c2, %c8_16, %c0_17] : memref<6x48x64xf32, #tpu.memory_space<vmem>>, vector<1x32x64xf32>
    %26 = vector.shape_cast %25 : vector<1x32x64xf32> to vector<32x64xf32>
    %27 = vector.shape_cast %24 : vector<32x64xf32> to vector<1x32x64xf32>
    tpu.vector_store %arg12[%c2, %c8_16, %c0_17], %27 {strides = array<i32>} : memref<6x48x64xf32, #tpu.memory_space<vmem>>, vector<1x32x64xf32>,
    %28 = vector.extract_strided_slice %17 {offsets = [64, 0], sizes = [32, 64], strides = [1, 1]} : vector<128x64xf32> to vector<32x64xf32>
    %c3 = arith.constant 3 : index
    %c8_18 = arith.constant 8 : index
    %c0_19 = arith.constant 0 : index
    %29 = vector.load %arg12[%c3, %c8_18, %c0_19] : memref<6x48x64xf32, #tpu.memory_space<vmem>>, vector<1x32x64xf32>
    %30 = vector.shape_cast %29 : vector<1x32x64xf32> to vector<32x64xf32>
    %31 = vector.shape_cast %28 : vector<32x64xf32> to vector<1x32x64xf32>
    tpu.vector_store %arg12[%c3, %c8_18, %c0_19], %31 {strides = array<i32>} : memref<6x48x64xf32, #tpu.memory_space<vmem>>, vector<1x32x64xf32>,
    %32 = vector.extract_strided_slice %17 {offsets = [96, 0], sizes = [32, 64], strides = [1, 1]} : vector<128x64xf32> to vector<32x64xf32>
    %c4 = arith.constant 4 : index
    %c8_20 = arith.constant 8 : index
    %c0_21 = arith.constant 0 : index
    %33 = vector.load %arg12[%c4, %c8_20, %c0_21] : memref<6x48x64xf32, #tpu.memory_space<vmem>>, vector<1x32x64xf32>
    %34 = vector.shape_cast %33 : vector<1x32x64xf32> to vector<32x64xf32>
    %35 = vector.shape_cast %32 : vector<32x64xf32> to vector<1x32x64xf32>
    tpu.vector_store %arg12[%c4, %c8_20, %c0_21], %35 {strides = array<i32>} : memref<6x48x64xf32, #tpu.memory_space<vmem>>, vector<1x32x64xf32>,
    %cst_22 = arith.constant 0.000000e+00 : f32
    %36 = vector.broadcast %cst_22 : f32 to vector<8x256xf32>
    %cst_23 = arith.constant 0.000000e+00 : f32
    %37 = vector.broadcast %cst_23 : f32 to vector<32x128xf32>
    %c0_24 = arith.constant 0 : index
    %c0_25 = arith.constant 0 : index
    %c0_26 = arith.constant 0 : index
    %38 = vector.load %arg12[%c0_24, %c0_25, %c0_26] : memref<6x48x64xf32, #tpu.memory_space<vmem>>, vector<1x32x64xf32>
    %39 = vector.shape_cast %38 : vector<1x32x64xf32> to vector<32x64xf32>
    %c0_27 = arith.constant 0 : index
    %c0_28 = arith.constant 0 : index
    %40 = vector.load %arg6[%c0_27, %c0_28] : memref<576x128xf32, #tpu.memory_space<vmem>>, vector<64x128xf32>
    %cst_29 = arith.constant dense<0.000000e+00> : vector<32x128xf32>
    %41 = tpu.matmul %39, %40, %cst_29 {dimension_numbers = #tpu.dot_dimension_numbers<[1], [0], [0], [1], [0, 0, 1, 1], [], []>} : vector<32x64xf32>, vector<64x128xf32>, vector<32x128xf32> -> vector<32x128xf32>
    %42 = arith.addf %37, %41 : vector<32x128xf32>
    %c0_30 = arith.constant 0 : index
    %c8_31 = arith.constant 8 : index
    %c0_32 = arith.constant 0 : index
    %43 = vector.load %arg12[%c0_30, %c8_31, %c0_32] : memref<6x48x64xf32, #tpu.memory_space<vmem>>, vector<1x32x64xf32>
    %44 = vector.shape_cast %43 : vector<1x32x64xf32> to vector<32x64xf32>
    %c64 = arith.constant 64 : index
    %c0_33 = arith.constant 0 : index
    %45 = vector.load %arg6[%c64, %c0_33] : memref<576x128xf32, #tpu.memory_space<vmem>>, vector<64x128xf32>
    %cst_34 = arith.constant dense<0.000000e+00> : vector<32x128xf32>
    %46 = tpu.matmul %44, %45, %cst_34 {dimension_numbers = #tpu.dot_dimension_numbers<[1], [0], [0], [1], [0, 0, 1, 1], [], []>} : vector<32x64xf32>, vector<64x128xf32>, vector<32x128xf32> -> vector<32x128xf32>
    %47 = arith.addf %42, %46 : vector<32x128xf32>
    %c0_35 = arith.constant 0 : index
    %c16 = arith.constant 16 : index
    %c0_36 = arith.constant 0 : index
    %48 = vector.load %arg12[%c0_35, %c16, %c0_36] : memref<6x48x64xf32, #tpu.memory_space<vmem>>, vector<1x32x64xf32>
    %49 = vector.shape_cast %48 : vector<1x32x64xf32> to vector<32x64xf32>
    %c128 = arith.constant 128 : index
    %c0_37 = arith.constant 0 : index
    %50 = vector.load %arg6[%c128, %c0_37] : memref<576x128xf32, #tpu.memory_space<vmem>>, vector<64x128xf32>
    %cst_38 = arith.constant dense<0.000000e+00> : vector<32x128xf32>
    %51 = tpu.matmul %49, %50, %cst_38 {dimension_numbers = #tpu.dot_dimension_numbers<[1], [0], [0], [1], [0, 0, 1, 1], [], []>} : vector<32x64xf32>, vector<64x128xf32>, vector<32x128xf32> -> vector<32x128xf32>
    %52 = arith.addf %47, %51 : vector<32x128xf32>
    %c1_39 = arith.constant 1 : index
    %c0_40 = arith.constant 0 : index
    %c0_41 = arith.constant 0 : index
    %53 = vector.load %arg12[%c1_39, %c0_40, %c0_41] : memref<6x48x64xf32, #tpu.memory_space<vmem>>, vector<1x32x64xf32>
    %54 = vector.shape_cast %53 : vector<1x32x64xf32> to vector<32x64xf32>
    %c192 = arith.constant 192 : index
    %c0_42 = arith.constant 0 : index
    %55 = vector.load %arg6[%c192, %c0_42] : memref<576x128xf32, #tpu.memory_space<vmem>>, vector<64x128xf32>
    %cst_43 = arith.constant dense<0.000000e+00> : vector<32x128xf32>
    %56 = tpu.matmul %54, %55, %cst_43 {dimension_numbers = #tpu.dot_dimension_numbers<[1], [0], [0], [1], [0, 0, 1, 1], [], []>} : vector<32x64xf32>, vector<64x128xf32>, vector<32x128xf32> -> vector<32x128xf32>
    %57 = arith.addf %52, %56 : vector<32x128xf32>
    %c1_44 = arith.constant 1 : index
    %c8_45 = arith.constant 8 : index
    %c0_46 = arith.constant 0 : index
    %58 = vector.load %arg12[%c1_44, %c8_45, %c0_46] : memref<6x48x64xf32, #tpu.memory_space<vmem>>, vector<1x32x64xf32>
    %59 = vector.shape_cast %58 : vector<1x32x64xf32> to vector<32x64xf32>
    %c256 = arith.constant 256 : index
    %c0_47 = arith.constant 0 : index
    %60 = vector.load %arg6[%c256, %c0_47] : memref<576x128xf32, #tpu.memory_space<vmem>>, vector<64x128xf32>
    %cst_48 = arith.constant dense<0.000000e+00> : vector<32x128xf32>
    %61 = tpu.matmul %59, %60, %cst_48 {dimension_numbers = #tpu.dot_dimension_numbers<[1], [0], [0], [1], [0, 0, 1, 1], [], []>} : vector<32x64xf32>, vector<64x128xf32>, vector<32x128xf32> -> vector<32x128xf32>
    %62 = arith.addf %57, %61 : vector<32x128xf32>
    %c1_49 = arith.constant 1 : index
    %c16_50 = arith.constant 16 : index
    %c0_51 = arith.constant 0 : index
    %63 = vector.load %arg12[%c1_49, %c16_50, %c0_51] : memref<6x48x64xf32, #tpu.memory_space<vmem>>, vector<1x32x64xf32>
    %64 = vector.shape_cast %63 : vector<1x32x64xf32> to vector<32x64xf32>
    %c320 = arith.constant 320 : index
    %c0_52 = arith.constant 0 : index
    %65 = vector.load %arg6[%c320, %c0_52] : memref<576x128xf32, #tpu.memory_space<vmem>>, vector<64x128xf32>
    %cst_53 = arith.constant dense<0.000000e+00> : vector<32x128xf32>
    %66 = tpu.matmul %64, %65, %cst_53 {dimension_numbers = #tpu.dot_dimension_numbers<[1], [0], [0], [1], [0, 0, 1, 1], [], []>} : vector<32x64xf32>, vector<64x128xf32>, vector<32x128xf32> -> vector<32x128xf32>
    %67 = arith.addf %62, %66 : vector<32x128xf32>
    %c2_54 = arith.constant 2 : index
    %c0_55 = arith.constant 0 : index
    %c0_56 = arith.constant 0 : index
    %68 = vector.load %arg12[%c2_54, %c0_55, %c0_56] : memref<6x48x64xf32, #tpu.memory_space<vmem>>, vector<1x32x64xf32>
    %69 = vector.shape_cast %68 : vector<1x32x64xf32> to vector<32x64xf32>
    %c384 = arith.constant 384 : index
    %c0_57 = arith.constant 0 : index
    %70 = vector.load %arg6[%c384, %c0_57] : memref<576x128xf32, #tpu.memory_space<vmem>>, vector<64x128xf32>
    %cst_58 = arith.constant dense<0.000000e+00> : vector<32x128xf32>
    %71 = tpu.matmul %69, %70, %cst_58 {dimension_numbers = #tpu.dot_dimension_numbers<[1], [0], [0], [1], [0, 0, 1, 1], [], []>} : vector<32x64xf32>, vector<64x128xf32>, vector<32x128xf32> -> vector<32x128xf32>
    %72 = arith.addf %67, %71 : vector<32x128xf32>
    %c2_59 = arith.constant 2 : index
    %c8_60 = arith.constant 8 : index
    %c0_61 = arith.constant 0 : index
    %73 = vector.load %arg12[%c2_59, %c8_60, %c0_61] : memref<6x48x64xf32, #tpu.memory_space<vmem>>, vector<1x32x64xf32>
    %74 = vector.shape_cast %73 : vector<1x32x64xf32> to vector<32x64xf32>
    %c448 = arith.constant 448 : index
    %c0_62 = arith.constant 0 : index
    %75 = vector.load %arg6[%c448, %c0_62] : memref<576x128xf32, #tpu.memory_space<vmem>>, vector<64x128xf32>
    %cst_63 = arith.constant dense<0.000000e+00> : vector<32x128xf32>
    %76 = tpu.matmul %74, %75, %cst_63 {dimension_numbers = #tpu.dot_dimension_numbers<[1], [0], [0], [1], [0, 0, 1, 1], [], []>} : vector<32x64xf32>, vector<64x128xf32>, vector<32x128xf32> -> vector<32x128xf32>
    %77 = arith.addf %72, %76 : vector<32x128xf32>
    %c2_64 = arith.constant 2 : index
    %c16_65 = arith.constant 16 : index
    %c0_66 = arith.constant 0 : index
    %78 = vector.load %arg12[%c2_64, %c16_65, %c0_66] : memref<6x48x64xf32, #tpu.memory_space<vmem>>, vector<1x32x64xf32>
    %79 = vector.shape_cast %78 : vector<1x32x64xf32> to vector<32x64xf32>
    %c512 = arith.constant 512 : index
    %c0_67 = arith.constant 0 : index
    %80 = vector.load %arg6[%c512, %c0_67] : memref<576x128xf32, #tpu.memory_space<vmem>>, vector<64x128xf32>
    %cst_68 = arith.constant dense<0.000000e+00> : vector<32x128xf32>
    %81 = tpu.matmul %79, %80, %cst_68 {dimension_numbers = #tpu.dot_dimension_numbers<[1], [0], [0], [1], [0, 0, 1, 1], [], []>} : vector<32x64xf32>, vector<64x128xf32>, vector<32x128xf32> -> vector<32x128xf32>
    %82 = arith.addf %77, %81 : vector<32x128xf32>
    %83 = vector.extract_strided_slice %82 {offsets = [0, 0], sizes = [32, 32], strides = [1, 1]} : vector<32x128xf32> to vector<32x32xf32>
    %84 = vector.extract_strided_slice %82 {offsets = [0, 32], sizes = [32, 32], strides = [1, 1]} : vector<32x128xf32> to vector<32x32xf32>
    %85 = arith.maximumf %83, %84 : vector<32x32xf32>
    %86 = vector.extract_strided_slice %82 {offsets = [0, 64], sizes = [32, 32], strides = [1, 1]} : vector<32x128xf32> to vector<32x32xf32>
    %87 = vector.extract_strided_slice %82 {offsets = [0, 96], sizes = [32, 32], strides = [1, 1]} : vector<32x128xf32> to vector<32x32xf32>
    %88 = arith.maximumf %86, %87 : vector<32x32xf32>
    %89 = arith.maximumf %85, %88 : vector<32x32xf32>
    %c0_69 = arith.constant 0 : index
    %c0_70 = arith.constant 0 : index
    %90 = vector.load %arg7[%c0_69, %c0_70] : memref<1x32xf32, #tpu.memory_space<vmem>>, vector<1x32xf32>
    %91 = vector.broadcast %90 : vector<1x32xf32> to vector<32x32xf32>
    %92 = arith.addf %89, %91 : vector<32x32xf32>
    %cst_71 = arith.constant 0.000000e+00 : f32
    %93 = vector.broadcast %cst_71 : f32 to vector<32x32xf32>
    %94 = arith.maximumf %92, %93 : vector<32x32xf32>
    %95 = vector.extract_strided_slice %94 {offsets = [0, 0], sizes = [8, 32], strides = [1, 1]} : vector<32x32xf32> to vector<8x32xf32>
    %c0_72 = arith.constant 0 : index
    %c0_73 = arith.constant 0 : index
    %c0_74 = arith.constant 0 : index
    %96 = vector.load %arg8[%c0_72, %c0_73, %c0_74] : memref<16x32x256xf32, #tpu.memory_space<vmem>>, vector<1x32x256xf32>
    %97 = vector.shape_cast %96 : vector<1x32x256xf32> to vector<32x256xf32>
    %cst_75 = arith.constant dense<0.000000e+00> : vector<8x256xf32>
    %98 = tpu.matmul %95, %97, %cst_75 {dimension_numbers = #tpu.dot_dimension_numbers<[1], [0], [0], [1], [0, 0, 1, 1], [], []>} : vector<8x32xf32>, vector<32x256xf32>, vector<8x256xf32> -> vector<8x256xf32>
    %99 = arith.addf %36, %98 : vector<8x256xf32>
    %100 = vector.extract_strided_slice %94 {offsets = [8, 0], sizes = [8, 32], strides = [1, 1]} : vector<32x32xf32> to vector<8x32xf32>
    %c1_76 = arith.constant 1 : index
    %c0_77 = arith.constant 0 : index
    %c0_78 = arith.constant 0 : index
    %101 = vector.load %arg8[%c1_76, %c0_77, %c0_78] : memref<16x32x256xf32, #tpu.memory_space<vmem>>, vector<1x32x256xf32>
    %102 = vector.shape_cast %101 : vector<1x32x256xf32> to vector<32x256xf32>
    %cst_79 = arith.constant dense<0.000000e+00> : vector<8x256xf32>
    %103 = tpu.matmul %100, %102, %cst_79 {dimension_numbers = #tpu.dot_dimension_numbers<[1], [0], [0], [1], [0, 0, 1, 1], [], []>} : vector<8x32xf32>, vector<32x256xf32>, vector<8x256xf32> -> vector<8x256xf32>
    %104 = arith.addf %99, %103 : vector<8x256xf32>
    %105 = vector.extract_strided_slice %94 {offsets = [16, 0], sizes = [8, 32], strides = [1, 1]} : vector<32x32xf32> to vector<8x32xf32>
    %c2_80 = arith.constant 2 : index
    %c0_81 = arith.constant 0 : index
    %c0_82 = arith.constant 0 : index
    %106 = vector.load %arg8[%c2_80, %c0_81, %c0_82] : memref<16x32x256xf32, #tpu.memory_space<vmem>>, vector<1x32x256xf32>
    %107 = vector.shape_cast %106 : vector<1x32x256xf32> to vector<32x256xf32>
    %cst_83 = arith.constant dense<0.000000e+00> : vector<8x256xf32>
    %108 = tpu.matmul %105, %107, %cst_83 {dimension_numbers = #tpu.dot_dimension_numbers<[1], [0], [0], [1], [0, 0, 1, 1], [], []>} : vector<8x32xf32>, vector<32x256xf32>, vector<8x256xf32> -> vector<8x256xf32>
    %109 = arith.addf %104, %108 : vector<8x256xf32>
    %110 = vector.extract_strided_slice %94 {offsets = [24, 0], sizes = [8, 32], strides = [1, 1]} : vector<32x32xf32> to vector<8x32xf32>
    %c3_84 = arith.constant 3 : index
    %c0_85 = arith.constant 0 : index
    %c0_86 = arith.constant 0 : index
    %111 = vector.load %arg8[%c3_84, %c0_85, %c0_86] : memref<16x32x256xf32, #tpu.memory_space<vmem>>, vector<1x32x256xf32>
    %112 = vector.shape_cast %111 : vector<1x32x256xf32> to vector<32x256xf32>
    %cst_87 = arith.constant dense<0.000000e+00> : vector<8x256xf32>
    %113 = tpu.matmul %110, %112, %cst_87 {dimension_numbers = #tpu.dot_dimension_numbers<[1], [0], [0], [1], [0, 0, 1, 1], [], []>} : vector<8x32xf32>, vector<32x256xf32>, vector<8x256xf32> -> vector<8x256xf32>
    %114 = arith.addf %109, %113 : vector<8x256xf32>
    %cst_88 = arith.constant 0.000000e+00 : f32
    %115 = vector.broadcast %cst_88 : f32 to vector<32x128xf32>
    %c1_89 = arith.constant 1 : index
    %c0_90 = arith.constant 0 : index
    %c0_91 = arith.constant 0 : index
    %116 = vector.load %arg12[%c1_89, %c0_90, %c0_91] : memref<6x48x64xf32, #tpu.memory_space<vmem>>, vector<1x32x64xf32>
    %117 = vector.shape_cast %116 : vector<1x32x64xf32> to vector<32x64xf32>
    %c0_92 = arith.constant 0 : index
    %c0_93 = arith.constant 0 : index
    %118 = vector.load %arg6[%c0_92, %c0_93] : memref<576x128xf32, #tpu.memory_space<vmem>>, vector<64x128xf32>
    %cst_94 = arith.constant dense<0.000000e+00> : vector<32x128xf32>
    %119 = tpu.matmul %117, %118, %cst_94 {dimension_numbers = #tpu.dot_dimension_numbers<[1], [0], [0], [1], [0, 0, 1, 1], [], []>} : vector<32x64xf32>, vector<64x128xf32>, vector<32x128xf32> -> vector<32x128xf32>
    %120 = arith.addf %115, %119 : vector<32x128xf32>
    %c1_95 = arith.constant 1 : index
    %c8_96 = arith.constant 8 : index
    %c0_97 = arith.constant 0 : index
    %121 = vector.load %arg12[%c1_95, %c8_96, %c0_97] : memref<6x48x64xf32, #tpu.memory_space<vmem>>, vector<1x32x64xf32>
    %122 = vector.shape_cast %121 : vector<1x32x64xf32> to vector<32x64xf32>
    %c64_98 = arith.constant 64 : index
    %c0_99 = arith.constant 0 : index
    %123 = vector.load %arg6[%c64_98, %c0_99] : memref<576x128xf32, #tpu.memory_space<vmem>>, vector<64x128xf32>
    %cst_100 = arith.constant dense<0.000000e+00> : vector<32x128xf32>
    %124 = tpu.matmul %122, %123, %cst_100 {dimension_numbers = #tpu.dot_dimension_numbers<[1], [0], [0], [1], [0, 0, 1, 1], [], []>} : vector<32x64xf32>, vector<64x128xf32>, vector<32x128xf32> -> vector<32x128xf32>
    %125 = arith.addf %120, %124 : vector<32x128xf32>
    %c1_101 = arith.constant 1 : index
    %c16_102 = arith.constant 16 : index
    %c0_103 = arith.constant 0 : index
    %126 = vector.load %arg12[%c1_101, %c16_102, %c0_103] : memref<6x48x64xf32, #tpu.memory_space<vmem>>, vector<1x32x64xf32>
    %127 = vector.shape_cast %126 : vector<1x32x64xf32> to vector<32x64xf32>
    %c128_104 = arith.constant 128 : index
    %c0_105 = arith.constant 0 : index
    %128 = vector.load %arg6[%c128_104, %c0_105] : memref<576x128xf32, #tpu.memory_space<vmem>>, vector<64x128xf32>
    %cst_106 = arith.constant dense<0.000000e+00> : vector<32x128xf32>
    %129 = tpu.matmul %127, %128, %cst_106 {dimension_numbers = #tpu.dot_dimension_numbers<[1], [0], [0], [1], [0, 0, 1, 1], [], []>} : vector<32x64xf32>, vector<64x128xf32>, vector<32x128xf32> -> vector<32x128xf32>
    %130 = arith.addf %125, %129 : vector<32x128xf32>
    %c2_107 = arith.constant 2 : index
    %c0_108 = arith.constant 0 : index
    %c0_109 = arith.constant 0 : index
    %131 = vector.load %arg12[%c2_107, %c0_108, %c0_109] : memref<6x48x64xf32, #tpu.memory_space<vmem>>, vector<1x32x64xf32>
    %132 = vector.shape_cast %131 : vector<1x32x64xf32> to vector<32x64xf32>
    %c192_110 = arith.constant 192 : index
    %c0_111 = arith.constant 0 : index
    %133 = vector.load %arg6[%c192_110, %c0_111] : memref<576x128xf32, #tpu.memory_space<vmem>>, vector<64x128xf32>
    %cst_112 = arith.constant dense<0.000000e+00> : vector<32x128xf32>
    %134 = tpu.matmul %132, %133, %cst_112 {dimension_numbers = #tpu.dot_dimension_numbers<[1], [0], [0], [1], [0, 0, 1, 1], [], []>} : vector<32x64xf32>, vector<64x128xf32>, vector<32x128xf32> -> vector<32x128xf32>
    %135 = arith.addf %130, %134 : vector<32x128xf32>
    %c2_113 = arith.constant 2 : index
    %c8_114 = arith.constant 8 : index
    %c0_115 = arith.constant 0 : index
    %136 = vector.load %arg12[%c2_113, %c8_114, %c0_115] : memref<6x48x64xf32, #tpu.memory_space<vmem>>, vector<1x32x64xf32>
    %137 = vector.shape_cast %136 : vector<1x32x64xf32> to vector<32x64xf32>
    %c256_116 = arith.constant 256 : index
    %c0_117 = arith.constant 0 : index
    %138 = vector.load %arg6[%c256_116, %c0_117] : memref<576x128xf32, #tpu.memory_space<vmem>>, vector<64x128xf32>
    %cst_118 = arith.constant dense<0.000000e+00> : vector<32x128xf32>
    %139 = tpu.matmul %137, %138, %cst_118 {dimension_numbers = #tpu.dot_dimension_numbers<[1], [0], [0], [1], [0, 0, 1, 1], [], []>} : vector<32x64xf32>, vector<64x128xf32>, vector<32x128xf32> -> vector<32x128xf32>
    %140 = arith.addf %135, %139 : vector<32x128xf32>
    %c2_119 = arith.constant 2 : index
    %c16_120 = arith.constant 16 : index
    %c0_121 = arith.constant 0 : index
    %141 = vector.load %arg12[%c2_119, %c16_120, %c0_121] : memref<6x48x64xf32, #tpu.memory_space<vmem>>, vector<1x32x64xf32>
    %142 = vector.shape_cast %141 : vector<1x32x64xf32> to vector<32x64xf32>
    %c320_122 = arith.constant 320 : index
    %c0_123 = arith.constant 0 : index
    %143 = vector.load %arg6[%c320_122, %c0_123] : memref<576x128xf32, #tpu.memory_space<vmem>>, vector<64x128xf32>
    %cst_124 = arith.constant dense<0.000000e+00> : vector<32x128xf32>
    %144 = tpu.matmul %142, %143, %cst_124 {dimension_numbers = #tpu.dot_dimension_numbers<[1], [0], [0], [1], [0, 0, 1, 1], [], []>} : vector<32x64xf32>, vector<64x128xf32>, vector<32x128xf32> -> vector<32x128xf32>
    %145 = arith.addf %140, %144 : vector<32x128xf32>
    %c3_125 = arith.constant 3 : index
    %c0_126 = arith.constant 0 : index
    %c0_127 = arith.constant 0 : index
    %146 = vector.load %arg12[%c3_125, %c0_126, %c0_127] : memref<6x48x64xf32, #tpu.memory_space<vmem>>, vector<1x32x64xf32>
    %147 = vector.shape_cast %146 : vector<1x32x64xf32> to vector<32x64xf32>
    %c384_128 = arith.constant 384 : index
    %c0_129 = arith.constant 0 : index
    %148 = vector.load %arg6[%c384_128, %c0_129] : memref<576x128xf32, #tpu.memory_space<vmem>>, vector<64x128xf32>
    %cst_130 = arith.constant dense<0.000000e+00> : vector<32x128xf32>
    %149 = tpu.matmul %147, %148, %cst_130 {dimension_numbers = #tpu.dot_dimension_numbers<[1], [0], [0], [1], [0, 0, 1, 1], [], []>} : vector<32x64xf32>, vector<64x128xf32>, vector<32x128xf32> -> vector<32x128xf32>
    %150 = arith.addf %145, %149 : vector<32x128xf32>
    %c3_131 = arith.constant 3 : index
    %c8_132 = arith.constant 8 : index
    %c0_133 = arith.constant 0 : index
    %151 = vector.load %arg12[%c3_131, %c8_132, %c0_133] : memref<6x48x64xf32, #tpu.memory_space<vmem>>, vector<1x32x64xf32>
    %152 = vector.shape_cast %151 : vector<1x32x64xf32> to vector<32x64xf32>
    %c448_134 = arith.constant 448 : index
    %c0_135 = arith.constant 0 : index
    %153 = vector.load %arg6[%c448_134, %c0_135] : memref<576x128xf32, #tpu.memory_space<vmem>>, vector<64x128xf32>
    %cst_136 = arith.constant dense<0.000000e+00> : vector<32x128xf32>
    %154 = tpu.matmul %152, %153, %cst_136 {dimension_numbers = #tpu.dot_dimension_numbers<[1], [0], [0], [1], [0, 0, 1, 1], [], []>} : vector<32x64xf32>, vector<64x128xf32>, vector<32x128xf32> -> vector<32x128xf32>
    %155 = arith.addf %150, %154 : vector<32x128xf32>
    %c3_137 = arith.constant 3 : index
    %c16_138 = arith.constant 16 : index
    %c0_139 = arith.constant 0 : index
    %156 = vector.load %arg12[%c3_137, %c16_138, %c0_139] : memref<6x48x64xf32, #tpu.memory_space<vmem>>, vector<1x32x64xf32>
    %157 = vector.shape_cast %156 : vector<1x32x64xf32> to vector<32x64xf32>
    %c512_140 = arith.constant 512 : index
    %c0_141 = arith.constant 0 : index
    %158 = vector.load %arg6[%c512_140, %c0_141] : memref<576x128xf32, #tpu.memory_space<vmem>>, vector<64x128xf32>
    %cst_142 = arith.constant dense<0.000000e+00> : vector<32x128xf32>
    %159 = tpu.matmul %157, %158, %cst_142 {dimension_numbers = #tpu.dot_dimension_numbers<[1], [0], [0], [1], [0, 0, 1, 1], [], []>} : vector<32x64xf32>, vector<64x128xf32>, vector<32x128xf32> -> vector<32x128xf32>
    %160 = arith.addf %155, %159 : vector<32x128xf32>
    %161 = vector.extract_strided_slice %160 {offsets = [0, 0], sizes = [32, 32], strides = [1, 1]} : vector<32x128xf32> to vector<32x32xf32>
    %162 = vector.extract_strided_slice %160 {offsets = [0, 32], sizes = [32, 32], strides = [1, 1]} : vector<32x128xf32> to vector<32x32xf32>
    %163 = arith.maximumf %161, %162 : vector<32x32xf32>
    %164 = vector.extract_strided_slice %160 {offsets = [0, 64], sizes = [32, 32], strides = [1, 1]} : vector<32x128xf32> to vector<32x32xf32>
    %165 = vector.extract_strided_slice %160 {offsets = [0, 96], sizes = [32, 32], strides = [1, 1]} : vector<32x128xf32> to vector<32x32xf32>
    %166 = arith.maximumf %164, %165 : vector<32x32xf32>
    %167 = arith.maximumf %163, %166 : vector<32x32xf32>
    %c0_143 = arith.constant 0 : index
    %c0_144 = arith.constant 0 : index
    %168 = vector.load %arg7[%c0_143, %c0_144] : memref<1x32xf32, #tpu.memory_space<vmem>>, vector<1x32xf32>
    %169 = vector.broadcast %168 : vector<1x32xf32> to vector<32x32xf32>
    %170 = arith.addf %167, %169 : vector<32x32xf32>
    %cst_145 = arith.constant 0.000000e+00 : f32
    %171 = vector.broadcast %cst_145 : f32 to vector<32x32xf32>
    %172 = arith.maximumf %170, %171 : vector<32x32xf32>
    %173 = vector.extract_strided_slice %172 {offsets = [0, 0], sizes = [8, 32], strides = [1, 1]} : vector<32x32xf32> to vector<8x32xf32>
    %c4_146 = arith.constant 4 : index
    %c0_147 = arith.constant 0 : index
    %c0_148 = arith.constant 0 : index
    %174 = vector.load %arg8[%c4_146, %c0_147, %c0_148] : memref<16x32x256xf32, #tpu.memory_space<vmem>>, vector<1x32x256xf32>
    %175 = vector.shape_cast %174 : vector<1x32x256xf32> to vector<32x256xf32>
    %cst_149 = arith.constant dense<0.000000e+00> : vector<8x256xf32>
    %176 = tpu.matmul %173, %175, %cst_149 {dimension_numbers = #tpu.dot_dimension_numbers<[1], [0], [0], [1], [0, 0, 1, 1], [], []>} : vector<8x32xf32>, vector<32x256xf32>, vector<8x256xf32> -> vector<8x256xf32>
    %177 = arith.addf %114, %176 : vector<8x256xf32>
    %178 = vector.extract_strided_slice %172 {offsets = [8, 0], sizes = [8, 32], strides = [1, 1]} : vector<32x32xf32> to vector<8x32xf32>
    %c5 = arith.constant 5 : index
    %c0_150 = arith.constant 0 : index
    %c0_151 = arith.constant 0 : index
    %179 = vector.load %arg8[%c5, %c0_150, %c0_151] : memref<16x32x256xf32, #tpu.memory_space<vmem>>, vector<1x32x256xf32>
    %180 = vector.shape_cast %179 : vector<1x32x256xf32> to vector<32x256xf32>
    %cst_152 = arith.constant dense<0.000000e+00> : vector<8x256xf32>
    %181 = tpu.matmul %178, %180, %cst_152 {dimension_numbers = #tpu.dot_dimension_numbers<[1], [0], [0], [1], [0, 0, 1, 1], [], []>} : vector<8x32xf32>, vector<32x256xf32>, vector<8x256xf32> -> vector<8x256xf32>
    %182 = arith.addf %177, %181 : vector<8x256xf32>
    %183 = vector.extract_strided_slice %172 {offsets = [16, 0], sizes = [8, 32], strides = [1, 1]} : vector<32x32xf32> to vector<8x32xf32>
    %c6 = arith.constant 6 : index
    %c0_153 = arith.constant 0 : index
    %c0_154 = arith.constant 0 : index
    %184 = vector.load %arg8[%c6, %c0_153, %c0_154] : memref<16x32x256xf32, #tpu.memory_space<vmem>>, vector<1x32x256xf32>
    %185 = vector.shape_cast %184 : vector<1x32x256xf32> to vector<32x256xf32>
    %cst_155 = arith.constant dense<0.000000e+00> : vector<8x256xf32>
    %186 = tpu.matmul %183, %185, %cst_155 {dimension_numbers = #tpu.dot_dimension_numbers<[1], [0], [0], [1], [0, 0, 1, 1], [], []>} : vector<8x32xf32>, vector<32x256xf32>, vector<8x256xf32> -> vector<8x256xf32>
    %187 = arith.addf %182, %186 : vector<8x256xf32>
    %188 = vector.extract_strided_slice %172 {offsets = [24, 0], sizes = [8, 32], strides = [1, 1]} : vector<32x32xf32> to vector<8x32xf32>
    %c7 = arith.constant 7 : index
    %c0_156 = arith.constant 0 : index
    %c0_157 = arith.constant 0 : index
    %189 = vector.load %arg8[%c7, %c0_156, %c0_157] : memref<16x32x256xf32, #tpu.memory_space<vmem>>, vector<1x32x256xf32>
    %190 = vector.shape_cast %189 : vector<1x32x256xf32> to vector<32x256xf32>
    %cst_158 = arith.constant dense<0.000000e+00> : vector<8x256xf32>
    %191 = tpu.matmul %188, %190, %cst_158 {dimension_numbers = #tpu.dot_dimension_numbers<[1], [0], [0], [1], [0, 0, 1, 1], [], []>} : vector<8x32xf32>, vector<32x256xf32>, vector<8x256xf32> -> vector<8x256xf32>
    %192 = arith.addf %187, %191 : vector<8x256xf32>
    %cst_159 = arith.constant 0.000000e+00 : f32
    %193 = vector.broadcast %cst_159 : f32 to vector<32x128xf32>
    %c2_160 = arith.constant 2 : index
    %c0_161 = arith.constant 0 : index
    %c0_162 = arith.constant 0 : index
    %194 = vector.load %arg12[%c2_160, %c0_161, %c0_162] : memref<6x48x64xf32, #tpu.memory_space<vmem>>, vector<1x32x64xf32>
    %195 = vector.shape_cast %194 : vector<1x32x64xf32> to vector<32x64xf32>
    %c0_163 = arith.constant 0 : index
    %c0_164 = arith.constant 0 : index
    %196 = vector.load %arg6[%c0_163, %c0_164] : memref<576x128xf32, #tpu.memory_space<vmem>>, vector<64x128xf32>
    %cst_165 = arith.constant dense<0.000000e+00> : vector<32x128xf32>
    %197 = tpu.matmul %195, %196, %cst_165 {dimension_numbers = #tpu.dot_dimension_numbers<[1], [0], [0], [1], [0, 0, 1, 1], [], []>} : vector<32x64xf32>, vector<64x128xf32>, vector<32x128xf32> -> vector<32x128xf32>
    %198 = arith.addf %193, %197 : vector<32x128xf32>
    %c2_166 = arith.constant 2 : index
    %c8_167 = arith.constant 8 : index
    %c0_168 = arith.constant 0 : index
    %199 = vector.load %arg12[%c2_166, %c8_167, %c0_168] : memref<6x48x64xf32, #tpu.memory_space<vmem>>, vector<1x32x64xf32>
    %200 = vector.shape_cast %199 : vector<1x32x64xf32> to vector<32x64xf32>
    %c64_169 = arith.constant 64 : index
    %c0_170 = arith.constant 0 : index
    %201 = vector.load %arg6[%c64_169, %c0_170] : memref<576x128xf32, #tpu.memory_space<vmem>>, vector<64x128xf32>
    %cst_171 = arith.constant dense<0.000000e+00> : vector<32x128xf32>
    %202 = tpu.matmul %200, %201, %cst_171 {dimension_numbers = #tpu.dot_dimension_numbers<[1], [0], [0], [1], [0, 0, 1, 1], [], []>} : vector<32x64xf32>, vector<64x128xf32>, vector<32x128xf32> -> vector<32x128xf32>
    %203 = arith.addf %198, %202 : vector<32x128xf32>
    %c2_172 = arith.constant 2 : index
    %c16_173 = arith.constant 16 : index
    %c0_174 = arith.constant 0 : index
    %204 = vector.load %arg12[%c2_172, %c16_173, %c0_174] : memref<6x48x64xf32, #tpu.memory_space<vmem>>, vector<1x32x64xf32>
    %205 = vector.shape_cast %204 : vector<1x32x64xf32> to vector<32x64xf32>
    %c128_175 = arith.constant 128 : index
    %c0_176 = arith.constant 0 : index
    %206 = vector.load %arg6[%c128_175, %c0_176] : memref<576x128xf32, #tpu.memory_space<vmem>>, vector<64x128xf32>
    %cst_177 = arith.constant dense<0.000000e+00> : vector<32x128xf32>
    %207 = tpu.matmul %205, %206, %cst_177 {dimension_numbers = #tpu.dot_dimension_numbers<[1], [0], [0], [1], [0, 0, 1, 1], [], []>} : vector<32x64xf32>, vector<64x128xf32>, vector<32x128xf32> -> vector<32x128xf32>
    %208 = arith.addf %203, %207 : vector<32x128xf32>
    %c3_178 = arith.constant 3 : index
    %c0_179 = arith.constant 0 : index
    %c0_180 = arith.constant 0 : index
    %209 = vector.load %arg12[%c3_178, %c0_179, %c0_180] : memref<6x48x64xf32, #tpu.memory_space<vmem>>, vector<1x32x64xf32>
    %210 = vector.shape_cast %209 : vector<1x32x64xf32> to vector<32x64xf32>
    %c192_181 = arith.constant 192 : index
    %c0_182 = arith.constant 0 : index
    %211 = vector.load %arg6[%c192_181, %c0_182] : memref<576x128xf32, #tpu.memory_space<vmem>>, vector<64x128xf32>
    %cst_183 = arith.constant dense<0.000000e+00> : vector<32x128xf32>
    %212 = tpu.matmul %210, %211, %cst_183 {dimension_numbers = #tpu.dot_dimension_numbers<[1], [0], [0], [1], [0, 0, 1, 1], [], []>} : vector<32x64xf32>, vector<64x128xf32>, vector<32x128xf32> -> vector<32x128xf32>
    %213 = arith.addf %208, %212 : vector<32x128xf32>
    %c3_184 = arith.constant 3 : index
    %c8_185 = arith.constant 8 : index
    %c0_186 = arith.constant 0 : index
    %214 = vector.load %arg12[%c3_184, %c8_185, %c0_186] : memref<6x48x64xf32, #tpu.memory_space<vmem>>, vector<1x32x64xf32>
    %215 = vector.shape_cast %214 : vector<1x32x64xf32> to vector<32x64xf32>
    %c256_187 = arith.constant 256 : index
    %c0_188 = arith.constant 0 : index
    %216 = vector.load %arg6[%c256_187, %c0_188] : memref<576x128xf32, #tpu.memory_space<vmem>>, vector<64x128xf32>
    %cst_189 = arith.constant dense<0.000000e+00> : vector<32x128xf32>
    %217 = tpu.matmul %215, %216, %cst_189 {dimension_numbers = #tpu.dot_dimension_numbers<[1], [0], [0], [1], [0, 0, 1, 1], [], []>} : vector<32x64xf32>, vector<64x128xf32>, vector<32x128xf32> -> vector<32x128xf32>
    %218 = arith.addf %213, %217 : vector<32x128xf32>
    %c3_190 = arith.constant 3 : index
    %c16_191 = arith.constant 16 : index
    %c0_192 = arith.constant 0 : index
    %219 = vector.load %arg12[%c3_190, %c16_191, %c0_192] : memref<6x48x64xf32, #tpu.memory_space<vmem>>, vector<1x32x64xf32>
    %220 = vector.shape_cast %219 : vector<1x32x64xf32> to vector<32x64xf32>
    %c320_193 = arith.constant 320 : index
    %c0_194 = arith.constant 0 : index
    %221 = vector.load %arg6[%c320_193, %c0_194] : memref<576x128xf32, #tpu.memory_space<vmem>>, vector<64x128xf32>
    %cst_195 = arith.constant dense<0.000000e+00> : vector<32x128xf32>
    %222 = tpu.matmul %220, %221, %cst_195 {dimension_numbers = #tpu.dot_dimension_numbers<[1], [0], [0], [1], [0, 0, 1, 1], [], []>} : vector<32x64xf32>, vector<64x128xf32>, vector<32x128xf32> -> vector<32x128xf32>
    %223 = arith.addf %218, %222 : vector<32x128xf32>
    %c4_196 = arith.constant 4 : index
    %c0_197 = arith.constant 0 : index
    %c0_198 = arith.constant 0 : index
    %224 = vector.load %arg12[%c4_196, %c0_197, %c0_198] : memref<6x48x64xf32, #tpu.memory_space<vmem>>, vector<1x32x64xf32>
    %225 = vector.shape_cast %224 : vector<1x32x64xf32> to vector<32x64xf32>
    %c384_199 = arith.constant 384 : index
    %c0_200 = arith.constant 0 : index
    %226 = vector.load %arg6[%c384_199, %c0_200] : memref<576x128xf32, #tpu.memory_space<vmem>>, vector<64x128xf32>
    %cst_201 = arith.constant dense<0.000000e+00> : vector<32x128xf32>
    %227 = tpu.matmul %225, %226, %cst_201 {dimension_numbers = #tpu.dot_dimension_numbers<[1], [0], [0], [1], [0, 0, 1, 1], [], []>} : vector<32x64xf32>, vector<64x128xf32>, vector<32x128xf32> -> vector<32x128xf32>
    %228 = arith.addf %223, %227 : vector<32x128xf32>
    %c4_202 = arith.constant 4 : index
    %c8_203 = arith.constant 8 : index
    %c0_204 = arith.constant 0 : index
    %229 = vector.load %arg12[%c4_202, %c8_203, %c0_204] : memref<6x48x64xf32, #tpu.memory_space<vmem>>, vector<1x32x64xf32>
    %230 = vector.shape_cast %229 : vector<1x32x64xf32> to vector<32x64xf32>
    %c448_205 = arith.constant 448 : index
    %c0_206 = arith.constant 0 : index
    %231 = vector.load %arg6[%c448_205, %c0_206] : memref<576x128xf32, #tpu.memory_space<vmem>>, vector<64x128xf32>
    %cst_207 = arith.constant dense<0.000000e+00> : vector<32x128xf32>
    %232 = tpu.matmul %230, %231, %cst_207 {dimension_numbers = #tpu.dot_dimension_numbers<[1], [0], [0], [1], [0, 0, 1, 1], [], []>} : vector<32x64xf32>, vector<64x128xf32>, vector<32x128xf32> -> vector<32x128xf32>
    %233 = arith.addf %228, %232 : vector<32x128xf32>
    %c4_208 = arith.constant 4 : index
    %c16_209 = arith.constant 16 : index
    %c0_210 = arith.constant 0 : index
    %234 = vector.load %arg12[%c4_208, %c16_209, %c0_210] : memref<6x48x64xf32, #tpu.memory_space<vmem>>, vector<1x32x64xf32>
    %235 = vector.shape_cast %234 : vector<1x32x64xf32> to vector<32x64xf32>
    %c512_211 = arith.constant 512 : index
    %c0_212 = arith.constant 0 : index
    %236 = vector.load %arg6[%c512_211, %c0_212] : memref<576x128xf32, #tpu.memory_space<vmem>>, vector<64x128xf32>
    %cst_213 = arith.constant dense<0.000000e+00> : vector<32x128xf32>
    %237 = tpu.matmul %235, %236, %cst_213 {dimension_numbers = #tpu.dot_dimension_numbers<[1], [0], [0], [1], [0, 0, 1, 1], [], []>} : vector<32x64xf32>, vector<64x128xf32>, vector<32x128xf32> -> vector<32x128xf32>
    %238 = arith.addf %233, %237 : vector<32x128xf32>
    %239 = vector.extract_strided_slice %238 {offsets = [0, 0], sizes = [32, 32], strides = [1, 1]} : vector<32x128xf32> to vector<32x32xf32>
    %240 = vector.extract_strided_slice %238 {offsets = [0, 32], sizes = [32, 32], strides = [1, 1]} : vector<32x128xf32> to vector<32x32xf32>
    %241 = arith.maximumf %239, %240 : vector<32x32xf32>
    %242 = vector.extract_strided_slice %238 {offsets = [0, 64], sizes = [32, 32], strides = [1, 1]} : vector<32x128xf32> to vector<32x32xf32>
    %243 = vector.extract_strided_slice %238 {offsets = [0, 96], sizes = [32, 32], strides = [1, 1]} : vector<32x128xf32> to vector<32x32xf32>
    %244 = arith.maximumf %242, %243 : vector<32x32xf32>
    %245 = arith.maximumf %241, %244 : vector<32x32xf32>
    %c0_214 = arith.constant 0 : index
    %c0_215 = arith.constant 0 : index
    %246 = vector.load %arg7[%c0_214, %c0_215] : memref<1x32xf32, #tpu.memory_space<vmem>>, vector<1x32xf32>
    %247 = vector.broadcast %246 : vector<1x32xf32> to vector<32x32xf32>
    %248 = arith.addf %245, %247 : vector<32x32xf32>
    %cst_216 = arith.constant 0.000000e+00 : f32
    %249 = vector.broadcast %cst_216 : f32 to vector<32x32xf32>
    %250 = arith.maximumf %248, %249 : vector<32x32xf32>
    %251 = vector.extract_strided_slice %250 {offsets = [0, 0], sizes = [8, 32], strides = [1, 1]} : vector<32x32xf32> to vector<8x32xf32>
    %c8_217 = arith.constant 8 : index
    %c0_218 = arith.constant 0 : index
    %c0_219 = arith.constant 0 : index
    %252 = vector.load %arg8[%c8_217, %c0_218, %c0_219] : memref<16x32x256xf32, #tpu.memory_space<vmem>>, vector<1x32x256xf32>
    %253 = vector.shape_cast %252 : vector<1x32x256xf32> to vector<32x256xf32>
    %cst_220 = arith.constant dense<0.000000e+00> : vector<8x256xf32>
    %254 = tpu.matmul %251, %253, %cst_220 {dimension_numbers = #tpu.dot_dimension_numbers<[1], [0], [0], [1], [0, 0, 1, 1], [], []>} : vector<8x32xf32>, vector<32x256xf32>, vector<8x256xf32> -> vector<8x256xf32>
    %255 = arith.addf %192, %254 : vector<8x256xf32>
    %256 = vector.extract_strided_slice %250 {offsets = [8, 0], sizes = [8, 32], strides = [1, 1]} : vector<32x32xf32> to vector<8x32xf32>
    %c9 = arith.constant 9 : index
    %c0_221 = arith.constant 0 : index
    %c0_222 = arith.constant 0 : index
    %257 = vector.load %arg8[%c9, %c0_221, %c0_222] : memref<16x32x256xf32, #tpu.memory_space<vmem>>, vector<1x32x256xf32>
    %258 = vector.shape_cast %257 : vector<1x32x256xf32> to vector<32x256xf32>
    %cst_223 = arith.constant dense<0.000000e+00> : vector<8x256xf32>
    %259 = tpu.matmul %256, %258, %cst_223 {dimension_numbers = #tpu.dot_dimension_numbers<[1], [0], [0], [1], [0, 0, 1, 1], [], []>} : vector<8x32xf32>, vector<32x256xf32>, vector<8x256xf32> -> vector<8x256xf32>
    %260 = arith.addf %255, %259 : vector<8x256xf32>
    %261 = vector.extract_strided_slice %250 {offsets = [16, 0], sizes = [8, 32], strides = [1, 1]} : vector<32x32xf32> to vector<8x32xf32>
    %c10 = arith.constant 10 : index
    %c0_224 = arith.constant 0 : index
    %c0_225 = arith.constant 0 : index
    %262 = vector.load %arg8[%c10, %c0_224, %c0_225] : memref<16x32x256xf32, #tpu.memory_space<vmem>>, vector<1x32x256xf32>
    %263 = vector.shape_cast %262 : vector<1x32x256xf32> to vector<32x256xf32>
    %cst_226 = arith.constant dense<0.000000e+00> : vector<8x256xf32>
    %264 = tpu.matmul %261, %263, %cst_226 {dimension_numbers = #tpu.dot_dimension_numbers<[1], [0], [0], [1], [0, 0, 1, 1], [], []>} : vector<8x32xf32>, vector<32x256xf32>, vector<8x256xf32> -> vector<8x256xf32>
    %265 = arith.addf %260, %264 : vector<8x256xf32>
    %266 = vector.extract_strided_slice %250 {offsets = [24, 0], sizes = [8, 32], strides = [1, 1]} : vector<32x32xf32> to vector<8x32xf32>
    %c11 = arith.constant 11 : index
    %c0_227 = arith.constant 0 : index
    %c0_228 = arith.constant 0 : index
    %267 = vector.load %arg8[%c11, %c0_227, %c0_228] : memref<16x32x256xf32, #tpu.memory_space<vmem>>, vector<1x32x256xf32>
    %268 = vector.shape_cast %267 : vector<1x32x256xf32> to vector<32x256xf32>
    %cst_229 = arith.constant dense<0.000000e+00> : vector<8x256xf32>
    %269 = tpu.matmul %266, %268, %cst_229 {dimension_numbers = #tpu.dot_dimension_numbers<[1], [0], [0], [1], [0, 0, 1, 1], [], []>} : vector<8x32xf32>, vector<32x256xf32>, vector<8x256xf32> -> vector<8x256xf32>
    %270 = arith.addf %265, %269 : vector<8x256xf32>
    %cst_230 = arith.constant 0.000000e+00 : f32
    %271 = vector.broadcast %cst_230 : f32 to vector<32x128xf32>
    %c3_231 = arith.constant 3 : index
    %c0_232 = arith.constant 0 : index
    %c0_233 = arith.constant 0 : index
    %272 = vector.load %arg12[%c3_231, %c0_232, %c0_233] : memref<6x48x64xf32, #tpu.memory_space<vmem>>, vector<1x32x64xf32>
    %273 = vector.shape_cast %272 : vector<1x32x64xf32> to vector<32x64xf32>
    %c0_234 = arith.constant 0 : index
    %c0_235 = arith.constant 0 : index
    %274 = vector.load %arg6[%c0_234, %c0_235] : memref<576x128xf32, #tpu.memory_space<vmem>>, vector<64x128xf32>
    %cst_236 = arith.constant dense<0.000000e+00> : vector<32x128xf32>
    %275 = tpu.matmul %273, %274, %cst_236 {dimension_numbers = #tpu.dot_dimension_numbers<[1], [0], [0], [1], [0, 0, 1, 1], [], []>} : vector<32x64xf32>, vector<64x128xf32>, vector<32x128xf32> -> vector<32x128xf32>
    %276 = arith.addf %271, %275 : vector<32x128xf32>
    %c3_237 = arith.constant 3 : index
    %c8_238 = arith.constant 8 : index
    %c0_239 = arith.constant 0 : index
    %277 = vector.load %arg12[%c3_237, %c8_238, %c0_239] : memref<6x48x64xf32, #tpu.memory_space<vmem>>, vector<1x32x64xf32>
    %278 = vector.shape_cast %277 : vector<1x32x64xf32> to vector<32x64xf32>
    %c64_240 = arith.constant 64 : index
    %c0_241 = arith.constant 0 : index
    %279 = vector.load %arg6[%c64_240, %c0_241] : memref<576x128xf32, #tpu.memory_space<vmem>>, vector<64x128xf32>
    %cst_242 = arith.constant dense<0.000000e+00> : vector<32x128xf32>
    %280 = tpu.matmul %278, %279, %cst_242 {dimension_numbers = #tpu.dot_dimension_numbers<[1], [0], [0], [1], [0, 0, 1, 1], [], []>} : vector<32x64xf32>, vector<64x128xf32>, vector<32x128xf32> -> vector<32x128xf32>
    %281 = arith.addf %276, %280 : vector<32x128xf32>
    %c3_243 = arith.constant 3 : index
    %c16_244 = arith.constant 16 : index
    %c0_245 = arith.constant 0 : index
    %282 = vector.load %arg12[%c3_243, %c16_244, %c0_245] : memref<6x48x64xf32, #tpu.memory_space<vmem>>, vector<1x32x64xf32>
    %283 = vector.shape_cast %282 : vector<1x32x64xf32> to vector<32x64xf32>
    %c128_246 = arith.constant 128 : index
    %c0_247 = arith.constant 0 : index
    %284 = vector.load %arg6[%c128_246, %c0_247] : memref<576x128xf32, #tpu.memory_space<vmem>>, vector<64x128xf32>
    %cst_248 = arith.constant dense<0.000000e+00> : vector<32x128xf32>
    %285 = tpu.matmul %283, %284, %cst_248 {dimension_numbers = #tpu.dot_dimension_numbers<[1], [0], [0], [1], [0, 0, 1, 1], [], []>} : vector<32x64xf32>, vector<64x128xf32>, vector<32x128xf32> -> vector<32x128xf32>
    %286 = arith.addf %281, %285 : vector<32x128xf32>
    %c4_249 = arith.constant 4 : index
    %c0_250 = arith.constant 0 : index
    %c0_251 = arith.constant 0 : index
    %287 = vector.load %arg12[%c4_249, %c0_250, %c0_251] : memref<6x48x64xf32, #tpu.memory_space<vmem>>, vector<1x32x64xf32>
    %288 = vector.shape_cast %287 : vector<1x32x64xf32> to vector<32x64xf32>
    %c192_252 = arith.constant 192 : index
    %c0_253 = arith.constant 0 : index
    %289 = vector.load %arg6[%c192_252, %c0_253] : memref<576x128xf32, #tpu.memory_space<vmem>>, vector<64x128xf32>
    %cst_254 = arith.constant dense<0.000000e+00> : vector<32x128xf32>
    %290 = tpu.matmul %288, %289, %cst_254 {dimension_numbers = #tpu.dot_dimension_numbers<[1], [0], [0], [1], [0, 0, 1, 1], [], []>} : vector<32x64xf32>, vector<64x128xf32>, vector<32x128xf32> -> vector<32x128xf32>
    %291 = arith.addf %286, %290 : vector<32x128xf32>
    %c4_255 = arith.constant 4 : index
    %c8_256 = arith.constant 8 : index
    %c0_257 = arith.constant 0 : index
    %292 = vector.load %arg12[%c4_255, %c8_256, %c0_257] : memref<6x48x64xf32, #tpu.memory_space<vmem>>, vector<1x32x64xf32>
    %293 = vector.shape_cast %292 : vector<1x32x64xf32> to vector<32x64xf32>
    %c256_258 = arith.constant 256 : index
    %c0_259 = arith.constant 0 : index
    %294 = vector.load %arg6[%c256_258, %c0_259] : memref<576x128xf32, #tpu.memory_space<vmem>>, vector<64x128xf32>
    %cst_260 = arith.constant dense<0.000000e+00> : vector<32x128xf32>
    %295 = tpu.matmul %293, %294, %cst_260 {dimension_numbers = #tpu.dot_dimension_numbers<[1], [0], [0], [1], [0, 0, 1, 1], [], []>} : vector<32x64xf32>, vector<64x128xf32>, vector<32x128xf32> -> vector<32x128xf32>
    %296 = arith.addf %291, %295 : vector<32x128xf32>
    %c4_261 = arith.constant 4 : index
    %c16_262 = arith.constant 16 : index
    %c0_263 = arith.constant 0 : index
    %297 = vector.load %arg12[%c4_261, %c16_262, %c0_263] : memref<6x48x64xf32, #tpu.memory_space<vmem>>, vector<1x32x64xf32>
    %298 = vector.shape_cast %297 : vector<1x32x64xf32> to vector<32x64xf32>
    %c320_264 = arith.constant 320 : index
    %c0_265 = arith.constant 0 : index
    %299 = vector.load %arg6[%c320_264, %c0_265] : memref<576x128xf32, #tpu.memory_space<vmem>>, vector<64x128xf32>
    %cst_266 = arith.constant dense<0.000000e+00> : vector<32x128xf32>
    %300 = tpu.matmul %298, %299, %cst_266 {dimension_numbers = #tpu.dot_dimension_numbers<[1], [0], [0], [1], [0, 0, 1, 1], [], []>} : vector<32x64xf32>, vector<64x128xf32>, vector<32x128xf32> -> vector<32x128xf32>
    %301 = arith.addf %296, %300 : vector<32x128xf32>
    %c5_267 = arith.constant 5 : index
    %c0_268 = arith.constant 0 : index
    %c0_269 = arith.constant 0 : index
    %302 = vector.load %arg12[%c5_267, %c0_268, %c0_269] : memref<6x48x64xf32, #tpu.memory_space<vmem>>, vector<1x32x64xf32>
    %303 = vector.shape_cast %302 : vector<1x32x64xf32> to vector<32x64xf32>
    %c384_270 = arith.constant 384 : index
    %c0_271 = arith.constant 0 : index
    %304 = vector.load %arg6[%c384_270, %c0_271] : memref<576x128xf32, #tpu.memory_space<vmem>>, vector<64x128xf32>
    %cst_272 = arith.constant dense<0.000000e+00> : vector<32x128xf32>
    %305 = tpu.matmul %303, %304, %cst_272 {dimension_numbers = #tpu.dot_dimension_numbers<[1], [0], [0], [1], [0, 0, 1, 1], [], []>} : vector<32x64xf32>, vector<64x128xf32>, vector<32x128xf32> -> vector<32x128xf32>
    %306 = arith.addf %301, %305 : vector<32x128xf32>
    %c5_273 = arith.constant 5 : index
    %c8_274 = arith.constant 8 : index
    %c0_275 = arith.constant 0 : index
    %307 = vector.load %arg12[%c5_273, %c8_274, %c0_275] : memref<6x48x64xf32, #tpu.memory_space<vmem>>, vector<1x32x64xf32>
    %308 = vector.shape_cast %307 : vector<1x32x64xf32> to vector<32x64xf32>
    %c448_276 = arith.constant 448 : index
    %c0_277 = arith.constant 0 : index
    %309 = vector.load %arg6[%c448_276, %c0_277] : memref<576x128xf32, #tpu.memory_space<vmem>>, vector<64x128xf32>
    %cst_278 = arith.constant dense<0.000000e+00> : vector<32x128xf32>
    %310 = tpu.matmul %308, %309, %cst_278 {dimension_numbers = #tpu.dot_dimension_numbers<[1], [0], [0], [1], [0, 0, 1, 1], [], []>} : vector<32x64xf32>, vector<64x128xf32>, vector<32x128xf32> -> vector<32x128xf32>
    %311 = arith.addf %306, %310 : vector<32x128xf32>
    %c5_279 = arith.constant 5 : index
    %c16_280 = arith.constant 16 : index
    %c0_281 = arith.constant 0 : index
    %312 = vector.load %arg12[%c5_279, %c16_280, %c0_281] : memref<6x48x64xf32, #tpu.memory_space<vmem>>, vector<1x32x64xf32>
    %313 = vector.shape_cast %312 : vector<1x32x64xf32> to vector<32x64xf32>
    %c512_282 = arith.constant 512 : index
    %c0_283 = arith.constant 0 : index
    %314 = vector.load %arg6[%c512_282, %c0_283] : memref<576x128xf32, #tpu.memory_space<vmem>>, vector<64x128xf32>
    %cst_284 = arith.constant dense<0.000000e+00> : vector<32x128xf32>
    %315 = tpu.matmul %313, %314, %cst_284 {dimension_numbers = #tpu.dot_dimension_numbers<[1], [0], [0], [1], [0, 0, 1, 1], [], []>} : vector<32x64xf32>, vector<64x128xf32>, vector<32x128xf32> -> vector<32x128xf32>
    %316 = arith.addf %311, %315 : vector<32x128xf32>
    %317 = vector.extract_strided_slice %316 {offsets = [0, 0], sizes = [32, 32], strides = [1, 1]} : vector<32x128xf32> to vector<32x32xf32>
    %318 = vector.extract_strided_slice %316 {offsets = [0, 32], sizes = [32, 32], strides = [1, 1]} : vector<32x128xf32> to vector<32x32xf32>
    %319 = arith.maximumf %317, %318 : vector<32x32xf32>
    %320 = vector.extract_strided_slice %316 {offsets = [0, 64], sizes = [32, 32], strides = [1, 1]} : vector<32x128xf32> to vector<32x32xf32>
    %321 = vector.extract_strided_slice %316 {offsets = [0, 96], sizes = [32, 32], strides = [1, 1]} : vector<32x128xf32> to vector<32x32xf32>
    %322 = arith.maximumf %320, %321 : vector<32x32xf32>
    %323 = arith.maximumf %319, %322 : vector<32x32xf32>
    %c0_285 = arith.constant 0 : index
    %c0_286 = arith.constant 0 : index
    %324 = vector.load %arg7[%c0_285, %c0_286] : memref<1x32xf32, #tpu.memory_space<vmem>>, vector<1x32xf32>
    %325 = vector.broadcast %324 : vector<1x32xf32> to vector<32x32xf32>
    %326 = arith.addf %323, %325 : vector<32x32xf32>
    %cst_287 = arith.constant 0.000000e+00 : f32
    %327 = vector.broadcast %cst_287 : f32 to vector<32x32xf32>
    %328 = arith.maximumf %326, %327 : vector<32x32xf32>
    %329 = vector.extract_strided_slice %328 {offsets = [0, 0], sizes = [8, 32], strides = [1, 1]} : vector<32x32xf32> to vector<8x32xf32>
    %c12 = arith.constant 12 : index
    %c0_288 = arith.constant 0 : index
    %c0_289 = arith.constant 0 : index
    %330 = vector.load %arg8[%c12, %c0_288, %c0_289] : memref<16x32x256xf32, #tpu.memory_space<vmem>>, vector<1x32x256xf32>
    %331 = vector.shape_cast %330 : vector<1x32x256xf32> to vector<32x256xf32>
    %cst_290 = arith.constant dense<0.000000e+00> : vector<8x256xf32>
    %332 = tpu.matmul %329, %331, %cst_290 {dimension_numbers = #tpu.dot_dimension_numbers<[1], [0], [0], [1], [0, 0, 1, 1], [], []>} : vector<8x32xf32>, vector<32x256xf32>, vector<8x256xf32> -> vector<8x256xf32>
    %333 = arith.addf %270, %332 : vector<8x256xf32>
    %334 = vector.extract_strided_slice %328 {offsets = [8, 0], sizes = [8, 32], strides = [1, 1]} : vector<32x32xf32> to vector<8x32xf32>
    %c13 = arith.constant 13 : index
    %c0_291 = arith.constant 0 : index
    %c0_292 = arith.constant 0 : index
    %335 = vector.load %arg8[%c13, %c0_291, %c0_292] : memref<16x32x256xf32, #tpu.memory_space<vmem>>, vector<1x32x256xf32>
    %336 = vector.shape_cast %335 : vector<1x32x256xf32> to vector<32x256xf32>
    %cst_293 = arith.constant dense<0.000000e+00> : vector<8x256xf32>
    %337 = tpu.matmul %334, %336, %cst_293 {dimension_numbers = #tpu.dot_dimension_numbers<[1], [0], [0], [1], [0, 0, 1, 1], [], []>} : vector<8x32xf32>, vector<32x256xf32>, vector<8x256xf32> -> vector<8x256xf32>
    %338 = arith.addf %333, %337 : vector<8x256xf32>
    %339 = vector.extract_strided_slice %328 {offsets = [16, 0], sizes = [8, 32], strides = [1, 1]} : vector<32x32xf32> to vector<8x32xf32>
    %c14 = arith.constant 14 : index
    %c0_294 = arith.constant 0 : index
    %c0_295 = arith.constant 0 : index
    %340 = vector.load %arg8[%c14, %c0_294, %c0_295] : memref<16x32x256xf32, #tpu.memory_space<vmem>>, vector<1x32x256xf32>
    %341 = vector.shape_cast %340 : vector<1x32x256xf32> to vector<32x256xf32>
    %cst_296 = arith.constant dense<0.000000e+00> : vector<8x256xf32>
    %342 = tpu.matmul %339, %341, %cst_296 {dimension_numbers = #tpu.dot_dimension_numbers<[1], [0], [0], [1], [0, 0, 1, 1], [], []>} : vector<8x32xf32>, vector<32x256xf32>, vector<8x256xf32> -> vector<8x256xf32>
    %343 = arith.addf %338, %342 : vector<8x256xf32>
    %344 = vector.extract_strided_slice %328 {offsets = [24, 0], sizes = [8, 32], strides = [1, 1]} : vector<32x32xf32> to vector<8x32xf32>
    %c15 = arith.constant 15 : index
    %c0_297 = arith.constant 0 : index
    %c0_298 = arith.constant 0 : index
    %345 = vector.load %arg8[%c15, %c0_297, %c0_298] : memref<16x32x256xf32, #tpu.memory_space<vmem>>, vector<1x32x256xf32>
    %346 = vector.shape_cast %345 : vector<1x32x256xf32> to vector<32x256xf32>
    %cst_299 = arith.constant dense<0.000000e+00> : vector<8x256xf32>
    %347 = tpu.matmul %344, %346, %cst_299 {dimension_numbers = #tpu.dot_dimension_numbers<[1], [0], [0], [1], [0, 0, 1, 1], [], []>} : vector<8x32xf32>, vector<32x256xf32>, vector<8x256xf32> -> vector<8x256xf32>
    %348 = arith.addf %343, %347 : vector<8x256xf32>
    %c0_300 = arith.constant 0 : index
    %c0_301 = arith.constant 0 : index
    %349 = vector.load %arg9[%c0_300, %c0_301] : memref<256x128xf32, #tpu.memory_space<vmem>>, vector<256x128xf32>
    %cst_302 = arith.constant dense<0.000000e+00> : vector<8x128xf32>
    %350 = tpu.matmul %348, %349, %cst_302 {dimension_numbers = #tpu.dot_dimension_numbers<[1], [0], [0], [1], [0, 0, 1, 1], [], []>} : vector<8x256xf32>, vector<256x128xf32>, vector<8x128xf32> -> vector<8x128xf32>
    %351 = arith.addf %5, %350 : vector<8x128xf32>
    %c0_303 = arith.constant 0 : index
    %c0_304 = arith.constant 0 : index
    %352 = vector.load %arg10[%c0_303, %c0_304] : memref<1x128xf32, #tpu.memory_space<vmem>>, vector<1x128xf32>
    %353 = vector.broadcast %352 : vector<1x128xf32> to vector<8x128xf32>
    %354 = arith.addf %351, %353 : vector<8x128xf32>
    %c0_305 = arith.constant 0 : index
    %c0_306 = arith.constant 0 : index
    %355 = vector.load %arg11[%c0_305, %c0_306] : memref<8x128xf32, #tpu.memory_space<vmem>>, vector<8x128xf32>
    tpu.vector_store %arg11[%c0_305, %c0_306], %354 {strides = array<i32>} : memref<8x128xf32, #tpu.memory_space<vmem>>, vector<8x128xf32>,
    return
  }
  func.func @transform_0(%arg0: i32) -> (i32, i32) {
    %c0_i32 = arith.constant 0 : i32
    %c0_i32_0 = arith.constant 0 : i32
    return %arg0, %c0_i32 : i32, i32
  }
  func.func @transform_1(%arg0: i32) -> (i32, i32) {
    %c0_i32 = arith.constant 0 : i32
    %c0_i32_0 = arith.constant 0 : i32
    return %arg0, %c0_i32 : i32, i32
  }
  func.func @transform_2(%arg0: i32) -> (i32, i32) {
    %c0_i32 = arith.constant 0 : i32
    %c0_i32_0 = arith.constant 0 : i32
    %c0_i32_1 = arith.constant 0 : i32
    return %c0_i32, %c0_i32_0 : i32, i32
  }
  func.func @transform_3(%arg0: i32) -> (i32, i32) {
    %c0_i32 = arith.constant 0 : i32
    %c0_i32_0 = arith.constant 0 : i32
    %c0_i32_1 = arith.constant 0 : i32
    return %c0_i32, %c0_i32_0 : i32, i32
  }
  func.func @transform_4(%arg0: i32) -> (i32, i32) {
    %c0_i32 = arith.constant 0 : i32
    %c0_i32_0 = arith.constant 0 : i32
    %c0_i32_1 = arith.constant 0 : i32
    return %c0_i32, %c0_i32_0 : i32, i32
  }
  func.func @transform_5(%arg0: i32) -> (i32, i32) {
    %c0_i32 = arith.constant 0 : i32
    %c0_i32_0 = arith.constant 0 : i32
    %c0_i32_1 = arith.constant 0 : i32
    return %c0_i32, %c0_i32_0 : i32, i32
  }
  func.func @transform_6(%arg0: i32) -> (i32, i32) {
    %c0_i32 = arith.constant 0 : i32
    %c0_i32_0 = arith.constant 0 : i32
    %c0_i32_1 = arith.constant 0 : i32
    return %c0_i32, %c0_i32_0 : i32, i32
  }
  func.func @transform_7(%arg0: i32) -> (i32, i32, i32) {
    %c0_i32 = arith.constant 0 : i32
    %c0_i32_0 = arith.constant 0 : i32
    %c0_i32_1 = arith.constant 0 : i32
    %c0_i32_2 = arith.constant 0 : i32
    return %c0_i32, %c0_i32_0, %c0_i32_1 : i32, i32, i32
  }
  func.func @transform_8(%arg0: i32) -> (i32, i32) {
    %c0_i32 = arith.constant 0 : i32
    %c0_i32_0 = arith.constant 0 : i32
    %c0_i32_1 = arith.constant 0 : i32
    return %c0_i32, %c0_i32_0 : i32, i32
  }
  func.func @transform_9(%arg0: i32) -> (i32, i32) {
    %c0_i32 = arith.constant 0 : i32
    %c0_i32_0 = arith.constant 0 : i32
    %c0_i32_1 = arith.constant 0 : i32
    return %c0_i32, %c0_i32_0 : i32, i32
  }
  func.func @transform_10(%arg0: i32) -> (i32, i32) {
    %c0_i32 = arith.constant 0 : i32
    %c0_i32_0 = arith.constant 0 : i32
    return %arg0, %c0_i32 : i32, i32
  }
}

</mosaic_0001>

<llo_original>
// kernel: conv_lassonet_forward.1
$region0: #{conv_lassonet_forward.1}
  #allocation0 [shape = 'u32[]', space=smem, size = 0x4, offset = 0x4, fixed_abs, tag = 'smem constant byte address 0x4 - core index']
  #allocation1 [shape = 'u32[72,128]{1,0:T(1,128)}', space=vmem, size = 0x9000, scoped, tag = 'internal scratch']
  #allocation2 [shape = 'f32[6,48,64]{2,1,0:T(8,128)}', space=vmem, size = 0x24000, scoped, tag = 'scratch operand']
  %s0 = inlined_call_operand.vmem [shape: f32[128,64], index: 0, kind: input, shape index: {}]
  %s1 = inlined_call_operand.vmem [shape: f32[8,1024], index: 1, kind: input, shape index: {}]
  %s2 = inlined_call_operand.hbm [shape: f32[64,256], index: 2, kind: input, shape index: {}]
  %s3 = inlined_call_operand.vmem [shape: f32[1,64], index: 3, kind: input, shape index: {}]
  %s4 = inlined_call_operand.vmem [shape: f32[1024,128], index: 4, kind: input, shape index: {}]
  %s5 = inlined_call_operand.hbm [shape: f32[576,128], index: 5, kind: input, shape index: {}]
  %s6 = inlined_call_operand.vmem [shape: f32[1,32], index: 6, kind: input, shape index: {}]
  %s7 = inlined_call_operand.hbm [shape: f32[16,32,256], index: 7, kind: input, shape index: {}]
  %s8 = inlined_call_operand.hbm [shape: f32[256,128], index: 8, kind: input, shape index: {}]
  %s9 = inlined_call_operand.vmem [shape: f32[1,128], index: 9, kind: input, shape index: {}]
  %s10 = inlined_call_operand.vmem [shape: f32[8,128], index: 10, kind: output, shape index: {}]
  %s11 = sld [smem:[#allocation0]]
  $region66: #{conv_lassonet_forward.1} parent=0
    _
  %s13 = ssub.s32 1, %s11
  %s14 = scalar_select 0, %s13, %s11
  $region1: #{conv_lassonet_forward.1} parent=0
    #allocation3 [shape = 'u8[65536]{0}', space=vmem, size = 0x10000, scoped, tag = 'input window, operand 2, single buffered']
    #allocation4 [shape = 's32[1]{0}', space=sflag, size = 0x4, scoped, tag = 'scoped memory for conv_lassonet_forward.1']
    #allocation5 [shape = 'u8[294912]{0}', space=vmem, size = 0x48000, scoped, tag = 'input window, operand 5, single buffered']
    #allocation6 [shape = 's32[1]{0}', space=sflag, size = 0x4, scoped, tag = 'scoped memory for conv_lassonet_forward.1']
    #allocation7 [shape = 'u8[524288]{0}', space=vmem, size = 0x80000, scoped, tag = 'input window, operand 7, single buffered']
    #allocation8 [shape = 'u8[131072]{0}', space=vmem, size = 0x20000, scoped, tag = 'input window, operand 8, single buffered']
    #allocation9 [shape = 's32[1]{0}', space=sflag, size = 0x4, scoped, tag = 'scoped memory for conv_lassonet_forward.1']
    %15 = vsyncpa [#allocation4], 0
    %16 = vsyncpa [#allocation6], 0
    %17 = vsyncpa [#allocation9], 0
    // Predicated region
    $region2: #{conv_lassonet_forward.1} parent=1 // pred_check
      _
    $region3: #{conv_lassonet_forward.1} parent=1 // pred_check_branch
      %19 = sbr.rel (0) target = $region5
    $region4: #{conv_lassonet_forward.1} parent=1 // pred_region
      _
    $region5: #{conv_lassonet_forward.1} parent=1 // pred_fallthru
      _
    // Predicated region
    $region6: #{conv_lassonet_forward.1} parent=1 // pred_check
      _
    $region7: #{conv_lassonet_forward.1} parent=1 // pred_check_branch
      %21 = sbr.rel (0) target = $region9
    $region8: #{conv_lassonet_forward.1} parent=1 // pred_region
      _
    $region9: #{conv_lassonet_forward.1} parent=1 // pred_fallthru
      _
    // Predicated region
    $region10: #{conv_lassonet_forward.1} parent=1 // pred_check
      _
    $region11: #{conv_lassonet_forward.1} parent=1 // pred_check_branch
      %23 = sbr.rel (0) target = $region13
    $region12: #{conv_lassonet_forward.1} parent=1 // pred_region
      %25 = vsyncadd [#allocation4], 0
      %s26 = sshll.u32 %s2, 4
      %s27 = int_to_ptr.hbm [resolvable:$true] %s26
      %s28 = sshll.u32 [#allocation3], 4
      %s29 = int_to_ptr.vmem [resolvable:$true] %s28
      %34 = dma.hbm_to_vmem [thread:$0]  %s27, 2048, %s29, [#allocation4], 256, 256, 16
    $region13: #{conv_lassonet_forward.1} parent=1 // pred_fallthru
      _
    // Predicated region
    $region14: #{conv_lassonet_forward.1} parent=1 // pred_check
      _
    $region15: #{conv_lassonet_forward.1} parent=1 // pred_check_branch
      %36 = sbr.rel (0) target = $region17
    $region16: #{conv_lassonet_forward.1} parent=1 // pred_region
      _
    $region17: #{conv_lassonet_forward.1} parent=1 // pred_fallthru
      _
    // Predicated region
    $region18: #{conv_lassonet_forward.1} parent=1 // pred_check
      _
    $region19: #{conv_lassonet_forward.1} parent=1 // pred_check_branch
      %38 = sbr.rel (0) target = $region21
    $region20: #{conv_lassonet_forward.1} parent=1 // pred_region
      _
    $region21: #{conv_lassonet_forward.1} parent=1 // pred_fallthru
      _
    // Predicated region
    $region22: #{conv_lassonet_forward.1} parent=1 // pred_check
      _
    $region23: #{conv_lassonet_forward.1} parent=1 // pred_check_branch
      %40 = sbr.rel (0) target = $region25
    $region24: #{conv_lassonet_forward.1} parent=1 // pred_region
      %42 = vsyncadd [#allocation6], 0
      %s43 = sshll.u32 %s5, 4
      %s44 = int_to_ptr.hbm [resolvable:$true] %s43
      %s45 = sshll.u32 [#allocation5], 4
      %s46 = int_to_ptr.vmem [resolvable:$true] %s45
      %51 = dma.hbm_to_vmem [thread:$0]  %s44, 9216, %s46, [#allocation6], 128, 128, 8
    $region25: #{conv_lassonet_forward.1} parent=1 // pred_fallthru
      _
    // Predicated region
    $region26: #{conv_lassonet_forward.1} parent=1 // pred_check
      _
    $region27: #{conv_lassonet_forward.1} parent=1 // pred_check_branch
      %53 = sbr.rel (0) target = $region29
    $region28: #{conv_lassonet_forward.1} parent=1 // pred_region
      _
    $region29: #{conv_lassonet_forward.1} parent=1 // pred_fallthru
      _
    // Predicated region
    $region30: #{conv_lassonet_forward.1} parent=1 // pred_check
      _
    $region31: #{conv_lassonet_forward.1} parent=1 // pred_check_branch
      %55 = sbr.rel (0) target = $region33
    $region32: #{conv_lassonet_forward.1} parent=1 // pred_region
      %57 = vsyncadd [#allocation6], 0
      %s58 = sshll.u32 %s7, 4
      %s59 = int_to_ptr.hbm [resolvable:$true] %s58
      %s60 = sshll.u32 [#allocation7], 4
      %s61 = int_to_ptr.vmem [resolvable:$true] %s60
      %66 = dma.hbm_to_vmem [thread:$0]  %s59, 16384, %s61, [#allocation6], 256, 256, 16
    $region33: #{conv_lassonet_forward.1} parent=1 // pred_fallthru
      _
    // Predicated region
    $region34: #{conv_lassonet_forward.1} parent=1 // pred_check
      _
    $region35: #{conv_lassonet_forward.1} parent=1 // pred_check_branch
      %68 = sbr.rel (0) target = $region37
    $region36: #{conv_lassonet_forward.1} parent=1 // pred_region
      %70 = vsyncadd [#allocation9], 0
      %s71 = sshll.u32 %s8, 4
      %s72 = int_to_ptr.hbm [resolvable:$true] %s71
      %s73 = sshll.u32 [#allocation8], 4
      %s74 = int_to_ptr.vmem [resolvable:$true] %s73
      %79 = dma.hbm_to_vmem [thread:$0]  %s72, 4096, %s74, [#allocation9], 128, 128, 8
    $region37: #{conv_lassonet_forward.1} parent=1 // pred_fallthru
      _
    // Predicated region
    $region38: #{conv_lassonet_forward.1} parent=1 // pred_check
      _
    $region39: #{conv_lassonet_forward.1} parent=1 // pred_check_branch
      %81 = sbr.rel (0) target = $region41
    $region40: #{conv_lassonet_forward.1} parent=1 // pred_region
      _
    $region41: #{conv_lassonet_forward.1} parent=1 // pred_fallthru
      _
    // Predicated region
    $region42: #{conv_lassonet_forward.1} parent=1 // pred_check
      _
    $region43: #{conv_lassonet_forward.1} parent=1 // pred_check_branch
      %83 = sbr.rel (0) target = $region45
    $region44: #{conv_lassonet_forward.1} parent=1 // pred_region
      %85 = dma.done [#allocation4], 2048
    $region45: #{conv_lassonet_forward.1} parent=1 // pred_fallthru
      _
    // Predicated region
    $region46: #{conv_lassonet_forward.1} parent=1 // pred_check
      _
    $region47: #{conv_lassonet_forward.1} parent=1 // pred_check_branch
      %87 = sbr.rel (0) target = $region49
    $region48: #{conv_lassonet_forward.1} parent=1 // pred_region
      %89 = dma.done [#allocation6], 9216
    $region49: #{conv_lassonet_forward.1} parent=1 // pred_fallthru
      _
    // Predicated region
    $region50: #{conv_lassonet_forward.1} parent=1 // pred_check
      _
    $region51: #{conv_lassonet_forward.1} parent=1 // pred_check_branch
      %91 = sbr.rel (0) target = $region53
    $region52: #{conv_lassonet_forward.1} parent=1 // pred_region
      %93 = dma.done [#allocation6], 16384
    $region53: #{conv_lassonet_forward.1} parent=1 // pred_fallthru
      _
    // Predicated region
    $region54: #{conv_lassonet_forward.1} parent=1 // pred_check
      _
    $region55: #{conv_lassonet_forward.1} parent=1 // pred_check_branch
      %95 = sbr.rel (0) target = $region57
    $region56: #{conv_lassonet_forward.1} parent=1 // pred_region
      %97 = dma.done [#allocation9], 4096
    $region57: #{conv_lassonet_forward.1} parent=1 // pred_fallthru
      _
    %v98 = vld [vmem:[%s0] sm:$0xff]
    %v99 = vld [vmem:[%s0 + $0x8] sm:$0xff]
    %v100 = vld [vmem:[%s0 + $0x10] sm:$0xff]
    %v101 = vld [vmem:[%s0 + $0x18] sm:$0xff]
    %v102 = vld [vmem:[%s0 + $0x20] sm:$0xff]
    %v103 = vld [vmem:[%s0 + $0x28] sm:$0xff]
    %v104 = vld [vmem:[%s0 + $0x30] sm:$0xff]
    %v105 = vld [vmem:[%s0 + $0x38] sm:$0xff]
    %v106 = vld [vmem:[%s0 + $0x40] sm:$0xff]
    %v107 = vld [vmem:[%s0 + $0x48] sm:$0xff]
    %v108 = vld [vmem:[%s0 + $0x50] sm:$0xff]
    %v109 = vld [vmem:[%s0 + $0x58] sm:$0xff]
    %v110 = vld [vmem:[%s0 + $0x60] sm:$0xff]
    %v111 = vld [vmem:[%s0 + $0x68] sm:$0xff]
    %v112 = vld [vmem:[%s0 + $0x70] sm:$0xff]
    %v113 = vld [vmem:[%s0 + $0x78] sm:$0xff]
    %v114 = vld [vmem:[#allocation3] sm:$0xff]
    %v115 = vld [vmem:[#allocation3 + $0x8] sm:$0xff]
    %v116 = vld [vmem:[#allocation3 + $0x10] sm:$0xff]
    %v117 = vld [vmem:[#allocation3 + $0x18] sm:$0xff]
    %v118 = vld [vmem:[#allocation3 + $0x20] sm:$0xff]
    %v119 = vld [vmem:[#allocation3 + $0x28] sm:$0xff]
    %v120 = vld [vmem:[#allocation3 + $0x30] sm:$0xff]
    %v121 = vld [vmem:[#allocation3 + $0x38] sm:$0xff]
    %v122 = vld [vmem:[#allocation3 + $0x40] sm:$0xff]
    %v123 = vld [vmem:[#allocation3 + $0x48] sm:$0xff]
    %v124 = vld [vmem:[#allocation3 + $0x50] sm:$0xff]
    %v125 = vld [vmem:[#allocation3 + $0x58] sm:$0xff]
    %v126 = vld [vmem:[#allocation3 + $0x60] sm:$0xff]
    %v127 = vld [vmem:[#allocation3 + $0x68] sm:$0xff]
    %v128 = vld [vmem:[#allocation3 + $0x70] sm:$0xff]
    %v129 = vld [vmem:[#allocation3 + $0x78] sm:$0xff]
    %vm130 = vcmask 523264
    %v132 = vsel %vm130, %v98, 0
    %v135 = vsel %vm130, %v99, 0
    %v138 = vsel %vm130, %v100, 0
    %v141 = vsel %vm130, %v101, 0
    %v144 = vsel %vm130, %v102, 0
    %v147 = vsel %vm130, %v103, 0
    %v150 = vsel %vm130, %v104, 0
    %v153 = vsel %vm130, %v105, 0
    %v156 = vsel %vm130, %v106, 0
    %v159 = vsel %vm130, %v107, 0
    %v162 = vsel %vm130, %v108, 0
    %v165 = vsel %vm130, %v109, 0
    %v168 = vsel %vm130, %v110, 0
    %v171 = vsel %vm130, %v111, 0
    %v174 = vsel %vm130, %v112, 0
    %v177 = vsel %vm130, %v113, 0
    %179 = vmatpush.msra.mxu0 0.0
    %180 = vmatpush.msra.mxu0 0.0
    %181 = vmatpush.msra.mxu0 0.0
    %182 = vmatpush.msra.mxu0 0.0
    %183 = vmatpush.msra.mxu0 0.0
    %184 = vmatpush.msra.mxu0 0.0
    %185 = vmatpush.msra.mxu0 0.0
    %186 = vmatpush.msra.mxu0 0.0
    %187 = vmatpush.msra.mxu0 %v128
    %188 = vmatpush.msra.mxu0 %v126
    %189 = vmatpush.msra.mxu0 %v124
    %190 = vmatpush.msra.mxu0 %v122
    %191 = vmatpush.msra.mxu0 %v120
    %192 = vmatpush.msra.mxu0 %v118
    %193 = vmatpush.msra.mxu0 %v116
    %194 = vmatpush.msra.mxu0 %v114
    %195 = vmatmul.f32.gmra.mxu0 %v132
    %v196 = vpop.f32.mrf.mxu0
    %v197 = vadd.f32 0.0, %v196
    %198 = vmatmul.f32.gmra.mxu0 %v135
    %v199 = vpop.f32.mrf.mxu0
    %v200 = vadd.f32 0.0, %v199
    %201 = vmatmul.f32.gmra.mxu0 %v138
    %v202 = vpop.f32.mrf.mxu0
    %v203 = vadd.f32 0.0, %v202
    %204 = vmatmul.f32.gmra.mxu0 %v141
    %v205 = vpop.f32.mrf.mxu0
    %v206 = vadd.f32 0.0, %v205
    %207 = vmatmul.f32.gmra.mxu0 %v144
    %v208 = vpop.f32.mrf.mxu0
    %v209 = vadd.f32 0.0, %v208
    %210 = vmatmul.f32.gmra.mxu0 %v147
    %v211 = vpop.f32.mrf.mxu0
    %v212 = vadd.f32 0.0, %v211
    %213 = vmatmul.f32.gmra.mxu0 %v150
    %v214 = vpop.f32.mrf.mxu0
    %v215 = vadd.f32 0.0, %v214
    %216 = vmatmul.f32.gmra.mxu0 %v153
    %v217 = vpop.f32.mrf.mxu0
    %v218 = vadd.f32 0.0, %v217
    %219 = vmatmul.f32.gmra.mxu0 %v156
    %v220 = vpop.f32.mrf.mxu0
    %v221 = vadd.f32 0.0, %v220
    %222 = vmatmul.f32.gmra.mxu0 %v159
    %v223 = vpop.f32.mrf.mxu0
    %v224 = vadd.f32 0.0, %v223
    %225 = vmatmul.f32.gmra.mxu0 %v162
    %v226 = vpop.f32.mrf.mxu0
    %v227 = vadd.f32 0.0, %v226
    %228 = vmatmul.f32.gmra.mxu0 %v165
    %v229 = vpop.f32.mrf.mxu0
    %v230 = vadd.f32 0.0, %v229
    %231 = vmatmul.f32.gmra.mxu0 %v168
    %v232 = vpop.f32.mrf.mxu0
    %v233 = vadd.f32 0.0, %v232
    %234 = vmatmul.f32.gmra.mxu0 %v171
    %v235 = vpop.f32.mrf.mxu0
    %v236 = vadd.f32 0.0, %v235
    %237 = vmatmul.f32.gmra.mxu0 %v174
    %v238 = vpop.f32.mrf.mxu0
    %v239 = vadd.f32 0.0, %v238
    %240 = vmatmul.f32.gmra.mxu0 %v177
    %v241 = vpop.f32.mrf.mxu0
    %v242 = vadd.f32 0.0, %v241
    %243 = vdwg.mxu0
    %244 = vmatpush.msra.mxu0 0.0
    %245 = vmatpush.msra.mxu0 0.0
    %246 = vmatpush.msra.mxu0 0.0
    %247 = vmatpush.msra.mxu0 0.0
    %248 = vmatpush.msra.mxu0 0.0
    %249 = vmatpush.msra.mxu0 0.0
    %250 = vmatpush.msra.mxu0 0.0
    %251 = vmatpush.msra.mxu0 0.0
    %252 = vmatpush.msra.mxu0 %v129
    %253 = vmatpush.msra.mxu0 %v127
    %254 = vmatpush.msra.mxu0 %v125
    %255 = vmatpush.msra.mxu0 %v123
    %256 = vmatpush.msra.mxu0 %v121
    %257 = vmatpush.msra.mxu0 %v119
    %258 = vmatpush.msra.mxu0 %v117
    %259 = vmatpush.msra.mxu0 %v115
    %260 = vmatmul.f32.gmra.mxu0 %v132
    %v261 = vpop.f32.mrf.mxu0
    %v262 = vadd.f32 0.0, %v261
    %263 = vmatmul.f32.gmra.mxu0 %v135
    %v264 = vpop.f32.mrf.mxu0
    %v265 = vadd.f32 0.0, %v264
    %266 = vmatmul.f32.gmra.mxu0 %v138
    %v267 = vpop.f32.mrf.mxu0
    %v268 = vadd.f32 0.0, %v267
    %269 = vmatmul.f32.gmra.mxu0 %v141
    %v270 = vpop.f32.mrf.mxu0
    %v271 = vadd.f32 0.0, %v270
    %272 = vmatmul.f32.gmra.mxu0 %v144
    %v273 = vpop.f32.mrf.mxu0
    %v274 = vadd.f32 0.0, %v273
    %275 = vmatmul.f32.gmra.mxu0 %v147
    %v276 = vpop.f32.mrf.mxu0
    %v277 = vadd.f32 0.0, %v276
    %278 = vmatmul.f32.gmra.mxu0 %v150
    %v279 = vpop.f32.mrf.mxu0
    %v280 = vadd.f32 0.0, %v279
    %281 = vmatmul.f32.gmra.mxu0 %v153
    %v282 = vpop.f32.mrf.mxu0
    %v283 = vadd.f32 0.0, %v282
    %284 = vmatmul.f32.gmra.mxu0 %v156
    %v285 = vpop.f32.mrf.mxu0
    %v286 = vadd.f32 0.0, %v285
    %287 = vmatmul.f32.gmra.mxu0 %v159
    %v288 = vpop.f32.mrf.mxu0
    %v289 = vadd.f32 0.0, %v288
    %290 = vmatmul.f32.gmra.mxu0 %v162
    %v291 = vpop.f32.mrf.mxu0
    %v292 = vadd.f32 0.0, %v291
    %293 = vmatmul.f32.gmra.mxu0 %v165
    %v294 = vpop.f32.mrf.mxu0
    %v295 = vadd.f32 0.0, %v294
    %296 = vmatmul.f32.gmra.mxu0 %v168
    %v297 = vpop.f32.mrf.mxu0
    %v298 = vadd.f32 0.0, %v297
    %299 = vmatmul.f32.gmra.mxu0 %v171
    %v300 = vpop.f32.mrf.mxu0
    %v301 = vadd.f32 0.0, %v300
    %302 = vmatmul.f32.gmra.mxu0 %v174
    %v303 = vpop.f32.mrf.mxu0
    %v304 = vadd.f32 0.0, %v303
    %305 = vmatmul.f32.gmra.mxu0 %v177
    %v306 = vpop.f32.mrf.mxu0
    %v307 = vadd.f32 0.0, %v306
    %308 = vdwg.mxu0
    %v309 = vld [vmem:[%s1] sm:$0xff]
    %v310 = vld [vmem:[%s1 + $0x8] sm:$0xff]
    %v311 = vld [vmem:[%s1 + $0x10] sm:$0xff]
    %v312 = vld [vmem:[%s1 + $0x18] sm:$0xff]
    %v313 = vld [vmem:[%s1 + $0x20] sm:$0xff]
    %v314 = vld [vmem:[%s1 + $0x28] sm:$0xff]
    %v315 = vld [vmem:[%s1 + $0x30] sm:$0xff]
    %v316 = vld [vmem:[%s1 + $0x38] sm:$0xff]
    %v317 = vld [vmem:[%s4] sm:$0xff]
    %v318 = vld [vmem:[%s4 + $0x8] sm:$0xff]
    %v319 = vld [vmem:[%s4 + $0x10] sm:$0xff]
    %v320 = vld [vmem:[%s4 + $0x18] sm:$0xff]
    %v321 = vld [vmem:[%s4 + $0x20] sm:$0xff]
    %v322 = vld [vmem:[%s4 + $0x28] sm:$0xff]
    %v323 = vld [vmem:[%s4 + $0x30] sm:$0xff]
    %v324 = vld [vmem:[%s4 + $0x38] sm:$0xff]
    %v325 = vld [vmem:[%s4 + $0x40] sm:$0xff]
    %v326 = vld [vmem:[%s4 + $0x48] sm:$0xff]
    %v327 = vld [vmem:[%s4 + $0x50] sm:$0xff]
    %v328 = vld [vmem:[%s4 + $0x58] sm:$0xff]
    %v329 = vld [vmem:[%s4 + $0x60] sm:$0xff]
    %v330 = vld [vmem:[%s4 + $0x68] sm:$0xff]
    %v331 = vld [vmem:[%s4 + $0x70] sm:$0xff]
    %v332 = vld [vmem:[%s4 + $0x78] sm:$0xff]
    %v333 = vld [vmem:[%s4 + $0x80] sm:$0xff]
    %v334 = vld [vmem:[%s4 + $0x88] sm:$0xff]
    %v335 = vld [vmem:[%s4 + $0x90] sm:$0xff]
    %v336 = vld [vmem:[%s4 + $0x98] sm:$0xff]
    %v337 = vld [vmem:[%s4 + $0xa0] sm:$0xff]
    %v338 = vld [vmem:[%s4 + $0xa8] sm:$0xff]
    %v339 = vld [vmem:[%s4 + $0xb0] sm:$0xff]
    %v340 = vld [vmem:[%s4 + $0xb8] sm:$0xff]
    %v341 = vld [vmem:[%s4 + $0xc0] sm:$0xff]
    %v342 = vld [vmem:[%s4 + $0xc8] sm:$0xff]
    %v343 = vld [vmem:[%s4 + $0xd0] sm:$0xff]
    %v344 = vld [vmem:[%s4 + $0xd8] sm:$0xff]
    %v345 = vld [vmem:[%s4 + $0xe0] sm:$0xff]
    %v346 = vld [vmem:[%s4 + $0xe8] sm:$0xff]
    %v347 = vld [vmem:[%s4 + $0xf0] sm:$0xff]
    %v348 = vld [vmem:[%s4 + $0xf8] sm:$0xff]
    %v349 = vld [vmem:[%s4 + $0x100] sm:$0xff]
    %v350 = vld [vmem:[%s4 + $0x108] sm:$0xff]
    %v351 = vld [vmem:[%s4 + $0x110] sm:$0xff]
    %v352 = vld [vmem:[%s4 + $0x118] sm:$0xff]
    %v353 = vld [vmem:[%s4 + $0x120] sm:$0xff]
    %v354 = vld [vmem:[%s4 + $0x128] sm:$0xff]
    %v355 = vld [vmem:[%s4 + $0x130] sm:$0xff]
    %v356 = vld [vmem:[%s4 + $0x138] sm:$0xff]
    %v357 = vld [vmem:[%s4 + $0x140] sm:$0xff]
    %v358 = vld [vmem:[%s4 + $0x148] sm:$0xff]
    %v359 = vld [vmem:[%s4 + $0x150] sm:$0xff]
    %v360 = vld [vmem:[%s4 + $0x158] sm:$0xff]
    %v361 = vld [vmem:[%s4 + $0x160] sm:$0xff]
    %v362 = vld [vmem:[%s4 + $0x168] sm:$0xff]
    %v363 = vld [vmem:[%s4 + $0x170] sm:$0xff]
    %v364 = vld [vmem:[%s4 + $0x178] sm:$0xff]
    %v365 = vld [vmem:[%s4 + $0x180] sm:$0xff]
    %v366 = vld [vmem:[%s4 + $0x188] sm:$0xff]
    %v367 = vld [vmem:[%s4 + $0x190] sm:$0xff]
    %v368 = vld [vmem:[%s4 + $0x198] sm:$0xff]
    %v369 = vld [vmem:[%s4 + $0x1a0] sm:$0xff]
    %v370 = vld [vmem:[%s4 + $0x1a8] sm:$0xff]
    %v371 = vld [vmem:[%s4 + $0x1b0] sm:$0xff]
    %v372 = vld [vmem:[%s4 + $0x1b8] sm:$0xff]
    %v373 = vld [vmem:[%s4 + $0x1c0] sm:$0xff]
    %v374 = vld [vmem:[%s4 + $0x1c8] sm:$0xff]
    %v375 = vld [vmem:[%s4 + $0x1d0] sm:$0xff]
    %v376 = vld [vmem:[%s4 + $0x1d8] sm:$0xff]
    %v377 = vld [vmem:[%s4 + $0x1e0] sm:$0xff]
    %v378 = vld [vmem:[%s4 + $0x1e8] sm:$0xff]
    %v379 = vld [vmem:[%s4 + $0x1f0] sm:$0xff]
    %v380 = vld [vmem:[%s4 + $0x1f8] sm:$0xff]
    %v381 = vld [vmem:[%s4 + $0x200] sm:$0xff]
    %v382 = vld [vmem:[%s4 + $0x208] sm:$0xff]
    %v383 = vld [vmem:[%s4 + $0x210] sm:$0xff]
    %v384 = vld [vmem:[%s4 + $0x218] sm:$0xff]
    %v385 = vld [vmem:[%s4 + $0x220] sm:$0xff]
    %v386 = vld [vmem:[%s4 + $0x228] sm:$0xff]
    %v387 = vld [vmem:[%s4 + $0x230] sm:$0xff]
    %v388 = vld [vmem:[%s4 + $0x238] sm:$0xff]
    %v389 = vld [vmem:[%s4 + $0x240] sm:$0xff]
    %v390 = vld [vmem:[%s4 + $0x248] sm:$0xff]
    %v391 = vld [vmem:[%s4 + $0x250] sm:$0xff]
    %v392 = vld [vmem:[%s4 + $0x258] sm:$0xff]
    %v393 = vld [vmem:[%s4 + $0x260] sm:$0xff]
    %v394 = vld [vmem:[%s4 + $0x268] sm:$0xff]
    %v395 = vld [vmem:[%s4 + $0x270] sm:$0xff]
    %v396 = vld [vmem:[%s4 + $0x278] sm:$0xff]
    %v397 = vld [vmem:[%s4 + $0x280] sm:$0xff]
    %v398 = vld [vmem:[%s4 + $0x288] sm:$0xff]
    %v399 = vld [vmem:[%s4 + $0x290] sm:$0xff]
    %v400 = vld [vmem:[%s4 + $0x298] sm:$0xff]
    %v401 = vld [vmem:[%s4 + $0x2a0] sm:$0xff]
    %v402 = vld [vmem:[%s4 + $0x2a8] sm:$0xff]
    %v403 = vld [vmem:[%s4 + $0x2b0] sm:$0xff]
    %v404 = vld [vmem:[%s4 + $0x2b8] sm:$0xff]
    %v405 = vld [vmem:[%s4 + $0x2c0] sm:$0xff]
    %v406 = vld [vmem:[%s4 + $0x2c8] sm:$0xff]
    %v407 = vld [vmem:[%s4 + $0x2d0] sm:$0xff]
    %v408 = vld [vmem:[%s4 + $0x2d8] sm:$0xff]
    %v409 = vld [vmem:[%s4 + $0x2e0] sm:$0xff]
    %v410 = vld [vmem:[%s4 + $0x2e8] sm:$0xff]
    %v411 = vld [vmem:[%s4 + $0x2f0] sm:$0xff]
    %v412 = vld [vmem:[%s4 + $0x2f8] sm:$0xff]
    %v413 = vld [vmem:[%s4 + $0x300] sm:$0xff]
    %v414 = vld [vmem:[%s4 + $0x308] sm:$0xff]
    %v415 = vld [vmem:[%s4 + $0x310] sm:$0xff]
    %v416 = vld [vmem:[%s4 + $0x318] sm:$0xff]
    %v417 = vld [vmem:[%s4 + $0x320] sm:$0xff]
    %v418 = vld [vmem:[%s4 + $0x328] sm:$0xff]
    %v419 = vld [vmem:[%s4 + $0x330] sm:$0xff]
    %v420 = vld [vmem:[%s4 + $0x338] sm:$0xff]
    %v421 = vld [vmem:[%s4 + $0x340] sm:$0xff]
    %v422 = vld [vmem:[%s4 + $0x348] sm:$0xff]
    %v423 = vld [vmem:[%s4 + $0x350] sm:$0xff]
    %v424 = vld [vmem:[%s4 + $0x358] sm:$0xff]
    %v425 = vld [vmem:[%s4 + $0x360] sm:$0xff]
    %v426 = vld [vmem:[%s4 + $0x368] sm:$0xff]
    %v427 = vld [vmem:[%s4 + $0x370] sm:$0xff]
    %v428 = vld [vmem:[%s4 + $0x378] sm:$0xff]
    %v429 = vld [vmem:[%s4 + $0x380] sm:$0xff]
    %v430 = vld [vmem:[%s4 + $0x388] sm:$0xff]
    %v431 = vld [vmem:[%s4 + $0x390] sm:$0xff]
    %v432 = vld [vmem:[%s4 + $0x398] sm:$0xff]
    %v433 = vld [vmem:[%s4 + $0x3a0] sm:$0xff]
    %v434 = vld [vmem:[%s4 + $0x3a8] sm:$0xff]
    %v435 = vld [vmem:[%s4 + $0x3b0] sm:$0xff]
    %v436 = vld [vmem:[%s4 + $0x3b8] sm:$0xff]
    %v437 = vld [vmem:[%s4 + $0x3c0] sm:$0xff]
    %v438 = vld [vmem:[%s4 + $0x3c8] sm:$0xff]
    %v439 = vld [vmem:[%s4 + $0x3d0] sm:$0xff]
    %v440 = vld [vmem:[%s4 + $0x3d8] sm:$0xff]
    %v441 = vld [vmem:[%s4 + $0x3e0] sm:$0xff]
    %v442 = vld [vmem:[%s4 + $0x3e8] sm:$0xff]
    %v443 = vld [vmem:[%s4 + $0x3f0] sm:$0xff]
    %v444 = vld [vmem:[%s4 + $0x3f8] sm:$0xff]
    %461 = vrot.lane.b32.xlu0 %v197, 64
    %v462 = vpop.permute.xlu0 %461
    %463 = vrot.lane.b32.xlu0 %v200, 64
    %v464 = vpop.permute.xlu0 %463
    %465 = vrot.lane.b32.xlu0 %v203, 64
    %v466 = vpop.permute.xlu0 %465
    %467 = vrot.lane.b32.xlu0 %v206, 64
    %v468 = vpop.permute.xlu0 %467
    %469 = vrot.lane.b32.xlu0 %v209, 64
    %v470 = vpop.permute.xlu0 %469
    %471 = vrot.lane.b32.xlu0 %v212, 64
    %v472 = vpop.permute.xlu0 %471
    %473 = vrot.lane.b32.xlu0 %v215, 64
    %v474 = vpop.permute.xlu0 %473
    %475 = vrot.lane.b32.xlu0 %v218, 64
    %v476 = vpop.permute.xlu0 %475
    %477 = vrot.lane.b32.xlu0 %v221, 64
    %v478 = vpop.permute.xlu0 %477
    %479 = vrot.lane.b32.xlu0 %v224, 64
    %v480 = vpop.permute.xlu0 %479
    %481 = vrot.lane.b32.xlu0 %v227, 64
    %v482 = vpop.permute.xlu0 %481
    %483 = vrot.lane.b32.xlu0 %v230, 64
    %v484 = vpop.permute.xlu0 %483
    %485 = vrot.lane.b32.xlu0 %v233, 64
    %v486 = vpop.permute.xlu0 %485
    %487 = vrot.lane.b32.xlu0 %v236, 64
    %v488 = vpop.permute.xlu0 %487
    %489 = vrot.lane.b32.xlu0 %v239, 64
    %v490 = vpop.permute.xlu0 %489
    %491 = vrot.lane.b32.xlu0 %v242, 64
    %v492 = vpop.permute.xlu0 %491
    %v509 = vmax.f32 %v197, %v462
    %v510 = vmax.f32 %v200, %v464
    %v511 = vmax.f32 %v203, %v466
    %v512 = vmax.f32 %v206, %v468
    %v513 = vmax.f32 %v209, %v470
    %v514 = vmax.f32 %v212, %v472
    %v515 = vmax.f32 %v215, %v474
    %v516 = vmax.f32 %v218, %v476
    %v517 = vmax.f32 %v221, %v478
    %v518 = vmax.f32 %v224, %v480
    %v519 = vmax.f32 %v227, %v482
    %v520 = vmax.f32 %v230, %v484
    %v521 = vmax.f32 %v233, %v486
    %v522 = vmax.f32 %v236, %v488
    %v523 = vmax.f32 %v239, %v490
    %v524 = vmax.f32 %v242, %v492
    %541 = vrot.lane.b32.xlu0 %v262, 64
    %v542 = vpop.permute.xlu0 %541
    %543 = vrot.lane.b32.xlu0 %v265, 64
    %v544 = vpop.permute.xlu0 %543
    %545 = vrot.lane.b32.xlu0 %v268, 64
    %v546 = vpop.permute.xlu0 %545
    %547 = vrot.lane.b32.xlu0 %v271, 64
    %v548 = vpop.permute.xlu0 %547
    %549 = vrot.lane.b32.xlu0 %v274, 64
    %v550 = vpop.permute.xlu0 %549
    %551 = vrot.lane.b32.xlu0 %v277, 64
    %v552 = vpop.permute.xlu0 %551
    %553 = vrot.lane.b32.xlu0 %v280, 64
    %v554 = vpop.permute.xlu0 %553
    %555 = vrot.lane.b32.xlu0 %v283, 64
    %v556 = vpop.permute.xlu0 %555
    %557 = vrot.lane.b32.xlu0 %v286, 64
    %v558 = vpop.permute.xlu0 %557
    %559 = vrot.lane.b32.xlu0 %v289, 64
    %v560 = vpop.permute.xlu0 %559
    %561 = vrot.lane.b32.xlu0 %v292, 64
    %v562 = vpop.permute.xlu0 %561
    %563 = vrot.lane.b32.xlu0 %v295, 64
    %v564 = vpop.permute.xlu0 %563
    %565 = vrot.lane.b32.xlu0 %v298, 64
    %v566 = vpop.permute.xlu0 %565
    %567 = vrot.lane.b32.xlu0 %v301, 64
    %v568 = vpop.permute.xlu0 %567
    %569 = vrot.lane.b32.xlu0 %v304, 64
    %v570 = vpop.permute.xlu0 %569
    %571 = vrot.lane.b32.xlu0 %v307, 64
    %v572 = vpop.permute.xlu0 %571
    %v589 = vmax.f32 %v262, %v542
    %v590 = vmax.f32 %v265, %v544
    %v591 = vmax.f32 %v268, %v546
    %v592 = vmax.f32 %v271, %v548
    %v593 = vmax.f32 %v274, %v550
    %v594 = vmax.f32 %v277, %v552
    %v595 = vmax.f32 %v280, %v554
    %v596 = vmax.f32 %v283, %v556
    %v597 = vmax.f32 %v286, %v558
    %v598 = vmax.f32 %v289, %v560
    %v599 = vmax.f32 %v292, %v562
    %v600 = vmax.f32 %v295, %v564
    %v601 = vmax.f32 %v298, %v566
    %v602 = vmax.f32 %v301, %v568
    %v603 = vmax.f32 %v304, %v570
    %v604 = vmax.f32 %v307, %v572
    %v605 = vmax.f32 %v509, %v589
    %v606 = vmax.f32 %v510, %v590
    %v607 = vmax.f32 %v511, %v591
    %v608 = vmax.f32 %v512, %v592
    %v609 = vmax.f32 %v513, %v593
    %v610 = vmax.f32 %v514, %v594
    %v611 = vmax.f32 %v515, %v595
    %v612 = vmax.f32 %v516, %v596
    %v613 = vmax.f32 %v517, %v597
    %v614 = vmax.f32 %v518, %v598
    %v615 = vmax.f32 %v519, %v599
    %v616 = vmax.f32 %v520, %v600
    %v617 = vmax.f32 %v521, %v601
    %v618 = vmax.f32 %v522, %v602
    %v619 = vmax.f32 %v523, %v603
    %v620 = vmax.f32 %v524, %v604
    %v621 = vld [vmem:[%s3] sm:$0x1]
    %v623 = vperm.slane %v621, 0
    %v625 = vadd.f32 %v605, %v623
    %v626 = vadd.f32 %v606, %v623
    %v627 = vadd.f32 %v607, %v623
    %v628 = vadd.f32 %v608, %v623
    %v629 = vadd.f32 %v609, %v623
    %v630 = vadd.f32 %v610, %v623
    %v631 = vadd.f32 %v611, %v623
    %v632 = vadd.f32 %v612, %v623
    %v633 = vadd.f32 %v613, %v623
    %v634 = vadd.f32 %v614, %v623
    %v635 = vadd.f32 %v615, %v623
    %v636 = vadd.f32 %v616, %v623
    %v637 = vadd.f32 %v617, %v623
    %v638 = vadd.f32 %v618, %v623
    %v639 = vadd.f32 %v619, %v623
    %v640 = vadd.f32 %v620, %v623
    %v641 = vmax.f32 %v625, 0.0
    %v642 = vmax.f32 %v626, 0.0
    %v643 = vmax.f32 %v627, 0.0
    %v644 = vmax.f32 %v628, 0.0
    %v645 = vmax.f32 %v629, 0.0
    %v646 = vmax.f32 %v630, 0.0
    %v647 = vmax.f32 %v631, 0.0
    %v648 = vmax.f32 %v632, 0.0
    %v649 = vmax.f32 %v633, 0.0
    %v650 = vmax.f32 %v634, 0.0
    %v651 = vmax.f32 %v635, 0.0
    %v652 = vmax.f32 %v636, 0.0
    %v653 = vmax.f32 %v637, 0.0
    %v654 = vmax.f32 %v638, 0.0
    %v655 = vmax.f32 %v639, 0.0
    %v656 = vmax.f32 %v640, 0.0
    %657 = vst.msk [vmem:[#allocation2] sm:$0xff] %vm130, 0.0
    %658 = vst.msk [vmem:[#allocation2 + $0x8] sm:$0xff] %vm130, 0.0
    %659 = vst.msk [vmem:[#allocation2 + $0x10] sm:$0xff] %vm130, 0.0
    %660 = vst.msk [vmem:[#allocation2 + $0x18] sm:$0xff] %vm130, 0.0
    %661 = vst.msk [vmem:[#allocation2 + $0x20] sm:$0xff] %vm130, 0.0
    %662 = vst.msk [vmem:[#allocation2 + $0x28] sm:$0xff] %vm130, 0.0
    %663 = vst.msk [vmem:[#allocation2 + $0x30] sm:$0xff] %vm130, 0.0
    %664 = vst.msk [vmem:[#allocation2 + $0x38] sm:$0xff] %vm130, 0.0
    %665 = vst.msk [vmem:[#allocation2 + $0x40] sm:$0xff] %vm130, 0.0
    %666 = vst.msk [vmem:[#allocation2 + $0x48] sm:$0xff] %vm130, 0.0
    %667 = vst.msk [vmem:[#allocation2 + $0x50] sm:$0xff] %vm130, 0.0
    %668 = vst.msk [vmem:[#allocation2 + $0x58] sm:$0xff] %vm130, 0.0
    %669 = vst.msk [vmem:[#allocation2 + $0x60] sm:$0xff] %vm130, 0.0
    %670 = vst.msk [vmem:[#allocation2 + $0x68] sm:$0xff] %vm130, 0.0
    %671 = vst.msk [vmem:[#allocation2 + $0x70] sm:$0xff] %vm130, 0.0
    %672 = vst.msk [vmem:[#allocation2 + $0x78] sm:$0xff] %vm130, 0.0
    %673 = vst.msk [vmem:[#allocation2 + $0x80] sm:$0xff] %vm130, 0.0
    %674 = vst.msk [vmem:[#allocation2 + $0x88] sm:$0xff] %vm130, 0.0
    %675 = vst.msk [vmem:[#allocation2 + $0x90] sm:$0xff] %vm130, 0.0
    %676 = vst.msk [vmem:[#allocation2 + $0x98] sm:$0xff] %vm130, 0.0
    %677 = vst.msk [vmem:[#allocation2 + $0xa0] sm:$0xff] %vm130, 0.0
    %678 = vst.msk [vmem:[#allocation2 + $0xa8] sm:$0xff] %vm130, 0.0
    %679 = vst.msk [vmem:[#allocation2 + $0xb0] sm:$0xff] %vm130, 0.0
    %680 = vst.msk [vmem:[#allocation2 + $0xb8] sm:$0xff] %vm130, 0.0
    %681 = vst.msk [vmem:[#allocation2 + $0xc0] sm:$0xff] %vm130, 0.0
    %682 = vst.msk [vmem:[#allocation2 + $0xc8] sm:$0xff] %vm130, 0.0
    %683 = vst.msk [vmem:[#allocation2 + $0xd0] sm:$0xff] %vm130, 0.0
    %684 = vst.msk [vmem:[#allocation2 + $0xd8] sm:$0xff] %vm130, 0.0
    %685 = vst.msk [vmem:[#allocation2 + $0xe0] sm:$0xff] %vm130, 0.0
    %686 = vst.msk [vmem:[#allocation2 + $0xe8] sm:$0xff] %vm130, 0.0
    %687 = vst.msk [vmem:[#allocation2 + $0xf0] sm:$0xff] %vm130, 0.0
    %688 = vst.msk [vmem:[#allocation2 + $0xf8] sm:$0xff] %vm130, 0.0
    %689 = vst.msk [vmem:[#allocation2 + $0x100] sm:$0xff] %vm130, 0.0
    %690 = vst.msk [vmem:[#allocation2 + $0x108] sm:$0xff] %vm130, 0.0
    %691 = vst.msk [vmem:[#allocation2 + $0x110] sm:$0xff] %vm130, 0.0
    %692 = vst.msk [vmem:[#allocation2 + $0x118] sm:$0xff] %vm130, 0.0
    %s693 = scalar_lea.vmem [#allocation2], 48
    %694 = vst.msk [vmem:[%s693 + $0x8] sm:$0xff] %vm130, %v641
    %695 = vst.msk [vmem:[%s693 + $0x10] sm:$0xff] %vm130, %v642
    %696 = vst.msk [vmem:[%s693 + $0x18] sm:$0xff] %vm130, %v643
    %697 = vst.msk [vmem:[%s693 + $0x20] sm:$0xff] %vm130, %v644
    %s698 = scalar_lea.vmem [#allocation2], 96
    %699 = vst.msk [vmem:[%s698 + $0x8] sm:$0xff] %vm130, %v645
    %700 = vst.msk [vmem:[%s698 + $0x10] sm:$0xff] %vm130, %v646
    %701 = vst.msk [vmem:[%s698 + $0x18] sm:$0xff] %vm130, %v647
    %702 = vst.msk [vmem:[%s698 + $0x20] sm:$0xff] %vm130, %v648
    %s703 = scalar_lea.vmem [#allocation2], 144
    %704 = vst.msk [vmem:[%s703 + $0x8] sm:$0xff] %vm130, %v649
    %705 = vst.msk [vmem:[%s703 + $0x10] sm:$0xff] %vm130, %v650
    %706 = vst.msk [vmem:[%s703 + $0x18] sm:$0xff] %vm130, %v651
    %707 = vst.msk [vmem:[%s703 + $0x20] sm:$0xff] %vm130, %v652
    %s708 = scalar_lea.vmem [#allocation2], 192
    %709 = vst.msk [vmem:[%s708 + $0x8] sm:$0xff] %vm130, %v653
    %710 = vst.msk [vmem:[%s708 + $0x10] sm:$0xff] %vm130, %v654
    %711 = vst.msk [vmem:[%s708 + $0x18] sm:$0xff] %vm130, %v655
    %712 = vst.msk [vmem:[%s708 + $0x20] sm:$0xff] %vm130, %v656
    %v713 = vld [vmem:[#allocation2] sm:$0xff]
    %v714 = vld [vmem:[#allocation2 + $0x8] sm:$0xff]
    %v715 = vld [vmem:[#allocation2 + $0x10] sm:$0xff]
    %v716 = vld [vmem:[#allocation2 + $0x18] sm:$0xff]
    %v717 = vld [vmem:[#allocation5] sm:$0xff]
    %v718 = vld [vmem:[#allocation5 + $0x8] sm:$0xff]
    %v719 = vld [vmem:[#allocation5 + $0x10] sm:$0xff]
    %v720 = vld [vmem:[#allocation5 + $0x18] sm:$0xff]
    %v721 = vld [vmem:[#allocation5 + $0x20] sm:$0xff]
    %v722 = vld [vmem:[#allocation5 + $0x28] sm:$0xff]
    %v723 = vld [vmem:[#allocation5 + $0x30] sm:$0xff]
    %v724 = vld [vmem:[#allocation5 + $0x38] sm:$0xff]
    %v725 = vld [vmem:[#allocation2 + $0x20] sm:$0xff]
    %v726 = vld [vmem:[#allocation5 + $0x40] sm:$0xff]
    %v727 = vld [vmem:[#allocation5 + $0x48] sm:$0xff]
    %v728 = vld [vmem:[#allocation5 + $0x50] sm:$0xff]
    %v729 = vld [vmem:[#allocation5 + $0x58] sm:$0xff]
    %v730 = vld [vmem:[#allocation5 + $0x60] sm:$0xff]
    %v731 = vld [vmem:[#allocation5 + $0x68] sm:$0xff]
    %v732 = vld [vmem:[#allocation5 + $0x70] sm:$0xff]
    %v733 = vld [vmem:[#allocation5 + $0x78] sm:$0xff]
    %v735 = vsel %vm130, %v714, 0
    %v738 = vsel %vm130, %v715, 0
    %v741 = vsel %vm130, %v716, 0
    %v744 = vsel %vm130, %v725, 0
    %746 = vmatpush.msra.mxu0 0.0
    %747 = vmatpush.msra.mxu0 0.0
    %748 = vmatpush.msra.mxu0 0.0
    %749 = vmatpush.msra.mxu0 0.0
    %750 = vmatpush.msra.mxu0 0.0
    %751 = vmatpush.msra.mxu0 0.0
    %752 = vmatpush.msra.mxu0 0.0
    %753 = vmatpush.msra.mxu0 0.0
    %754 = vmatpush.msra.mxu0 %v733
    %755 = vmatpush.msra.mxu0 %v732
    %756 = vmatpush.msra.mxu0 %v731
    %757 = vmatpush.msra.mxu0 %v730
    %758 = vmatpush.msra.mxu0 %v729
    %759 = vmatpush.msra.mxu0 %v728
    %760 = vmatpush.msra.mxu0 %v727
    %761 = vmatpush.msra.mxu0 %v726
    %762 = vmatmul.f32.gmra.mxu0 %v735
    %v763 = vpop.f32.mrf.mxu0
    %v764 = vadd.f32 0.0, %v763
    %765 = vmatmul.f32.gmra.mxu0 %v738
    %v766 = vpop.f32.mrf.mxu0
    %v767 = vadd.f32 0.0, %v766
    %768 = vmatmul.f32.gmra.mxu0 %v741
    %v769 = vpop.f32.mrf.mxu0
    %v770 = vadd.f32 0.0, %v769
    %771 = vmatmul.f32.gmra.mxu0 %v744
    %v772 = vpop.f32.mrf.mxu0
    %v773 = vadd.f32 0.0, %v772
    %774 = vdwg.mxu0
    %v776 = vsel %vm130, %v713, 0
    %778 = vmatpush.msra.mxu0 0.0
    %779 = vmatpush.msra.mxu0 0.0
    %780 = vmatpush.msra.mxu0 0.0
    %781 = vmatpush.msra.mxu0 0.0
    %782 = vmatpush.msra.mxu0 0.0
    %783 = vmatpush.msra.mxu0 0.0
    %784 = vmatpush.msra.mxu0 0.0
    %785 = vmatpush.msra.mxu0 0.0
    %786 = vmatpush.msra.mxu0 %v724
    %787 = vmatpush.msra.mxu0 %v723
    %788 = vmatpush.msra.mxu0 %v722
    %789 = vmatpush.msra.mxu0 %v721
    %790 = vmatpush.msra.mxu0 %v720
    %791 = vmatpush.msra.mxu0 %v719
    %792 = vmatpush.msra.mxu0 %v718
    %793 = vmatpush.msra.mxu0 %v717
    %794 = vmatmul.f32.gmra.mxu0 %v776
    %v795 = vpop.f32.mrf.mxu0
    %v796 = vadd.f32 %v764, %v795
    %797 = vmatmul.f32.gmra.mxu0 %v735
    %v798 = vpop.f32.mrf.mxu0
    %v799 = vadd.f32 %v767, %v798
    %800 = vmatmul.f32.gmra.mxu0 %v738
    %v801 = vpop.f32.mrf.mxu0
    %v802 = vadd.f32 %v770, %v801
    %803 = vmatmul.f32.gmra.mxu0 %v741
    %v804 = vpop.f32.mrf.mxu0
    %v805 = vadd.f32 %v773, %v804
    %806 = vdwg.mxu0
    %v807 = vld [vmem:[#allocation2 + $0x10] sm:$0xff]
    %v808 = vld [vmem:[#allocation2 + $0x18] sm:$0xff]
    %v809 = vld [vmem:[#allocation2 + $0x20] sm:$0xff]
    %v810 = vld [vmem:[#allocation2 + $0x28] sm:$0xff]
    %v811 = vld [vmem:[#allocation5 + $0x80] sm:$0xff]
    %v812 = vld [vmem:[#allocation5 + $0x88] sm:$0xff]
    %v813 = vld [vmem:[#allocation5 + $0x90] sm:$0xff]
    %v814 = vld [vmem:[#allocation5 + $0x98] sm:$0xff]
    %v815 = vld [vmem:[#allocation5 + $0xa0] sm:$0xff]
    %v816 = vld [vmem:[#allocation5 + $0xa8] sm:$0xff]
    %v817 = vld [vmem:[#allocation5 + $0xb0] sm:$0xff]
    %v818 = vld [vmem:[#allocation5 + $0xb8] sm:$0xff]
    %v820 = vsel %vm130, %v807, 0
    %v823 = vsel %vm130, %v808, 0
    %v826 = vsel %vm130, %v809, 0
    %v829 = vsel %vm130, %v810, 0
    %831 = vmatpush.msra.mxu0 0.0
    %832 = vmatpush.msra.mxu0 0.0
    %833 = vmatpush.msra.mxu0 0.0
    %834 = vmatpush.msra.mxu0 0.0
    %835 = vmatpush.msra.mxu0 0.0
    %836 = vmatpush.msra.mxu0 0.0
    %837 = vmatpush.msra.mxu0 0.0
    %838 = vmatpush.msra.mxu0 0.0
    %839 = vmatpush.msra.mxu0 %v818
    %840 = vmatpush.msra.mxu0 %v817
    %841 = vmatpush.msra.mxu0 %v816
    %842 = vmatpush.msra.mxu0 %v815
    %843 = vmatpush.msra.mxu0 %v814
    %844 = vmatpush.msra.mxu0 %v813
    %845 = vmatpush.msra.mxu0 %v812
    %846 = vmatpush.msra.mxu0 %v811
    %847 = vmatmul.f32.gmra.mxu0 %v820
    %v848 = vpop.f32.mrf.mxu0
    %v849 = vadd.f32 0.0, %v848
    %850 = vmatmul.f32.gmra.mxu0 %v823
    %v851 = vpop.f32.mrf.mxu0
    %v852 = vadd.f32 0.0, %v851
    %853 = vmatmul.f32.gmra.mxu0 %v826
    %v854 = vpop.f32.mrf.mxu0
    %v855 = vadd.f32 0.0, %v854
    %856 = vmatmul.f32.gmra.mxu0 %v829
    %v857 = vpop.f32.mrf.mxu0
    %v858 = vadd.f32 0.0, %v857
    %859 = vdwg.mxu0
    %v860 = vadd.f32 %v796, %v849
    %v861 = vadd.f32 %v799, %v852
    %v862 = vadd.f32 %v802, %v855
    %v863 = vadd.f32 %v805, %v858
    %v864 = vld [vmem:[%s693] sm:$0xff]
    %v865 = vld [vmem:[%s693 + $0x8] sm:$0xff]
    %v866 = vld [vmem:[%s693 + $0x10] sm:$0xff]
    %v867 = vld [vmem:[%s693 + $0x18] sm:$0xff]
    %v868 = vld [vmem:[#allocation5 + $0xc0] sm:$0xff]
    %v869 = vld [vmem:[#allocation5 + $0xc8] sm:$0xff]
    %v870 = vld [vmem:[#allocation5 + $0xd0] sm:$0xff]
    %v871 = vld [vmem:[#allocation5 + $0xd8] sm:$0xff]
    %v872 = vld [vmem:[#allocation5 + $0xe0] sm:$0xff]
    %v873 = vld [vmem:[#allocation5 + $0xe8] sm:$0xff]
    %v874 = vld [vmem:[#allocation5 + $0xf0] sm:$0xff]
    %v875 = vld [vmem:[#allocation5 + $0xf8] sm:$0xff]
    %v877 = vsel %vm130, %v864, 0
    %v880 = vsel %vm130, %v865, 0
    %v883 = vsel %vm130, %v866, 0
    %v886 = vsel %vm130, %v867, 0
    %888 = vmatpush.msra.mxu0 0.0
    %889 = vmatpush.msra.mxu0 0.0
    %890 = vmatpush.msra.mxu0 0.0
    %891 = vmatpush.msra.mxu0 0.0
    %892 = vmatpush.msra.mxu0 0.0
    %893 = vmatpush.msra.mxu0 0.0
    %894 = vmatpush.msra.mxu0 0.0
    %895 = vmatpush.msra.mxu0 0.0
    %896 = vmatpush.msra.mxu0 %v875
    %897 = vmatpush.msra.mxu0 %v874
    %898 = vmatpush.msra.mxu0 %v873
    %899 = vmatpush.msra.mxu0 %v872
    %900 = vmatpush.msra.mxu0 %v871
    %901 = vmatpush.msra.mxu0 %v870
    %902 = vmatpush.msra.mxu0 %v869
    %903 = vmatpush.msra.mxu0 %v868
    %904 = vmatmul.f32.gmra.mxu0 %v877
    %v905 = vpop.f32.mrf.mxu0
    %v906 = vadd.f32 0.0, %v905
    %907 = vmatmul.f32.gmra.mxu0 %v880
    %v908 = vpop.f32.mrf.mxu0
    %v909 = vadd.f32 0.0, %v908
    %910 = vmatmul.f32.gmra.mxu0 %v883
    %v911 = vpop.f32.mrf.mxu0
    %v912 = vadd.f32 0.0, %v911
    %913 = vmatmul.f32.gmra.mxu0 %v886
    %v914 = vpop.f32.mrf.mxu0
    %v915 = vadd.f32 0.0, %v914
    %916 = vdwg.mxu0
    %v917 = vadd.f32 %v860, %v906
    %v918 = vadd.f32 %v861, %v909
    %v919 = vadd.f32 %v862, %v912
    %v920 = vadd.f32 %v863, %v915
    %v921 = vld [vmem:[%s693 + $0x8] sm:$0xff]
    %v922 = vld [vmem:[%s693 + $0x10] sm:$0xff]
    %v923 = vld [vmem:[%s693 + $0x18] sm:$0xff]
    %v924 = vld [vmem:[%s693 + $0x20] sm:$0xff]
    %v925 = vld [vmem:[#allocation5 + $0x100] sm:$0xff]
    %v926 = vld [vmem:[#allocation5 + $0x108] sm:$0xff]
    %v927 = vld [vmem:[#allocation5 + $0x110] sm:$0xff]
    %v928 = vld [vmem:[#allocation5 + $0x118] sm:$0xff]
    %v929 = vld [vmem:[#allocation5 + $0x120] sm:$0xff]
    %v930 = vld [vmem:[#allocation5 + $0x128] sm:$0xff]
    %v931 = vld [vmem:[#allocation5 + $0x130] sm:$0xff]
    %v932 = vld [vmem:[#allocation5 + $0x138] sm:$0xff]
    %v934 = vsel %vm130, %v921, 0
    %v937 = vsel %vm130, %v922, 0
    %v940 = vsel %vm130, %v923, 0
    %v943 = vsel %vm130, %v924, 0
    %945 = vmatpush.msra.mxu0 0.0
    %946 = vmatpush.msra.mxu0 0.0
    %947 = vmatpush.msra.mxu0 0.0
    %948 = vmatpush.msra.mxu0 0.0
    %949 = vmatpush.msra.mxu0 0.0
    %950 = vmatpush.msra.mxu0 0.0
    %951 = vmatpush.msra.mxu0 0.0
    %952 = vmatpush.msra.mxu0 0.0
    %953 = vmatpush.msra.mxu0 %v932
    %954 = vmatpush.msra.mxu0 %v931
    %955 = vmatpush.msra.mxu0 %v930
    %956 = vmatpush.msra.mxu0 %v929
    %957 = vmatpush.msra.mxu0 %v928
    %958 = vmatpush.msra.mxu0 %v927
    %959 = vmatpush.msra.mxu0 %v926
    %960 = vmatpush.msra.mxu0 %v925
    %961 = vmatmul.f32.gmra.mxu0 %v934
    %v962 = vpop.f32.mrf.mxu0
    %v963 = vadd.f32 0.0, %v962
    %964 = vmatmul.f32.gmra.mxu0 %v937
    %v965 = vpop.f32.mrf.mxu0
    %v966 = vadd.f32 0.0, %v965
    %967 = vmatmul.f32.gmra.mxu0 %v940
    %v968 = vpop.f32.mrf.mxu0
    %v969 = vadd.f32 0.0, %v968
    %970 = vmatmul.f32.gmra.mxu0 %v943
    %v971 = vpop.f32.mrf.mxu0
    %v972 = vadd.f32 0.0, %v971
    %973 = vdwg.mxu0
    %v974 = vadd.f32 %v917, %v963
    %v975 = vadd.f32 %v918, %v966
    %v976 = vadd.f32 %v919, %v969
    %v977 = vadd.f32 %v920, %v972
    %v978 = vld [vmem:[%s693 + $0x10] sm:$0xff]
    %v979 = vld [vmem:[%s693 + $0x18] sm:$0xff]
    %v980 = vld [vmem:[%s693 + $0x20] sm:$0xff]
    %v981 = vld [vmem:[%s693 + $0x28] sm:$0xff]
    %v982 = vld [vmem:[#allocation5 + $0x140] sm:$0xff]
    %v983 = vld [vmem:[#allocation5 + $0x148] sm:$0xff]
    %v984 = vld [vmem:[#allocation5 + $0x150] sm:$0xff]
    %v985 = vld [vmem:[#allocation5 + $0x158] sm:$0xff]
    %v986 = vld [vmem:[#allocation5 + $0x160] sm:$0xff]
    %v987 = vld [vmem:[#allocation5 + $0x168] sm:$0xff]
    %v988 = vld [vmem:[#allocation5 + $0x170] sm:$0xff]
    %v989 = vld [vmem:[#allocation5 + $0x178] sm:$0xff]
    %v991 = vsel %vm130, %v978, 0
    %v994 = vsel %vm130, %v979, 0
    %v997 = vsel %vm130, %v980, 0
    %v1000 = vsel %vm130, %v981, 0
    %1002 = vmatpush.msra.mxu0 0.0
    %1003 = vmatpush.msra.mxu0 0.0
    %1004 = vmatpush.msra.mxu0 0.0
    %1005 = vmatpush.msra.mxu0 0.0
    %1006 = vmatpush.msra.mxu0 0.0
    %1007 = vmatpush.msra.mxu0 0.0
    %1008 = vmatpush.msra.mxu0 0.0
    %1009 = vmatpush.msra.mxu0 0.0
    %1010 = vmatpush.msra.mxu0 %v989
    %1011 = vmatpush.msra.mxu0 %v988
    %1012 = vmatpush.msra.mxu0 %v987
    %1013 = vmatpush.msra.mxu0 %v986
    %1014 = vmatpush.msra.mxu0 %v985
    %1015 = vmatpush.msra.mxu0 %v984
    %1016 = vmatpush.msra.mxu0 %v983
    %1017 = vmatpush.msra.mxu0 %v982
    %1018 = vmatmul.f32.gmra.mxu0 %v991
    %v1019 = vpop.f32.mrf.mxu0
    %v1020 = vadd.f32 0.0, %v1019
    %1021 = vmatmul.f32.gmra.mxu0 %v994
    %v1022 = vpop.f32.mrf.mxu0
    %v1023 = vadd.f32 0.0, %v1022
    %1024 = vmatmul.f32.gmra.mxu0 %v997
    %v1025 = vpop.f32.mrf.mxu0
    %v1026 = vadd.f32 0.0, %v1025
    %1027 = vmatmul.f32.gmra.mxu0 %v1000
    %v1028 = vpop.f32.mrf.mxu0
    %v1029 = vadd.f32 0.0, %v1028
    %1030 = vdwg.mxu0
    %v1031 = vadd.f32 %v974, %v1020
    %v1032 = vadd.f32 %v975, %v1023
    %v1033 = vadd.f32 %v976, %v1026
    %v1034 = vadd.f32 %v977, %v1029
    %v1035 = vld [vmem:[%s698] sm:$0xff]
    %v1036 = vld [vmem:[%s698 + $0x8] sm:$0xff]
    %v1037 = vld [vmem:[%s698 + $0x10] sm:$0xff]
    %v1038 = vld [vmem:[%s698 + $0x18] sm:$0xff]
    %v1039 = vld [vmem:[#allocation5 + $0x180] sm:$0xff]
    %v1040 = vld [vmem:[#allocation5 + $0x188] sm:$0xff]
    %v1041 = vld [vmem:[#allocation5 + $0x190] sm:$0xff]
    %v1042 = vld [vmem:[#allocation5 + $0x198] sm:$0xff]
    %v1043 = vld [vmem:[#allocation5 + $0x1a0] sm:$0xff]
    %v1044 = vld [vmem:[#allocation5 + $0x1a8] sm:$0xff]
    %v1045 = vld [vmem:[#allocation5 + $0x1b0] sm:$0xff]
    %v1046 = vld [vmem:[#allocation5 + $0x1b8] sm:$0xff]
    %v1048 = vsel %vm130, %v1035, 0
    %v1051 = vsel %vm130, %v1036, 0
    %v1054 = vsel %vm130, %v1037, 0
    %v1057 = vsel %vm130, %v1038, 0
    %1059 = vmatpush.msra.mxu0 0.0
    %1060 = vmatpush.msra.mxu0 0.0
    %1061 = vmatpush.msra.mxu0 0.0
    %1062 = vmatpush.msra.mxu0 0.0
    %1063 = vmatpush.msra.mxu0 0.0
    %1064 = vmatpush.msra.mxu0 0.0
    %1065 = vmatpush.msra.mxu0 0.0
    %1066 = vmatpush.msra.mxu0 0.0
    %1067 = vmatpush.msra.mxu0 %v1046
    %1068 = vmatpush.msra.mxu0 %v1045
    %1069 = vmatpush.msra.mxu0 %v1044
    %1070 = vmatpush.msra.mxu0 %v1043
    %1071 = vmatpush.msra.mxu0 %v1042
    %1072 = vmatpush.msra.mxu0 %v1041
    %1073 = vmatpush.msra.mxu0 %v1040
    %1074 = vmatpush.msra.mxu0 %v1039
    %1075 = vmatmul.f32.gmra.mxu0 %v1048
    %v1076 = vpop.f32.mrf.mxu0
    %v1077 = vadd.f32 0.0, %v1076
    %1078 = vmatmul.f32.gmra.mxu0 %v1051
    %v1079 = vpop.f32.mrf.mxu0
    %v1080 = vadd.f32 0.0, %v1079
    %1081 = vmatmul.f32.gmra.mxu0 %v1054
    %v1082 = vpop.f32.mrf.mxu0
    %v1083 = vadd.f32 0.0, %v1082
    %1084 = vmatmul.f32.gmra.mxu0 %v1057
    %v1085 = vpop.f32.mrf.mxu0
    %v1086 = vadd.f32 0.0, %v1085
    %1087 = vdwg.mxu0
    %v1088 = vadd.f32 %v1031, %v1077
    %v1089 = vadd.f32 %v1032, %v1080
    %v1090 = vadd.f32 %v1033, %v1083
    %v1091 = vadd.f32 %v1034, %v1086
    %v1092 = vld [vmem:[%s698 + $0x8] sm:$0xff]
    %v1093 = vld [vmem:[%s698 + $0x10] sm:$0xff]
    %v1094 = vld [vmem:[%s698 + $0x18] sm:$0xff]
    %v1095 = vld [vmem:[%s698 + $0x20] sm:$0xff]
    %v1096 = vld [vmem:[#allocation5 + $0x1c0] sm:$0xff]
    %v1097 = vld [vmem:[#allocation5 + $0x1c8] sm:$0xff]
    %v1098 = vld [vmem:[#allocation5 + $0x1d0] sm:$0xff]
    %v1099 = vld [vmem:[#allocation5 + $0x1d8] sm:$0xff]
    %v1100 = vld [vmem:[#allocation5 + $0x1e0] sm:$0xff]
    %v1101 = vld [vmem:[#allocation5 + $0x1e8] sm:$0xff]
    %v1102 = vld [vmem:[#allocation5 + $0x1f0] sm:$0xff]
    %v1103 = vld [vmem:[#allocation5 + $0x1f8] sm:$0xff]
    %v1105 = vsel %vm130, %v1092, 0
    %v1108 = vsel %vm130, %v1093, 0
    %v1111 = vsel %vm130, %v1094, 0
    %v1114 = vsel %vm130, %v1095, 0
    %1116 = vmatpush.msra.mxu0 0.0
    %1117 = vmatpush.msra.mxu0 0.0
    %1118 = vmatpush.msra.mxu0 0.0
    %1119 = vmatpush.msra.mxu0 0.0
    %1120 = vmatpush.msra.mxu0 0.0
    %1121 = vmatpush.msra.mxu0 0.0
    %1122 = vmatpush.msra.mxu0 0.0
    %1123 = vmatpush.msra.mxu0 0.0
    %1124 = vmatpush.msra.mxu0 %v1103
    %1125 = vmatpush.msra.mxu0 %v1102
    %1126 = vmatpush.msra.mxu0 %v1101
    %1127 = vmatpush.msra.mxu0 %v1100
    %1128 = vmatpush.msra.mxu0 %v1099
    %1129 = vmatpush.msra.mxu0 %v1098
    %1130 = vmatpush.msra.mxu0 %v1097
    %1131 = vmatpush.msra.mxu0 %v1096
    %1132 = vmatmul.f32.gmra.mxu0 %v1105
    %v1133 = vpop.f32.mrf.mxu0
    %v1134 = vadd.f32 0.0, %v1133
    %1135 = vmatmul.f32.gmra.mxu0 %v1108
    %v1136 = vpop.f32.mrf.mxu0
    %v1137 = vadd.f32 0.0, %v1136
    %1138 = vmatmul.f32.gmra.mxu0 %v1111
    %v1139 = vpop.f32.mrf.mxu0
    %v1140 = vadd.f32 0.0, %v1139
    %1141 = vmatmul.f32.gmra.mxu0 %v1114
    %v1142 = vpop.f32.mrf.mxu0
    %v1143 = vadd.f32 0.0, %v1142
    %1144 = vdwg.mxu0
    %v1145 = vadd.f32 %v1088, %v1134
    %v1146 = vadd.f32 %v1089, %v1137
    %v1147 = vadd.f32 %v1090, %v1140
    %v1148 = vadd.f32 %v1091, %v1143
    %v1149 = vld [vmem:[%s698 + $0x10] sm:$0xff]
    %v1150 = vld [vmem:[%s698 + $0x18] sm:$0xff]
    %v1151 = vld [vmem:[%s698 + $0x20] sm:$0xff]
    %v1152 = vld [vmem:[%s698 + $0x28] sm:$0xff]
    %v1153 = vld [vmem:[#allocation5 + $0x200] sm:$0xff]
    %v1154 = vld [vmem:[#allocation5 + $0x208] sm:$0xff]
    %v1155 = vld [vmem:[#allocation5 + $0x210] sm:$0xff]
    %v1156 = vld [vmem:[#allocation5 + $0x218] sm:$0xff]
    %v1157 = vld [vmem:[#allocation5 + $0x220] sm:$0xff]
    %v1158 = vld [vmem:[#allocation5 + $0x228] sm:$0xff]
    %v1159 = vld [vmem:[#allocation5 + $0x230] sm:$0xff]
    %v1160 = vld [vmem:[#allocation5 + $0x238] sm:$0xff]
    %v1162 = vsel %vm130, %v1149, 0
    %v1165 = vsel %vm130, %v1150, 0
    %v1168 = vsel %vm130, %v1151, 0
    %v1171 = vsel %vm130, %v1152, 0
    %1173 = vmatpush.msra.mxu0 0.0
    %1174 = vmatpush.msra.mxu0 0.0
    %1175 = vmatpush.msra.mxu0 0.0
    %1176 = vmatpush.msra.mxu0 0.0
    %1177 = vmatpush.msra.mxu0 0.0
    %1178 = vmatpush.msra.mxu0 0.0
    %1179 = vmatpush.msra.mxu0 0.0
    %1180 = vmatpush.msra.mxu0 0.0
    %1181 = vmatpush.msra.mxu0 %v1160
    %1182 = vmatpush.msra.mxu0 %v1159
    %1183 = vmatpush.msra.mxu0 %v1158
    %1184 = vmatpush.msra.mxu0 %v1157
    %1185 = vmatpush.msra.mxu0 %v1156
    %1186 = vmatpush.msra.mxu0 %v1155
    %1187 = vmatpush.msra.mxu0 %v1154
    %1188 = vmatpush.msra.mxu0 %v1153
    %1189 = vmatmul.f32.gmra.mxu0 %v1162
    %v1190 = vpop.f32.mrf.mxu0
    %v1191 = vadd.f32 0.0, %v1190
    %1192 = vmatmul.f32.gmra.mxu0 %v1165
    %v1193 = vpop.f32.mrf.mxu0
    %v1194 = vadd.f32 0.0, %v1193
    %1195 = vmatmul.f32.gmra.mxu0 %v1168
    %v1196 = vpop.f32.mrf.mxu0
    %v1197 = vadd.f32 0.0, %v1196
    %1198 = vmatmul.f32.gmra.mxu0 %v1171
    %v1199 = vpop.f32.mrf.mxu0
    %v1200 = vadd.f32 0.0, %v1199
    %1201 = vdwg.mxu0
    %v1202 = vadd.f32 %v1145, %v1191
    %v1203 = vadd.f32 %v1146, %v1194
    %v1204 = vadd.f32 %v1147, %v1197
    %v1205 = vadd.f32 %v1148, %v1200
    %1210 = vrot.lane.b32.xlu0 %v1202, 96
    %v1211 = vpop.permute.xlu0 %1210
    %1212 = vrot.lane.b32.xlu0 %v1203, 96
    %v1213 = vpop.permute.xlu0 %1212
    %1214 = vrot.lane.b32.xlu0 %v1204, 96
    %v1215 = vpop.permute.xlu0 %1214
    %1216 = vrot.lane.b32.xlu0 %v1205, 96
    %v1217 = vpop.permute.xlu0 %1216
    %v1222 = vmax.f32 %v1202, %v1211
    %v1223 = vmax.f32 %v1203, %v1213
    %v1224 = vmax.f32 %v1204, %v1215
    %v1225 = vmax.f32 %v1205, %v1217
    %1230 = vrot.lane.b32.xlu0 %v1222, 64
    %v1231 = vpop.permute.xlu0 %1230
    %1232 = vrot.lane.b32.xlu0 %v1223, 64
    %v1233 = vpop.permute.xlu0 %1232
    %1234 = vrot.lane.b32.xlu0 %v1224, 64
    %v1235 = vpop.permute.xlu0 %1234
    %1236 = vrot.lane.b32.xlu0 %v1225, 64
    %v1237 = vpop.permute.xlu0 %1236
    %v1242 = vmax.f32 %v1222, %v1231
    %v1243 = vmax.f32 %v1223, %v1233
    %v1244 = vmax.f32 %v1224, %v1235
    %v1245 = vmax.f32 %v1225, %v1237
    %v1246 = vld [vmem:[%s6] sm:$0x1]
    %v1248 = vperm.slane %v1246, 0
    %v1250 = vadd.f32 %v1242, %v1248
    %v1251 = vadd.f32 %v1243, %v1248
    %v1252 = vadd.f32 %v1244, %v1248
    %v1253 = vadd.f32 %v1245, %v1248
    %v1254 = vmax.f32 %v1250, 0.0
    %v1255 = vmax.f32 %v1251, 0.0
    %v1256 = vmax.f32 %v1252, 0.0
    %v1257 = vmax.f32 %v1253, 0.0
    %v1258 = vld [vmem:[#allocation7] sm:$0xff]
    %v1259 = vld [vmem:[#allocation7 + $0x8] sm:$0xff]
    %v1260 = vld [vmem:[#allocation7 + $0x10] sm:$0xff]
    %v1261 = vld [vmem:[#allocation7 + $0x18] sm:$0xff]
    %v1262 = vld [vmem:[#allocation7 + $0x20] sm:$0xff]
    %v1263 = vld [vmem:[#allocation7 + $0x28] sm:$0xff]
    %v1264 = vld [vmem:[#allocation7 + $0x30] sm:$0xff]
    %v1265 = vld [vmem:[#allocation7 + $0x38] sm:$0xff]
    %s1266 = scalar_lea.vmem [#allocation7], 64
    %v1267 = vld [vmem:[%s1266] sm:$0xff]
    %v1268 = vld [vmem:[%s1266 + $0x8] sm:$0xff]
    %v1269 = vld [vmem:[%s1266 + $0x10] sm:$0xff]
    %v1270 = vld [vmem:[%s1266 + $0x18] sm:$0xff]
    %v1271 = vld [vmem:[%s1266 + $0x20] sm:$0xff]
    %v1272 = vld [vmem:[%s1266 + $0x28] sm:$0xff]
    %v1273 = vld [vmem:[%s1266 + $0x30] sm:$0xff]
    %v1274 = vld [vmem:[%s1266 + $0x38] sm:$0xff]
    %vm1275 = vcmask 261120
    %v1277 = vsel %vm1275, %v1255, 0
    %1279 = vmatpush.msra.mxu0 0.0
    %1280 = vmatpush.msra.mxu0 0.0
    %1281 = vmatpush.msra.mxu0 0.0
    %1282 = vmatpush.msra.mxu0 0.0
    %1283 = vmatpush.msra.mxu0 0.0
    %1284 = vmatpush.msra.mxu0 0.0
    %1285 = vmatpush.msra.mxu0 0.0
    %1286 = vmatpush.msra.mxu0 0.0
    %1287 = vmatpush.msra.mxu0 0.0
    %1288 = vmatpush.msra.mxu0 0.0
    %1289 = vmatpush.msra.mxu0 0.0
    %1290 = vmatpush.msra.mxu0 0.0
    %1291 = vmatpush.msra.mxu0 %v1273
    %1292 = vmatpush.msra.mxu0 %v1271
    %1293 = vmatpush.msra.mxu0 %v1269
    %1294 = vmatpush.msra.mxu0 %v1267
    %1295 = vmatmul.f32.gmra.mxu0 %v1277
    %v1296 = vpop.f32.mrf.mxu0
    %v1297 = vadd.f32 0.0, %v1296
    %1298 = vdwg.mxu0
    %1299 = vmatpush.msra.mxu0 0.0
    %1300 = vmatpush.msra.mxu0 0.0
    %1301 = vmatpush.msra.mxu0 0.0
    %1302 = vmatpush.msra.mxu0 0.0
    %1303 = vmatpush.msra.mxu0 0.0
    %1304 = vmatpush.msra.mxu0 0.0
    %1305 = vmatpush.msra.mxu0 0.0
    %1306 = vmatpush.msra.mxu0 0.0
    %1307 = vmatpush.msra.mxu0 0.0
    %1308 = vmatpush.msra.mxu0 0.0
    %1309 = vmatpush.msra.mxu0 0.0
    %1310 = vmatpush.msra.mxu0 0.0
    %1311 = vmatpush.msra.mxu0 %v1274
    %1312 = vmatpush.msra.mxu0 %v1272
    %1313 = vmatpush.msra.mxu0 %v1270
    %1314 = vmatpush.msra.mxu0 %v1268
    %1315 = vmatmul.f32.gmra.mxu0 %v1277
    %v1316 = vpop.f32.mrf.mxu0
    %v1317 = vadd.f32 0.0, %v1316
    %1318 = vdwg.mxu0
    %v1320 = vsel %vm1275, %v1254, 0
    %1322 = vmatpush.msra.mxu0 0.0
    %1323 = vmatpush.msra.mxu0 0.0
    %1324 = vmatpush.msra.mxu0 0.0
    %1325 = vmatpush.msra.mxu0 0.0
    %1326 = vmatpush.msra.mxu0 0.0
    %1327 = vmatpush.msra.mxu0 0.0
    %1328 = vmatpush.msra.mxu0 0.0
    %1329 = vmatpush.msra.mxu0 0.0
    %1330 = vmatpush.msra.mxu0 0.0
    %1331 = vmatpush.msra.mxu0 0.0
    %1332 = vmatpush.msra.mxu0 0.0
    %1333 = vmatpush.msra.mxu0 0.0
    %1334 = vmatpush.msra.mxu0 %v1264
    %1335 = vmatpush.msra.mxu0 %v1262
    %1336 = vmatpush.msra.mxu0 %v1260
    %1337 = vmatpush.msra.mxu0 %v1258
    %1338 = vmatmul.f32.gmra.mxu0 %v1320
    %v1339 = vpop.f32.mrf.mxu0
    %v1340 = vadd.f32 %v1297, %v1339
    %1341 = vdwg.mxu0
    %1342 = vmatpush.msra.mxu0 0.0
    %1343 = vmatpush.msra.mxu0 0.0
    %1344 = vmatpush.msra.mxu0 0.0
    %1345 = vmatpush.msra.mxu0 0.0
    %1346 = vmatpush.msra.mxu0 0.0
    %1347 = vmatpush.msra.mxu0 0.0
    %1348 = vmatpush.msra.mxu0 0.0
    %1349 = vmatpush.msra.mxu0 0.0
    %1350 = vmatpush.msra.mxu0 0.0
    %1351 = vmatpush.msra.mxu0 0.0
    %1352 = vmatpush.msra.mxu0 0.0
    %1353 = vmatpush.msra.mxu0 0.0
    %1354 = vmatpush.msra.mxu0 %v1265
    %1355 = vmatpush.msra.mxu0 %v1263
    %1356 = vmatpush.msra.mxu0 %v1261
    %1357 = vmatpush.msra.mxu0 %v1259
    %1358 = vmatmul.f32.gmra.mxu0 %v1320
    %v1359 = vpop.f32.mrf.mxu0
    %v1360 = vadd.f32 %v1317, %v1359
    %1361 = vdwg.mxu0
    %s1362 = scalar_lea.vmem [#allocation7], 128
    %v1363 = vld [vmem:[%s1362] sm:$0xff]
    %v1364 = vld [vmem:[%s1362 + $0x8] sm:$0xff]
    %v1365 = vld [vmem:[%s1362 + $0x10] sm:$0xff]
    %v1366 = vld [vmem:[%s1362 + $0x18] sm:$0xff]
    %v1367 = vld [vmem:[%s1362 + $0x20] sm:$0xff]
    %v1368 = vld [vmem:[%s1362 + $0x28] sm:$0xff]
    %v1369 = vld [vmem:[%s1362 + $0x30] sm:$0xff]
    %v1370 = vld [vmem:[%s1362 + $0x38] sm:$0xff]
    %v1372 = vsel %vm1275, %v1256, 0
    %1374 = vmatpush.msra.mxu0 0.0
    %1375 = vmatpush.msra.mxu0 0.0
    %1376 = vmatpush.msra.mxu0 0.0
    %1377 = vmatpush.msra.mxu0 0.0
    %1378 = vmatpush.msra.mxu0 0.0
    %1379 = vmatpush.msra.mxu0 0.0
    %1380 = vmatpush.msra.mxu0 0.0
    %1381 = vmatpush.msra.mxu0 0.0
    %1382 = vmatpush.msra.mxu0 0.0
    %1383 = vmatpush.msra.mxu0 0.0
    %1384 = vmatpush.msra.mxu0 0.0
    %1385 = vmatpush.msra.mxu0 0.0
    %1386 = vmatpush.msra.mxu0 %v1369
    %1387 = vmatpush.msra.mxu0 %v1367
    %1388 = vmatpush.msra.mxu0 %v1365
    %1389 = vmatpush.msra.mxu0 %v1363
    %1390 = vmatmul.f32.gmra.mxu0 %v1372
    %v1391 = vpop.f32.mrf.mxu0
    %v1392 = vadd.f32 0.0, %v1391
    %1393 = vdwg.mxu0
    %1394 = vmatpush.msra.mxu0 0.0
    %1395 = vmatpush.msra.mxu0 0.0
    %1396 = vmatpush.msra.mxu0 0.0
    %1397 = vmatpush.msra.mxu0 0.0
    %1398 = vmatpush.msra.mxu0 0.0
    %1399 = vmatpush.msra.mxu0 0.0
    %1400 = vmatpush.msra.mxu0 0.0
    %1401 = vmatpush.msra.mxu0 0.0
    %1402 = vmatpush.msra.mxu0 0.0
    %1403 = vmatpush.msra.mxu0 0.0
    %1404 = vmatpush.msra.mxu0 0.0
    %1405 = vmatpush.msra.mxu0 0.0
    %1406 = vmatpush.msra.mxu0 %v1370
    %1407 = vmatpush.msra.mxu0 %v1368
    %1408 = vmatpush.msra.mxu0 %v1366
    %1409 = vmatpush.msra.mxu0 %v1364
    %1410 = vmatmul.f32.gmra.mxu0 %v1372
    %v1411 = vpop.f32.mrf.mxu0
    %v1412 = vadd.f32 0.0, %v1411
    %1413 = vdwg.mxu0
    %v1414 = vadd.f32 %v1340, %v1392
    %v1415 = vadd.f32 %v1360, %v1412
    %s1416 = scalar_lea.vmem [#allocation7], 192
    %v1417 = vld [vmem:[%s1416] sm:$0xff]
    %v1418 = vld [vmem:[%s1416 + $0x8] sm:$0xff]
    %v1419 = vld [vmem:[%s1416 + $0x10] sm:$0xff]
    %v1420 = vld [vmem:[%s1416 + $0x18] sm:$0xff]
    %v1421 = vld [vmem:[%s1416 + $0x20] sm:$0xff]
    %v1422 = vld [vmem:[%s1416 + $0x28] sm:$0xff]
    %v1423 = vld [vmem:[%s1416 + $0x30] sm:$0xff]
    %v1424 = vld [vmem:[%s1416 + $0x38] sm:$0xff]
    %v1426 = vsel %vm1275, %v1257, 0
    %1428 = vmatpush.msra.mxu0 0.0
    %1429 = vmatpush.msra.mxu0 0.0
    %1430 = vmatpush.msra.mxu0 0.0
    %1431 = vmatpush.msra.mxu0 0.0
    %1432 = vmatpush.msra.mxu0 0.0
    %1433 = vmatpush.msra.mxu0 0.0
    %1434 = vmatpush.msra.mxu0 0.0
    %1435 = vmatpush.msra.mxu0 0.0
    %1436 = vmatpush.msra.mxu0 0.0
    %1437 = vmatpush.msra.mxu0 0.0
    %1438 = vmatpush.msra.mxu0 0.0
    %1439 = vmatpush.msra.mxu0 0.0
    %1440 = vmatpush.msra.mxu0 %v1423
    %1441 = vmatpush.msra.mxu0 %v1421
    %1442 = vmatpush.msra.mxu0 %v1419
    %1443 = vmatpush.msra.mxu0 %v1417
    %1444 = vmatmul.f32.gmra.mxu0 %v1426
    %v1445 = vpop.f32.mrf.mxu0
    %v1446 = vadd.f32 0.0, %v1445
    %1447 = vdwg.mxu0
    %1448 = vmatpush.msra.mxu0 0.0
    %1449 = vmatpush.msra.mxu0 0.0
    %1450 = vmatpush.msra.mxu0 0.0
    %1451 = vmatpush.msra.mxu0 0.0
    %1452 = vmatpush.msra.mxu0 0.0
    %1453 = vmatpush.msra.mxu0 0.0
    %1454 = vmatpush.msra.mxu0 0.0
    %1455 = vmatpush.msra.mxu0 0.0
    %1456 = vmatpush.msra.mxu0 0.0
    %1457 = vmatpush.msra.mxu0 0.0
    %1458 = vmatpush.msra.mxu0 0.0
    %1459 = vmatpush.msra.mxu0 0.0
    %1460 = vmatpush.msra.mxu0 %v1424
    %1461 = vmatpush.msra.mxu0 %v1422
    %1462 = vmatpush.msra.mxu0 %v1420
    %1463 = vmatpush.msra.mxu0 %v1418
    %1464 = vmatmul.f32.gmra.mxu0 %v1426
    %v1465 = vpop.f32.mrf.mxu0
    %v1466 = vadd.f32 0.0, %v1465
    %1467 = vdwg.mxu0
    %v1468 = vadd.f32 %v1414, %v1446
    %v1469 = vadd.f32 %v1415, %v1466
    %1470 = vmatpush.msra.mxu0 0.0
    %1471 = vmatpush.msra.mxu0 0.0
    %1472 = vmatpush.msra.mxu0 0.0
    %1473 = vmatpush.msra.mxu0 0.0
    %1474 = vmatpush.msra.mxu0 0.0
    %1475 = vmatpush.msra.mxu0 0.0
    %1476 = vmatpush.msra.mxu0 0.0
    %1477 = vmatpush.msra.mxu0 0.0
    %1478 = vmatpush.msra.mxu0 %v733
    %1479 = vmatpush.msra.mxu0 %v732
    %1480 = vmatpush.msra.mxu0 %v731
    %1481 = vmatpush.msra.mxu0 %v730
    %1482 = vmatpush.msra.mxu0 %v729
    %1483 = vmatpush.msra.mxu0 %v728
    %1484 = vmatpush.msra.mxu0 %v727
    %1485 = vmatpush.msra.mxu0 %v726
    %1486 = vmatmul.f32.gmra.mxu0 %v934
    %v1487 = vpop.f32.mrf.mxu0
    %v1488 = vadd.f32 0.0, %v1487
    %1489 = vmatmul.f32.gmra.mxu0 %v937
    %v1490 = vpop.f32.mrf.mxu0
    %v1491 = vadd.f32 0.0, %v1490
    %1492 = vmatmul.f32.gmra.mxu0 %v940
    %v1493 = vpop.f32.mrf.mxu0
    %v1494 = vadd.f32 0.0, %v1493
    %1495 = vmatmul.f32.gmra.mxu0 %v943
    %v1496 = vpop.f32.mrf.mxu0
    %v1497 = vadd.f32 0.0, %v1496
    %1498 = vdwg.mxu0
    %1499 = vmatpush.msra.mxu0 0.0
    %1500 = vmatpush.msra.mxu0 0.0
    %1501 = vmatpush.msra.mxu0 0.0
    %1502 = vmatpush.msra.mxu0 0.0
    %1503 = vmatpush.msra.mxu0 0.0
    %1504 = vmatpush.msra.mxu0 0.0
    %1505 = vmatpush.msra.mxu0 0.0
    %1506 = vmatpush.msra.mxu0 0.0
    %1507 = vmatpush.msra.mxu0 %v724
    %1508 = vmatpush.msra.mxu0 %v723
    %1509 = vmatpush.msra.mxu0 %v722
    %1510 = vmatpush.msra.mxu0 %v721
    %1511 = vmatpush.msra.mxu0 %v720
    %1512 = vmatpush.msra.mxu0 %v719
    %1513 = vmatpush.msra.mxu0 %v718
    %1514 = vmatpush.msra.mxu0 %v717
    %1515 = vmatmul.f32.gmra.mxu0 %v877
    %v1516 = vpop.f32.mrf.mxu0
    %v1517 = vadd.f32 %v1488, %v1516
    %1518 = vmatmul.f32.gmra.mxu0 %v880
    %v1519 = vpop.f32.mrf.mxu0
    %v1520 = vadd.f32 %v1491, %v1519
    %1521 = vmatmul.f32.gmra.mxu0 %v883
    %v1522 = vpop.f32.mrf.mxu0
    %v1523 = vadd.f32 %v1494, %v1522
    %1524 = vmatmul.f32.gmra.mxu0 %v886
    %v1525 = vpop.f32.mrf.mxu0
    %v1526 = vadd.f32 %v1497, %v1525
    %1527 = vdwg.mxu0
    %1528 = vmatpush.msra.mxu0 0.0
    %1529 = vmatpush.msra.mxu0 0.0
    %1530 = vmatpush.msra.mxu0 0.0
    %1531 = vmatpush.msra.mxu0 0.0
    %1532 = vmatpush.msra.mxu0 0.0
    %1533 = vmatpush.msra.mxu0 0.0
    %1534 = vmatpush.msra.mxu0 0.0
    %1535 = vmatpush.msra.mxu0 0.0
    %1536 = vmatpush.msra.mxu0 %v818
    %1537 = vmatpush.msra.mxu0 %v817
    %1538 = vmatpush.msra.mxu0 %v816
    %1539 = vmatpush.msra.mxu0 %v815
    %1540 = vmatpush.msra.mxu0 %v814
    %1541 = vmatpush.msra.mxu0 %v813
    %1542 = vmatpush.msra.mxu0 %v812
    %1543 = vmatpush.msra.mxu0 %v811
    %1544 = vmatmul.f32.gmra.mxu0 %v991
    %v1545 = vpop.f32.mrf.mxu0
    %v1546 = vadd.f32 0.0, %v1545
    %1547 = vmatmul.f32.gmra.mxu0 %v994
    %v1548 = vpop.f32.mrf.mxu0
    %v1549 = vadd.f32 0.0, %v1548
    %1550 = vmatmul.f32.gmra.mxu0 %v997
    %v1551 = vpop.f32.mrf.mxu0
    %v1552 = vadd.f32 0.0, %v1551
    %1553 = vmatmul.f32.gmra.mxu0 %v1000
    %v1554 = vpop.f32.mrf.mxu0
    %v1555 = vadd.f32 0.0, %v1554
    %1556 = vdwg.mxu0
    %v1557 = vadd.f32 %v1517, %v1546
    %v1558 = vadd.f32 %v1520, %v1549
    %v1559 = vadd.f32 %v1523, %v1552
    %v1560 = vadd.f32 %v1526, %v1555
    %1561 = vmatpush.msra.mxu0 0.0
    %1562 = vmatpush.msra.mxu0 0.0
    %1563 = vmatpush.msra.mxu0 0.0
    %1564 = vmatpush.msra.mxu0 0.0
    %1565 = vmatpush.msra.mxu0 0.0
    %1566 = vmatpush.msra.mxu0 0.0
    %1567 = vmatpush.msra.mxu0 0.0
    %1568 = vmatpush.msra.mxu0 0.0
    %1569 = vmatpush.msra.mxu0 %v875
    %1570 = vmatpush.msra.mxu0 %v874
    %1571 = vmatpush.msra.mxu0 %v873
    %1572 = vmatpush.msra.mxu0 %v872
    %1573 = vmatpush.msra.mxu0 %v871
    %1574 = vmatpush.msra.mxu0 %v870
    %1575 = vmatpush.msra.mxu0 %v869
    %1576 = vmatpush.msra.mxu0 %v868
    %1577 = vmatmul.f32.gmra.mxu0 %v1048
    %v1578 = vpop.f32.mrf.mxu0
    %v1579 = vadd.f32 0.0, %v1578
    %1580 = vmatmul.f32.gmra.mxu0 %v1051
    %v1581 = vpop.f32.mrf.mxu0
    %v1582 = vadd.f32 0.0, %v1581
    %1583 = vmatmul.f32.gmra.mxu0 %v1054
    %v1584 = vpop.f32.mrf.mxu0
    %v1585 = vadd.f32 0.0, %v1584
    %1586 = vmatmul.f32.gmra.mxu0 %v1057
    %v1587 = vpop.f32.mrf.mxu0
    %v1588 = vadd.f32 0.0, %v1587
    %1589 = vdwg.mxu0
    %v1590 = vadd.f32 %v1557, %v1579
    %v1591 = vadd.f32 %v1558, %v1582
    %v1592 = vadd.f32 %v1559, %v1585
    %v1593 = vadd.f32 %v1560, %v1588
    %1594 = vmatpush.msra.mxu0 0.0
    %1595 = vmatpush.msra.mxu0 0.0
    %1596 = vmatpush.msra.mxu0 0.0
    %1597 = vmatpush.msra.mxu0 0.0
    %1598 = vmatpush.msra.mxu0 0.0
    %1599 = vmatpush.msra.mxu0 0.0
    %1600 = vmatpush.msra.mxu0 0.0
    %1601 = vmatpush.msra.mxu0 0.0
    %1602 = vmatpush.msra.mxu0 %v932
    %1603 = vmatpush.msra.mxu0 %v931
    %1604 = vmatpush.msra.mxu0 %v930
    %1605 = vmatpush.msra.mxu0 %v929
    %1606 = vmatpush.msra.mxu0 %v928
    %1607 = vmatpush.msra.mxu0 %v927
    %1608 = vmatpush.msra.mxu0 %v926
    %1609 = vmatpush.msra.mxu0 %v925
    %1610 = vmatmul.f32.gmra.mxu0 %v1105
    %v1611 = vpop.f32.mrf.mxu0
    %v1612 = vadd.f32 0.0, %v1611
    %1613 = vmatmul.f32.gmra.mxu0 %v1108
    %v1614 = vpop.f32.mrf.mxu0
    %v1615 = vadd.f32 0.0, %v1614
    %1616 = vmatmul.f32.gmra.mxu0 %v1111
    %v1617 = vpop.f32.mrf.mxu0
    %v1618 = vadd.f32 0.0, %v1617
    %1619 = vmatmul.f32.gmra.mxu0 %v1114
    %v1620 = vpop.f32.mrf.mxu0
    %v1621 = vadd.f32 0.0, %v1620
    %1622 = vdwg.mxu0
    %v1623 = vadd.f32 %v1590, %v1612
    %v1624 = vadd.f32 %v1591, %v1615
    %v1625 = vadd.f32 %v1592, %v1618
    %v1626 = vadd.f32 %v1593, %v1621
    %1627 = vmatpush.msra.mxu0 0.0
    %1628 = vmatpush.msra.mxu0 0.0
    %1629 = vmatpush.msra.mxu0 0.0
    %1630 = vmatpush.msra.mxu0 0.0
    %1631 = vmatpush.msra.mxu0 0.0
    %1632 = vmatpush.msra.mxu0 0.0
    %1633 = vmatpush.msra.mxu0 0.0
    %1634 = vmatpush.msra.mxu0 0.0
    %1635 = vmatpush.msra.mxu0 %v989
    %1636 = vmatpush.msra.mxu0 %v988
    %1637 = vmatpush.msra.mxu0 %v987
    %1638 = vmatpush.msra.mxu0 %v986
    %1639 = vmatpush.msra.mxu0 %v985
    %1640 = vmatpush.msra.mxu0 %v984
    %1641 = vmatpush.msra.mxu0 %v983
    %1642 = vmatpush.msra.mxu0 %v982
    %1643 = vmatmul.f32.gmra.mxu0 %v1162
    %v1644 = vpop.f32.mrf.mxu0
    %v1645 = vadd.f32 0.0, %v1644
    %1646 = vmatmul.f32.gmra.mxu0 %v1165
    %v1647 = vpop.f32.mrf.mxu0
    %v1648 = vadd.f32 0.0, %v1647
    %1649 = vmatmul.f32.gmra.mxu0 %v1168
    %v1650 = vpop.f32.mrf.mxu0
    %v1651 = vadd.f32 0.0, %v1650
    %1652 = vmatmul.f32.gmra.mxu0 %v1171
    %v1653 = vpop.f32.mrf.mxu0
    %v1654 = vadd.f32 0.0, %v1653
    %1655 = vdwg.mxu0
    %v1656 = vadd.f32 %v1623, %v1645
    %v1657 = vadd.f32 %v1624, %v1648
    %v1658 = vadd.f32 %v1625, %v1651
    %v1659 = vadd.f32 %v1626, %v1654
    %v1660 = vld [vmem:[%s703] sm:$0xff]
    %v1661 = vld [vmem:[%s703 + $0x8] sm:$0xff]
    %v1662 = vld [vmem:[%s703 + $0x10] sm:$0xff]
    %v1663 = vld [vmem:[%s703 + $0x18] sm:$0xff]
    %v1665 = vsel %vm130, %v1660, 0
    %v1668 = vsel %vm130, %v1661, 0
    %v1671 = vsel %vm130, %v1662, 0
    %v1674 = vsel %vm130, %v1663, 0
    %1676 = vmatpush.msra.mxu0 0.0
    %1677 = vmatpush.msra.mxu0 0.0
    %1678 = vmatpush.msra.mxu0 0.0
    %1679 = vmatpush.msra.mxu0 0.0
    %1680 = vmatpush.msra.mxu0 0.0
    %1681 = vmatpush.msra.mxu0 0.0
    %1682 = vmatpush.msra.mxu0 0.0
    %1683 = vmatpush.msra.mxu0 0.0
    %1684 = vmatpush.msra.mxu0 %v1046
    %1685 = vmatpush.msra.mxu0 %v1045
    %1686 = vmatpush.msra.mxu0 %v1044
    %1687 = vmatpush.msra.mxu0 %v1043
    %1688 = vmatpush.msra.mxu0 %v1042
    %1689 = vmatpush.msra.mxu0 %v1041
    %1690 = vmatpush.msra.mxu0 %v1040
    %1691 = vmatpush.msra.mxu0 %v1039
    %1692 = vmatmul.f32.gmra.mxu0 %v1665
    %v1693 = vpop.f32.mrf.mxu0
    %v1694 = vadd.f32 0.0, %v1693
    %1695 = vmatmul.f32.gmra.mxu0 %v1668
    %v1696 = vpop.f32.mrf.mxu0
    %v1697 = vadd.f32 0.0, %v1696
    %1698 = vmatmul.f32.gmra.mxu0 %v1671
    %v1699 = vpop.f32.mrf.mxu0
    %v1700 = vadd.f32 0.0, %v1699
    %1701 = vmatmul.f32.gmra.mxu0 %v1674
    %v1702 = vpop.f32.mrf.mxu0
    %v1703 = vadd.f32 0.0, %v1702
    %1704 = vdwg.mxu0
    %v1705 = vadd.f32 %v1656, %v1694
    %v1706 = vadd.f32 %v1657, %v1697
    %v1707 = vadd.f32 %v1658, %v1700
    %v1708 = vadd.f32 %v1659, %v1703
    %v1709 = vld [vmem:[%s703 + $0x8] sm:$0xff]
    %v1710 = vld [vmem:[%s703 + $0x10] sm:$0xff]
    %v1711 = vld [vmem:[%s703 + $0x18] sm:$0xff]
    %v1712 = vld [vmem:[%s703 + $0x20] sm:$0xff]
    %v1714 = vsel %vm130, %v1709, 0
    %v1717 = vsel %vm130, %v1710, 0
    %v1720 = vsel %vm130, %v1711, 0
    %v1723 = vsel %vm130, %v1712, 0
    %1725 = vmatpush.msra.mxu0 0.0
    %1726 = vmatpush.msra.mxu0 0.0
    %1727 = vmatpush.msra.mxu0 0.0
    %1728 = vmatpush.msra.mxu0 0.0
    %1729 = vmatpush.msra.mxu0 0.0
    %1730 = vmatpush.msra.mxu0 0.0
    %1731 = vmatpush.msra.mxu0 0.0
    %1732 = vmatpush.msra.mxu0 0.0
    %1733 = vmatpush.msra.mxu0 %v1103
    %1734 = vmatpush.msra.mxu0 %v1102
    %1735 = vmatpush.msra.mxu0 %v1101
    %1736 = vmatpush.msra.mxu0 %v1100
    %1737 = vmatpush.msra.mxu0 %v1099
    %1738 = vmatpush.msra.mxu0 %v1098
    %1739 = vmatpush.msra.mxu0 %v1097
    %1740 = vmatpush.msra.mxu0 %v1096
    %1741 = vmatmul.f32.gmra.mxu0 %v1714
    %v1742 = vpop.f32.mrf.mxu0
    %v1743 = vadd.f32 0.0, %v1742
    %1744 = vmatmul.f32.gmra.mxu0 %v1717
    %v1745 = vpop.f32.mrf.mxu0
    %v1746 = vadd.f32 0.0, %v1745
    %1747 = vmatmul.f32.gmra.mxu0 %v1720
    %v1748 = vpop.f32.mrf.mxu0
    %v1749 = vadd.f32 0.0, %v1748
    %1750 = vmatmul.f32.gmra.mxu0 %v1723
    %v1751 = vpop.f32.mrf.mxu0
    %v1752 = vadd.f32 0.0, %v1751
    %1753 = vdwg.mxu0
    %v1754 = vadd.f32 %v1705, %v1743
    %v1755 = vadd.f32 %v1706, %v1746
    %v1756 = vadd.f32 %v1707, %v1749
    %v1757 = vadd.f32 %v1708, %v1752
    %v1758 = vld [vmem:[%s703 + $0x10] sm:$0xff]
    %v1759 = vld [vmem:[%s703 + $0x18] sm:$0xff]
    %v1760 = vld [vmem:[%s703 + $0x20] sm:$0xff]
    %v1761 = vld [vmem:[%s703 + $0x28] sm:$0xff]
    %v1763 = vsel %vm130, %v1758, 0
    %v1766 = vsel %vm130, %v1759, 0
    %v1769 = vsel %vm130, %v1760, 0
    %v1772 = vsel %vm130, %v1761, 0
    %1774 = vmatpush.msra.mxu0 0.0
    %1775 = vmatpush.msra.mxu0 0.0
    %1776 = vmatpush.msra.mxu0 0.0
    %1777 = vmatpush.msra.mxu0 0.0
    %1778 = vmatpush.msra.mxu0 0.0
    %1779 = vmatpush.msra.mxu0 0.0
    %1780 = vmatpush.msra.mxu0 0.0
    %1781 = vmatpush.msra.mxu0 0.0
    %1782 = vmatpush.msra.mxu0 %v1160
    %1783 = vmatpush.msra.mxu0 %v1159
    %1784 = vmatpush.msra.mxu0 %v1158
    %1785 = vmatpush.msra.mxu0 %v1157
    %1786 = vmatpush.msra.mxu0 %v1156
    %1787 = vmatpush.msra.mxu0 %v1155
    %1788 = vmatpush.msra.mxu0 %v1154
    %1789 = vmatpush.msra.mxu0 %v1153
    %1790 = vmatmul.f32.gmra.mxu0 %v1763
    %v1791 = vpop.f32.mrf.mxu0
    %v1792 = vadd.f32 0.0, %v1791
    %1793 = vmatmul.f32.gmra.mxu0 %v1766
    %v1794 = vpop.f32.mrf.mxu0
    %v1795 = vadd.f32 0.0, %v1794
    %1796 = vmatmul.f32.gmra.mxu0 %v1769
    %v1797 = vpop.f32.mrf.mxu0
    %v1798 = vadd.f32 0.0, %v1797
    %1799 = vmatmul.f32.gmra.mxu0 %v1772
    %v1800 = vpop.f32.mrf.mxu0
    %v1801 = vadd.f32 0.0, %v1800
    %1802 = vdwg.mxu0
    %v1803 = vadd.f32 %v1754, %v1792
    %v1804 = vadd.f32 %v1755, %v1795
    %v1805 = vadd.f32 %v1756, %v1798
    %v1806 = vadd.f32 %v1757, %v1801
    %1811 = vrot.lane.b32.xlu0 %v1803, 96
    %v1812 = vpop.permute.xlu0 %1811
    %1813 = vrot.lane.b32.xlu0 %v1804, 96
    %v1814 = vpop.permute.xlu0 %1813
    %1815 = vrot.lane.b32.xlu0 %v1805, 96
    %v1816 = vpop.permute.xlu0 %1815
    %1817 = vrot.lane.b32.xlu0 %v1806, 96
    %v1818 = vpop.permute.xlu0 %1817
    %v1823 = vmax.f32 %v1803, %v1812
    %v1824 = vmax.f32 %v1804, %v1814
    %v1825 = vmax.f32 %v1805, %v1816
    %v1826 = vmax.f32 %v1806, %v1818
    %1831 = vrot.lane.b32.xlu0 %v1823, 64
    %v1832 = vpop.permute.xlu0 %1831
    %1833 = vrot.lane.b32.xlu0 %v1824, 64
    %v1834 = vpop.permute.xlu0 %1833
    %1835 = vrot.lane.b32.xlu0 %v1825, 64
    %v1836 = vpop.permute.xlu0 %1835
    %1837 = vrot.lane.b32.xlu0 %v1826, 64
    %v1838 = vpop.permute.xlu0 %1837
    %v1843 = vmax.f32 %v1823, %v1832
    %v1844 = vmax.f32 %v1824, %v1834
    %v1845 = vmax.f32 %v1825, %v1836
    %v1846 = vmax.f32 %v1826, %v1838
    %v1847 = vadd.f32 %v1843, %v1248
    %v1848 = vadd.f32 %v1844, %v1248
    %v1849 = vadd.f32 %v1845, %v1248
    %v1850 = vadd.f32 %v1846, %v1248
    %v1851 = vmax.f32 %v1847, 0.0
    %v1852 = vmax.f32 %v1848, 0.0
    %v1853 = vmax.f32 %v1849, 0.0
    %v1854 = vmax.f32 %v1850, 0.0
    %s1855 = scalar_lea.vmem [#allocation7], 256
    %v1856 = vld [vmem:[%s1855] sm:$0xff]
    %v1857 = vld [vmem:[%s1855 + $0x8] sm:$0xff]
    %v1858 = vld [vmem:[%s1855 + $0x10] sm:$0xff]
    %v1859 = vld [vmem:[%s1855 + $0x18] sm:$0xff]
    %v1860 = vld [vmem:[%s1855 + $0x20] sm:$0xff]
    %v1861 = vld [vmem:[%s1855 + $0x28] sm:$0xff]
    %v1862 = vld [vmem:[%s1855 + $0x30] sm:$0xff]
    %v1863 = vld [vmem:[%s1855 + $0x38] sm:$0xff]
    %v1865 = vsel %vm1275, %v1851, 0
    %1867 = vmatpush.msra.mxu0 0.0
    %1868 = vmatpush.msra.mxu0 0.0
    %1869 = vmatpush.msra.mxu0 0.0
    %1870 = vmatpush.msra.mxu0 0.0
    %1871 = vmatpush.msra.mxu0 0.0
    %1872 = vmatpush.msra.mxu0 0.0
    %1873 = vmatpush.msra.mxu0 0.0
    %1874 = vmatpush.msra.mxu0 0.0
    %1875 = vmatpush.msra.mxu0 0.0
    %1876 = vmatpush.msra.mxu0 0.0
    %1877 = vmatpush.msra.mxu0 0.0
    %1878 = vmatpush.msra.mxu0 0.0
    %1879 = vmatpush.msra.mxu0 %v1862
    %1880 = vmatpush.msra.mxu0 %v1860
    %1881 = vmatpush.msra.mxu0 %v1858
    %1882 = vmatpush.msra.mxu0 %v1856
    %1883 = vmatmul.f32.gmra.mxu0 %v1865
    %v1884 = vpop.f32.mrf.mxu0
    %v1885 = vadd.f32 0.0, %v1884
    %1886 = vdwg.mxu0
    %1887 = vmatpush.msra.mxu0 0.0
    %1888 = vmatpush.msra.mxu0 0.0
    %1889 = vmatpush.msra.mxu0 0.0
    %1890 = vmatpush.msra.mxu0 0.0
    %1891 = vmatpush.msra.mxu0 0.0
    %1892 = vmatpush.msra.mxu0 0.0
    %1893 = vmatpush.msra.mxu0 0.0
    %1894 = vmatpush.msra.mxu0 0.0
    %1895 = vmatpush.msra.mxu0 0.0
    %1896 = vmatpush.msra.mxu0 0.0
    %1897 = vmatpush.msra.mxu0 0.0
    %1898 = vmatpush.msra.mxu0 0.0
    %1899 = vmatpush.msra.mxu0 %v1863
    %1900 = vmatpush.msra.mxu0 %v1861
    %1901 = vmatpush.msra.mxu0 %v1859
    %1902 = vmatpush.msra.mxu0 %v1857
    %1903 = vmatmul.f32.gmra.mxu0 %v1865
    %v1904 = vpop.f32.mrf.mxu0
    %v1905 = vadd.f32 0.0, %v1904
    %1906 = vdwg.mxu0
    %v1907 = vadd.f32 %v1468, %v1885
    %v1908 = vadd.f32 %v1469, %v1905
    %s1909 = scalar_lea.vmem [#allocation7], 320
    %v1910 = vld [vmem:[%s1909] sm:$0xff]
    %v1911 = vld [vmem:[%s1909 + $0x8] sm:$0xff]
    %v1912 = vld [vmem:[%s1909 + $0x10] sm:$0xff]
    %v1913 = vld [vmem:[%s1909 + $0x18] sm:$0xff]
    %v1914 = vld [vmem:[%s1909 + $0x20] sm:$0xff]
    %v1915 = vld [vmem:[%s1909 + $0x28] sm:$0xff]
    %v1916 = vld [vmem:[%s1909 + $0x30] sm:$0xff]
    %v1917 = vld [vmem:[%s1909 + $0x38] sm:$0xff]
    %v1919 = vsel %vm1275, %v1852, 0
    %1921 = vmatpush.msra.mxu0 0.0
    %1922 = vmatpush.msra.mxu0 0.0
    %1923 = vmatpush.msra.mxu0 0.0
    %1924 = vmatpush.msra.mxu0 0.0
    %1925 = vmatpush.msra.mxu0 0.0
    %1926 = vmatpush.msra.mxu0 0.0
    %1927 = vmatpush.msra.mxu0 0.0
    %1928 = vmatpush.msra.mxu0 0.0
    %1929 = vmatpush.msra.mxu0 0.0
    %1930 = vmatpush.msra.mxu0 0.0
    %1931 = vmatpush.msra.mxu0 0.0
    %1932 = vmatpush.msra.mxu0 0.0
    %1933 = vmatpush.msra.mxu0 %v1916
    %1934 = vmatpush.msra.mxu0 %v1914
    %1935 = vmatpush.msra.mxu0 %v1912
    %1936 = vmatpush.msra.mxu0 %v1910
    %1937 = vmatmul.f32.gmra.mxu0 %v1919
    %v1938 = vpop.f32.mrf.mxu0
    %v1939 = vadd.f32 0.0, %v1938
    %1940 = vdwg.mxu0
    %1941 = vmatpush.msra.mxu0 0.0
    %1942 = vmatpush.msra.mxu0 0.0
    %1943 = vmatpush.msra.mxu0 0.0
    %1944 = vmatpush.msra.mxu0 0.0
    %1945 = vmatpush.msra.mxu0 0.0
    %1946 = vmatpush.msra.mxu0 0.0
    %1947 = vmatpush.msra.mxu0 0.0
    %1948 = vmatpush.msra.mxu0 0.0
    %1949 = vmatpush.msra.mxu0 0.0
    %1950 = vmatpush.msra.mxu0 0.0
    %1951 = vmatpush.msra.mxu0 0.0
    %1952 = vmatpush.msra.mxu0 0.0
    %1953 = vmatpush.msra.mxu0 %v1917
    %1954 = vmatpush.msra.mxu0 %v1915
    %1955 = vmatpush.msra.mxu0 %v1913
    %1956 = vmatpush.msra.mxu0 %v1911
    %1957 = vmatmul.f32.gmra.mxu0 %v1919
    %v1958 = vpop.f32.mrf.mxu0
    %v1959 = vadd.f32 0.0, %v1958
    %1960 = vdwg.mxu0
    %v1961 = vadd.f32 %v1907, %v1939
    %v1962 = vadd.f32 %v1908, %v1959
    %s1963 = scalar_lea.vmem [#allocation7], 384
    %v1964 = vld [vmem:[%s1963] sm:$0xff]
    %v1965 = vld [vmem:[%s1963 + $0x8] sm:$0xff]
    %v1966 = vld [vmem:[%s1963 + $0x10] sm:$0xff]
    %v1967 = vld [vmem:[%s1963 + $0x18] sm:$0xff]
    %v1968 = vld [vmem:[%s1963 + $0x20] sm:$0xff]
    %v1969 = vld [vmem:[%s1963 + $0x28] sm:$0xff]
    %v1970 = vld [vmem:[%s1963 + $0x30] sm:$0xff]
    %v1971 = vld [vmem:[%s1963 + $0x38] sm:$0xff]
    %v1973 = vsel %vm1275, %v1853, 0
    %1975 = vmatpush.msra.mxu0 0.0
    %1976 = vmatpush.msra.mxu0 0.0
    %1977 = vmatpush.msra.mxu0 0.0
    %1978 = vmatpush.msra.mxu0 0.0
    %1979 = vmatpush.msra.mxu0 0.0
    %1980 = vmatpush.msra.mxu0 0.0
    %1981 = vmatpush.msra.mxu0 0.0
    %1982 = vmatpush.msra.mxu0 0.0
    %1983 = vmatpush.msra.mxu0 0.0
    %1984 = vmatpush.msra.mxu0 0.0
    %1985 = vmatpush.msra.mxu0 0.0
    %1986 = vmatpush.msra.mxu0 0.0
    %1987 = vmatpush.msra.mxu0 %v1970
    %1988 = vmatpush.msra.mxu0 %v1968
    %1989 = vmatpush.msra.mxu0 %v1966
    %1990 = vmatpush.msra.mxu0 %v1964
    %1991 = vmatmul.f32.gmra.mxu0 %v1973
    %v1992 = vpop.f32.mrf.mxu0
    %v1993 = vadd.f32 0.0, %v1992
    %1994 = vdwg.mxu0
    %1995 = vmatpush.msra.mxu0 0.0
    %1996 = vmatpush.msra.mxu0 0.0
    %1997 = vmatpush.msra.mxu0 0.0
    %1998 = vmatpush.msra.mxu0 0.0
    %1999 = vmatpush.msra.mxu0 0.0
    %2000 = vmatpush.msra.mxu0 0.0
    %2001 = vmatpush.msra.mxu0 0.0
    %2002 = vmatpush.msra.mxu0 0.0
    %2003 = vmatpush.msra.mxu0 0.0
    %2004 = vmatpush.msra.mxu0 0.0
    %2005 = vmatpush.msra.mxu0 0.0
    %2006 = vmatpush.msra.mxu0 0.0
    %2007 = vmatpush.msra.mxu0 %v1971
    %2008 = vmatpush.msra.mxu0 %v1969
    %2009 = vmatpush.msra.mxu0 %v1967
    %2010 = vmatpush.msra.mxu0 %v1965
    %2011 = vmatmul.f32.gmra.mxu0 %v1973
    %v2012 = vpop.f32.mrf.mxu0
    %v2013 = vadd.f32 0.0, %v2012
    %2014 = vdwg.mxu0
    %v2015 = vadd.f32 %v1961, %v1993
    %v2016 = vadd.f32 %v1962, %v2013
    %s2017 = scalar_lea.vmem [#allocation7], 448
    %v2018 = vld [vmem:[%s2017] sm:$0xff]
    %v2019 = vld [vmem:[%s2017 + $0x8] sm:$0xff]
    %v2020 = vld [vmem:[%s2017 + $0x10] sm:$0xff]
    %v2021 = vld [vmem:[%s2017 + $0x18] sm:$0xff]
    %v2022 = vld [vmem:[%s2017 + $0x20] sm:$0xff]
    %v2023 = vld [vmem:[%s2017 + $0x28] sm:$0xff]
    %v2024 = vld [vmem:[%s2017 + $0x30] sm:$0xff]
    %v2025 = vld [vmem:[%s2017 + $0x38] sm:$0xff]
    %v2027 = vsel %vm1275, %v1854, 0
    %2029 = vmatpush.msra.mxu0 0.0
    %2030 = vmatpush.msra.mxu0 0.0
    %2031 = vmatpush.msra.mxu0 0.0
    %2032 = vmatpush.msra.mxu0 0.0
    %2033 = vmatpush.msra.mxu0 0.0
    %2034 = vmatpush.msra.mxu0 0.0
    %2035 = vmatpush.msra.mxu0 0.0
    %2036 = vmatpush.msra.mxu0 0.0
    %2037 = vmatpush.msra.mxu0 0.0
    %2038 = vmatpush.msra.mxu0 0.0
    %2039 = vmatpush.msra.mxu0 0.0
    %2040 = vmatpush.msra.mxu0 0.0
    %2041 = vmatpush.msra.mxu0 %v2024
    %2042 = vmatpush.msra.mxu0 %v2022
    %2043 = vmatpush.msra.mxu0 %v2020
    %2044 = vmatpush.msra.mxu0 %v2018
    %2045 = vmatmul.f32.gmra.mxu0 %v2027
    %v2046 = vpop.f32.mrf.mxu0
    %v2047 = vadd.f32 0.0, %v2046
    %2048 = vdwg.mxu0
    %2049 = vmatpush.msra.mxu0 0.0
    %2050 = vmatpush.msra.mxu0 0.0
    %2051 = vmatpush.msra.mxu0 0.0
    %2052 = vmatpush.msra.mxu0 0.0
    %2053 = vmatpush.msra.mxu0 0.0
    %2054 = vmatpush.msra.mxu0 0.0
    %2055 = vmatpush.msra.mxu0 0.0
    %2056 = vmatpush.msra.mxu0 0.0
    %2057 = vmatpush.msra.mxu0 0.0
    %2058 = vmatpush.msra.mxu0 0.0
    %2059 = vmatpush.msra.mxu0 0.0
    %2060 = vmatpush.msra.mxu0 0.0
    %2061 = vmatpush.msra.mxu0 %v2025
    %2062 = vmatpush.msra.mxu0 %v2023
    %2063 = vmatpush.msra.mxu0 %v2021
    %2064 = vmatpush.msra.mxu0 %v2019
    %2065 = vmatmul.f32.gmra.mxu0 %v2027
    %v2066 = vpop.f32.mrf.mxu0
    %v2067 = vadd.f32 0.0, %v2066
    %2068 = vdwg.mxu0
    %v2069 = vadd.f32 %v2015, %v2047
    %v2070 = vadd.f32 %v2016, %v2067
    %2071 = vmatpush.msra.mxu0 0.0
    %2072 = vmatpush.msra.mxu0 0.0
    %2073 = vmatpush.msra.mxu0 0.0
    %2074 = vmatpush.msra.mxu0 0.0
    %2075 = vmatpush.msra.mxu0 0.0
    %2076 = vmatpush.msra.mxu0 0.0
    %2077 = vmatpush.msra.mxu0 0.0
    %2078 = vmatpush.msra.mxu0 0.0
    %2079 = vmatpush.msra.mxu0 %v733
    %2080 = vmatpush.msra.mxu0 %v732
    %2081 = vmatpush.msra.mxu0 %v731
    %2082 = vmatpush.msra.mxu0 %v730
    %2083 = vmatpush.msra.mxu0 %v729
    %2084 = vmatpush.msra.mxu0 %v728
    %2085 = vmatpush.msra.mxu0 %v727
    %2086 = vmatpush.msra.mxu0 %v726
    %2087 = vmatmul.f32.gmra.mxu0 %v1105
    %v2088 = vpop.f32.mrf.mxu0
    %v2089 = vadd.f32 0.0, %v2088
    %2090 = vmatmul.f32.gmra.mxu0 %v1108
    %v2091 = vpop.f32.mrf.mxu0
    %v2092 = vadd.f32 0.0, %v2091
    %2093 = vmatmul.f32.gmra.mxu0 %v1111
    %v2094 = vpop.f32.mrf.mxu0
    %v2095 = vadd.f32 0.0, %v2094
    %2096 = vmatmul.f32.gmra.mxu0 %v1114
    %v2097 = vpop.f32.mrf.mxu0
    %v2098 = vadd.f32 0.0, %v2097
    %2099 = vdwg.mxu0
    %2100 = vmatpush.msra.mxu0 0.0
    %2101 = vmatpush.msra.mxu0 0.0
    %2102 = vmatpush.msra.mxu0 0.0
    %2103 = vmatpush.msra.mxu0 0.0
    %2104 = vmatpush.msra.mxu0 0.0
    %2105 = vmatpush.msra.mxu0 0.0
    %2106 = vmatpush.msra.mxu0 0.0
    %2107 = vmatpush.msra.mxu0 0.0
    %2108 = vmatpush.msra.mxu0 %v724
    %2109 = vmatpush.msra.mxu0 %v723
    %2110 = vmatpush.msra.mxu0 %v722
    %2111 = vmatpush.msra.mxu0 %v721
    %2112 = vmatpush.msra.mxu0 %v720
    %2113 = vmatpush.msra.mxu0 %v719
    %2114 = vmatpush.msra.mxu0 %v718
    %2115 = vmatpush.msra.mxu0 %v717
    %2116 = vmatmul.f32.gmra.mxu0 %v1048
    %v2117 = vpop.f32.mrf.mxu0
    %v2118 = vadd.f32 %v2089, %v2117
    %2119 = vmatmul.f32.gmra.mxu0 %v1051
    %v2120 = vpop.f32.mrf.mxu0
    %v2121 = vadd.f32 %v2092, %v2120
    %2122 = vmatmul.f32.gmra.mxu0 %v1054
    %v2123 = vpop.f32.mrf.mxu0
    %v2124 = vadd.f32 %v2095, %v2123
    %2125 = vmatmul.f32.gmra.mxu0 %v1057
    %v2126 = vpop.f32.mrf.mxu0
    %v2127 = vadd.f32 %v2098, %v2126
    %2128 = vdwg.mxu0
    %2129 = vmatpush.msra.mxu0 0.0
    %2130 = vmatpush.msra.mxu0 0.0
    %2131 = vmatpush.msra.mxu0 0.0
    %2132 = vmatpush.msra.mxu0 0.0
    %2133 = vmatpush.msra.mxu0 0.0
    %2134 = vmatpush.msra.mxu0 0.0
    %2135 = vmatpush.msra.mxu0 0.0
    %2136 = vmatpush.msra.mxu0 0.0
    %2137 = vmatpush.msra.mxu0 %v818
    %2138 = vmatpush.msra.mxu0 %v817
    %2139 = vmatpush.msra.mxu0 %v816
    %2140 = vmatpush.msra.mxu0 %v815
    %2141 = vmatpush.msra.mxu0 %v814
    %2142 = vmatpush.msra.mxu0 %v813
    %2143 = vmatpush.msra.mxu0 %v812
    %2144 = vmatpush.msra.mxu0 %v811
    %2145 = vmatmul.f32.gmra.mxu0 %v1162
    %v2146 = vpop.f32.mrf.mxu0
    %v2147 = vadd.f32 0.0, %v2146
    %2148 = vmatmul.f32.gmra.mxu0 %v1165
    %v2149 = vpop.f32.mrf.mxu0
    %v2150 = vadd.f32 0.0, %v2149
    %2151 = vmatmul.f32.gmra.mxu0 %v1168
    %v2152 = vpop.f32.mrf.mxu0
    %v2153 = vadd.f32 0.0, %v2152
    %2154 = vmatmul.f32.gmra.mxu0 %v1171
    %v2155 = vpop.f32.mrf.mxu0
    %v2156 = vadd.f32 0.0, %v2155
    %2157 = vdwg.mxu0
    %v2158 = vadd.f32 %v2118, %v2147
    %v2159 = vadd.f32 %v2121, %v2150
    %v2160 = vadd.f32 %v2124, %v2153
    %v2161 = vadd.f32 %v2127, %v2156
    %2162 = vmatpush.msra.mxu0 0.0
    %2163 = vmatpush.msra.mxu0 0.0
    %2164 = vmatpush.msra.mxu0 0.0
    %2165 = vmatpush.msra.mxu0 0.0
    %2166 = vmatpush.msra.mxu0 0.0
    %2167 = vmatpush.msra.mxu0 0.0
    %2168 = vmatpush.msra.mxu0 0.0
    %2169 = vmatpush.msra.mxu0 0.0
    %2170 = vmatpush.msra.mxu0 %v875
    %2171 = vmatpush.msra.mxu0 %v874
    %2172 = vmatpush.msra.mxu0 %v873
    %2173 = vmatpush.msra.mxu0 %v872
    %2174 = vmatpush.msra.mxu0 %v871
    %2175 = vmatpush.msra.mxu0 %v870
    %2176 = vmatpush.msra.mxu0 %v869
    %2177 = vmatpush.msra.mxu0 %v868
    %2178 = vmatmul.f32.gmra.mxu0 %v1665
    %v2179 = vpop.f32.mrf.mxu0
    %v2180 = vadd.f32 0.0, %v2179
    %2181 = vmatmul.f32.gmra.mxu0 %v1668
    %v2182 = vpop.f32.mrf.mxu0
    %v2183 = vadd.f32 0.0, %v2182
    %2184 = vmatmul.f32.gmra.mxu0 %v1671
    %v2185 = vpop.f32.mrf.mxu0
    %v2186 = vadd.f32 0.0, %v2185
    %2187 = vmatmul.f32.gmra.mxu0 %v1674
    %v2188 = vpop.f32.mrf.mxu0
    %v2189 = vadd.f32 0.0, %v2188
    %2190 = vdwg.mxu0
    %v2191 = vadd.f32 %v2158, %v2180
    %v2192 = vadd.f32 %v2159, %v2183
    %v2193 = vadd.f32 %v2160, %v2186
    %v2194 = vadd.f32 %v2161, %v2189
    %2195 = vmatpush.msra.mxu0 0.0
    %2196 = vmatpush.msra.mxu0 0.0
    %2197 = vmatpush.msra.mxu0 0.0
    %2198 = vmatpush.msra.mxu0 0.0
    %2199 = vmatpush.msra.mxu0 0.0
    %2200 = vmatpush.msra.mxu0 0.0
    %2201 = vmatpush.msra.mxu0 0.0
    %2202 = vmatpush.msra.mxu0 0.0
    %2203 = vmatpush.msra.mxu0 %v932
    %2204 = vmatpush.msra.mxu0 %v931
    %2205 = vmatpush.msra.mxu0 %v930
    %2206 = vmatpush.msra.mxu0 %v929
    %2207 = vmatpush.msra.mxu0 %v928
    %2208 = vmatpush.msra.mxu0 %v927
    %2209 = vmatpush.msra.mxu0 %v926
    %2210 = vmatpush.msra.mxu0 %v925
    %2211 = vmatmul.f32.gmra.mxu0 %v1714
    %v2212 = vpop.f32.mrf.mxu0
    %v2213 = vadd.f32 0.0, %v2212
    %2214 = vmatmul.f32.gmra.mxu0 %v1717
    %v2215 = vpop.f32.mrf.mxu0
    %v2216 = vadd.f32 0.0, %v2215
    %2217 = vmatmul.f32.gmra.mxu0 %v1720
    %v2218 = vpop.f32.mrf.mxu0
    %v2219 = vadd.f32 0.0, %v2218
    %2220 = vmatmul.f32.gmra.mxu0 %v1723
    %v2221 = vpop.f32.mrf.mxu0
    %v2222 = vadd.f32 0.0, %v2221
    %2223 = vdwg.mxu0
    %v2224 = vadd.f32 %v2191, %v2213
    %v2225 = vadd.f32 %v2192, %v2216
    %v2226 = vadd.f32 %v2193, %v2219
    %v2227 = vadd.f32 %v2194, %v2222
    %2228 = vmatpush.msra.mxu0 0.0
    %2229 = vmatpush.msra.mxu0 0.0
    %2230 = vmatpush.msra.mxu0 0.0
    %2231 = vmatpush.msra.mxu0 0.0
    %2232 = vmatpush.msra.mxu0 0.0
    %2233 = vmatpush.msra.mxu0 0.0
    %2234 = vmatpush.msra.mxu0 0.0
    %2235 = vmatpush.msra.mxu0 0.0
    %2236 = vmatpush.msra.mxu0 %v989
    %2237 = vmatpush.msra.mxu0 %v988
    %2238 = vmatpush.msra.mxu0 %v987
    %2239 = vmatpush.msra.mxu0 %v986
    %2240 = vmatpush.msra.mxu0 %v985
    %2241 = vmatpush.msra.mxu0 %v984
    %2242 = vmatpush.msra.mxu0 %v983
    %2243 = vmatpush.msra.mxu0 %v982
    %2244 = vmatmul.f32.gmra.mxu0 %v1763
    %v2245 = vpop.f32.mrf.mxu0
    %v2246 = vadd.f32 0.0, %v2245
    %2247 = vmatmul.f32.gmra.mxu0 %v1766
    %v2248 = vpop.f32.mrf.mxu0
    %v2249 = vadd.f32 0.0, %v2248
    %2250 = vmatmul.f32.gmra.mxu0 %v1769
    %v2251 = vpop.f32.mrf.mxu0
    %v2252 = vadd.f32 0.0, %v2251
    %2253 = vmatmul.f32.gmra.mxu0 %v1772
    %v2254 = vpop.f32.mrf.mxu0
    %v2255 = vadd.f32 0.0, %v2254
    %2256 = vdwg.mxu0
    %v2257 = vadd.f32 %v2224, %v2246
    %v2258 = vadd.f32 %v2225, %v2249
    %v2259 = vadd.f32 %v2226, %v2252
    %v2260 = vadd.f32 %v2227, %v2255
    %v2261 = vld [vmem:[%s708] sm:$0xff]
    %v2262 = vld [vmem:[%s708 + $0x8] sm:$0xff]
    %v2263 = vld [vmem:[%s708 + $0x10] sm:$0xff]
    %v2264 = vld [vmem:[%s708 + $0x18] sm:$0xff]
    %v2266 = vsel %vm130, %v2261, 0
    %v2269 = vsel %vm130, %v2262, 0
    %v2272 = vsel %vm130, %v2263, 0
    %v2275 = vsel %vm130, %v2264, 0
    %2277 = vmatpush.msra.mxu0 0.0
    %2278 = vmatpush.msra.mxu0 0.0
    %2279 = vmatpush.msra.mxu0 0.0
    %2280 = vmatpush.msra.mxu0 0.0
    %2281 = vmatpush.msra.mxu0 0.0
    %2282 = vmatpush.msra.mxu0 0.0
    %2283 = vmatpush.msra.mxu0 0.0
    %2284 = vmatpush.msra.mxu0 0.0
    %2285 = vmatpush.msra.mxu0 %v1046
    %2286 = vmatpush.msra.mxu0 %v1045
    %2287 = vmatpush.msra.mxu0 %v1044
    %2288 = vmatpush.msra.mxu0 %v1043
    %2289 = vmatpush.msra.mxu0 %v1042
    %2290 = vmatpush.msra.mxu0 %v1041
    %2291 = vmatpush.msra.mxu0 %v1040
    %2292 = vmatpush.msra.mxu0 %v1039
    %2293 = vmatmul.f32.gmra.mxu0 %v2266
    %v2294 = vpop.f32.mrf.mxu0
    %v2295 = vadd.f32 0.0, %v2294
    %2296 = vmatmul.f32.gmra.mxu0 %v2269
    %v2297 = vpop.f32.mrf.mxu0
    %v2298 = vadd.f32 0.0, %v2297
    %2299 = vmatmul.f32.gmra.mxu0 %v2272
    %v2300 = vpop.f32.mrf.mxu0
    %v2301 = vadd.f32 0.0, %v2300
    %2302 = vmatmul.f32.gmra.mxu0 %v2275
    %v2303 = vpop.f32.mrf.mxu0
    %v2304 = vadd.f32 0.0, %v2303
    %2305 = vdwg.mxu0
    %v2306 = vadd.f32 %v2257, %v2295
    %v2307 = vadd.f32 %v2258, %v2298
    %v2308 = vadd.f32 %v2259, %v2301
    %v2309 = vadd.f32 %v2260, %v2304
    %v2310 = vld [vmem:[%s708 + $0x8] sm:$0xff]
    %v2311 = vld [vmem:[%s708 + $0x10] sm:$0xff]
    %v2312 = vld [vmem:[%s708 + $0x18] sm:$0xff]
    %v2313 = vld [vmem:[%s708 + $0x20] sm:$0xff]
    %v2315 = vsel %vm130, %v2310, 0
    %v2318 = vsel %vm130, %v2311, 0
    %v2321 = vsel %vm130, %v2312, 0
    %v2324 = vsel %vm130, %v2313, 0
    %2326 = vmatpush.msra.mxu0 0.0
    %2327 = vmatpush.msra.mxu0 0.0
    %2328 = vmatpush.msra.mxu0 0.0
    %2329 = vmatpush.msra.mxu0 0.0
    %2330 = vmatpush.msra.mxu0 0.0
    %2331 = vmatpush.msra.mxu0 0.0
    %2332 = vmatpush.msra.mxu0 0.0
    %2333 = vmatpush.msra.mxu0 0.0
    %2334 = vmatpush.msra.mxu0 %v1103
    %2335 = vmatpush.msra.mxu0 %v1102
    %2336 = vmatpush.msra.mxu0 %v1101
    %2337 = vmatpush.msra.mxu0 %v1100
    %2338 = vmatpush.msra.mxu0 %v1099
    %2339 = vmatpush.msra.mxu0 %v1098
    %2340 = vmatpush.msra.mxu0 %v1097
    %2341 = vmatpush.msra.mxu0 %v1096
    %2342 = vmatmul.f32.gmra.mxu0 %v2315
    %v2343 = vpop.f32.mrf.mxu0
    %v2344 = vadd.f32 0.0, %v2343
    %2345 = vmatmul.f32.gmra.mxu0 %v2318
    %v2346 = vpop.f32.mrf.mxu0
    %v2347 = vadd.f32 0.0, %v2346
    %2348 = vmatmul.f32.gmra.mxu0 %v2321
    %v2349 = vpop.f32.mrf.mxu0
    %v2350 = vadd.f32 0.0, %v2349
    %2351 = vmatmul.f32.gmra.mxu0 %v2324
    %v2352 = vpop.f32.mrf.mxu0
    %v2353 = vadd.f32 0.0, %v2352
    %2354 = vdwg.mxu0
    %v2355 = vadd.f32 %v2306, %v2344
    %v2356 = vadd.f32 %v2307, %v2347
    %v2357 = vadd.f32 %v2308, %v2350
    %v2358 = vadd.f32 %v2309, %v2353
    %v2359 = vld [vmem:[%s708 + $0x10] sm:$0xff]
    %v2360 = vld [vmem:[%s708 + $0x18] sm:$0xff]
    %v2361 = vld [vmem:[%s708 + $0x20] sm:$0xff]
    %v2362 = vld [vmem:[%s708 + $0x28] sm:$0xff]
    %v2364 = vsel %vm130, %v2359, 0
    %v2367 = vsel %vm130, %v2360, 0
    %v2370 = vsel %vm130, %v2361, 0
    %v2373 = vsel %vm130, %v2362, 0
    %2375 = vmatpush.msra.mxu0 0.0
    %2376 = vmatpush.msra.mxu0 0.0
    %2377 = vmatpush.msra.mxu0 0.0
    %2378 = vmatpush.msra.mxu0 0.0
    %2379 = vmatpush.msra.mxu0 0.0
    %2380 = vmatpush.msra.mxu0 0.0
    %2381 = vmatpush.msra.mxu0 0.0
    %2382 = vmatpush.msra.mxu0 0.0
    %2383 = vmatpush.msra.mxu0 %v1160
    %2384 = vmatpush.msra.mxu0 %v1159
    %2385 = vmatpush.msra.mxu0 %v1158
    %2386 = vmatpush.msra.mxu0 %v1157
    %2387 = vmatpush.msra.mxu0 %v1156
    %2388 = vmatpush.msra.mxu0 %v1155
    %2389 = vmatpush.msra.mxu0 %v1154
    %2390 = vmatpush.msra.mxu0 %v1153
    %2391 = vmatmul.f32.gmra.mxu0 %v2364
    %v2392 = vpop.f32.mrf.mxu0
    %v2393 = vadd.f32 0.0, %v2392
    %2394 = vmatmul.f32.gmra.mxu0 %v2367
    %v2395 = vpop.f32.mrf.mxu0
    %v2396 = vadd.f32 0.0, %v2395
    %2397 = vmatmul.f32.gmra.mxu0 %v2370
    %v2398 = vpop.f32.mrf.mxu0
    %v2399 = vadd.f32 0.0, %v2398
    %2400 = vmatmul.f32.gmra.mxu0 %v2373
    %v2401 = vpop.f32.mrf.mxu0
    %v2402 = vadd.f32 0.0, %v2401
    %2403 = vdwg.mxu0
    %v2404 = vadd.f32 %v2355, %v2393
    %v2405 = vadd.f32 %v2356, %v2396
    %v2406 = vadd.f32 %v2357, %v2399
    %v2407 = vadd.f32 %v2358, %v2402
    %2412 = vrot.lane.b32.xlu0 %v2404, 96
    %v2413 = vpop.permute.xlu0 %2412
    %2414 = vrot.lane.b32.xlu0 %v2405, 96
    %v2415 = vpop.permute.xlu0 %2414
    %2416 = vrot.lane.b32.xlu0 %v2406, 96
    %v2417 = vpop.permute.xlu0 %2416
    %2418 = vrot.lane.b32.xlu0 %v2407, 96
    %v2419 = vpop.permute.xlu0 %2418
    %v2424 = vmax.f32 %v2404, %v2413
    %v2425 = vmax.f32 %v2405, %v2415
    %v2426 = vmax.f32 %v2406, %v2417
    %v2427 = vmax.f32 %v2407, %v2419
    %2432 = vrot.lane.b32.xlu0 %v2424, 64
    %v2433 = vpop.permute.xlu0 %2432
    %2434 = vrot.lane.b32.xlu0 %v2425, 64
    %v2435 = vpop.permute.xlu0 %2434
    %2436 = vrot.lane.b32.xlu0 %v2426, 64
    %v2437 = vpop.permute.xlu0 %2436
    %2438 = vrot.lane.b32.xlu0 %v2427, 64
    %v2439 = vpop.permute.xlu0 %2438
    %v2444 = vmax.f32 %v2424, %v2433
    %v2445 = vmax.f32 %v2425, %v2435
    %v2446 = vmax.f32 %v2426, %v2437
    %v2447 = vmax.f32 %v2427, %v2439
    %v2448 = vadd.f32 %v2444, %v1248
    %v2449 = vadd.f32 %v2445, %v1248
    %v2450 = vadd.f32 %v2446, %v1248
    %v2451 = vadd.f32 %v2447, %v1248
    %v2452 = vmax.f32 %v2448, 0.0
    %v2453 = vmax.f32 %v2449, 0.0
    %v2454 = vmax.f32 %v2450, 0.0
    %v2455 = vmax.f32 %v2451, 0.0
    %s2456 = scalar_lea.vmem [#allocation7], 512
    %v2457 = vld [vmem:[%s2456] sm:$0xff]
    %v2458 = vld [vmem:[%s2456 + $0x8] sm:$0xff]
    %v2459 = vld [vmem:[%s2456 + $0x10] sm:$0xff]
    %v2460 = vld [vmem:[%s2456 + $0x18] sm:$0xff]
    %v2461 = vld [vmem:[%s2456 + $0x20] sm:$0xff]
    %v2462 = vld [vmem:[%s2456 + $0x28] sm:$0xff]
    %v2463 = vld [vmem:[%s2456 + $0x30] sm:$0xff]
    %v2464 = vld [vmem:[%s2456 + $0x38] sm:$0xff]
    %v2466 = vsel %vm1275, %v2452, 0
    %2468 = vmatpush.msra.mxu0 0.0
    %2469 = vmatpush.msra.mxu0 0.0
    %2470 = vmatpush.msra.mxu0 0.0
    %2471 = vmatpush.msra.mxu0 0.0
    %2472 = vmatpush.msra.mxu0 0.0
    %2473 = vmatpush.msra.mxu0 0.0
    %2474 = vmatpush.msra.mxu0 0.0
    %2475 = vmatpush.msra.mxu0 0.0
    %2476 = vmatpush.msra.mxu0 0.0
    %2477 = vmatpush.msra.mxu0 0.0
    %2478 = vmatpush.msra.mxu0 0.0
    %2479 = vmatpush.msra.mxu0 0.0
    %2480 = vmatpush.msra.mxu0 %v2463
    %2481 = vmatpush.msra.mxu0 %v2461
    %2482 = vmatpush.msra.mxu0 %v2459
    %2483 = vmatpush.msra.mxu0 %v2457
    %2484 = vmatmul.f32.gmra.mxu0 %v2466
    %v2485 = vpop.f32.mrf.mxu0
    %v2486 = vadd.f32 0.0, %v2485
    %2487 = vdwg.mxu0
    %2488 = vmatpush.msra.mxu0 0.0
    %2489 = vmatpush.msra.mxu0 0.0
    %2490 = vmatpush.msra.mxu0 0.0
    %2491 = vmatpush.msra.mxu0 0.0
    %2492 = vmatpush.msra.mxu0 0.0
    %2493 = vmatpush.msra.mxu0 0.0
    %2494 = vmatpush.msra.mxu0 0.0
    %2495 = vmatpush.msra.mxu0 0.0
    %2496 = vmatpush.msra.mxu0 0.0
    %2497 = vmatpush.msra.mxu0 0.0
    %2498 = vmatpush.msra.mxu0 0.0
    %2499 = vmatpush.msra.mxu0 0.0
    %2500 = vmatpush.msra.mxu0 %v2464
    %2501 = vmatpush.msra.mxu0 %v2462
    %2502 = vmatpush.msra.mxu0 %v2460
    %2503 = vmatpush.msra.mxu0 %v2458
    %2504 = vmatmul.f32.gmra.mxu0 %v2466
    %v2505 = vpop.f32.mrf.mxu0
    %v2506 = vadd.f32 0.0, %v2505
    %2507 = vdwg.mxu0
    %v2508 = vadd.f32 %v2069, %v2486
    %v2509 = vadd.f32 %v2070, %v2506
    %s2510 = scalar_lea.vmem [#allocation7], 576
    %v2511 = vld [vmem:[%s2510] sm:$0xff]
    %v2512 = vld [vmem:[%s2510 + $0x8] sm:$0xff]
    %v2513 = vld [vmem:[%s2510 + $0x10] sm:$0xff]
    %v2514 = vld [vmem:[%s2510 + $0x18] sm:$0xff]
    %v2515 = vld [vmem:[%s2510 + $0x20] sm:$0xff]
    %v2516 = vld [vmem:[%s2510 + $0x28] sm:$0xff]
    %v2517 = vld [vmem:[%s2510 + $0x30] sm:$0xff]
    %v2518 = vld [vmem:[%s2510 + $0x38] sm:$0xff]
    %v2520 = vsel %vm1275, %v2453, 0
    %2522 = vmatpush.msra.mxu0 0.0
    %2523 = vmatpush.msra.mxu0 0.0
    %2524 = vmatpush.msra.mxu0 0.0
    %2525 = vmatpush.msra.mxu0 0.0
    %2526 = vmatpush.msra.mxu0 0.0
    %2527 = vmatpush.msra.mxu0 0.0
    %2528 = vmatpush.msra.mxu0 0.0
    %2529 = vmatpush.msra.mxu0 0.0
    %2530 = vmatpush.msra.mxu0 0.0
    %2531 = vmatpush.msra.mxu0 0.0
    %2532 = vmatpush.msra.mxu0 0.0
    %2533 = vmatpush.msra.mxu0 0.0
    %2534 = vmatpush.msra.mxu0 %v2517
    %2535 = vmatpush.msra.mxu0 %v2515
    %2536 = vmatpush.msra.mxu0 %v2513
    %2537 = vmatpush.msra.mxu0 %v2511
    %2538 = vmatmul.f32.gmra.mxu0 %v2520
    %v2539 = vpop.f32.mrf.mxu0
    %v2540 = vadd.f32 0.0, %v2539
    %2541 = vdwg.mxu0
    %2542 = vmatpush.msra.mxu0 0.0
    %2543 = vmatpush.msra.mxu0 0.0
    %2544 = vmatpush.msra.mxu0 0.0
    %2545 = vmatpush.msra.mxu0 0.0
    %2546 = vmatpush.msra.mxu0 0.0
    %2547 = vmatpush.msra.mxu0 0.0
    %2548 = vmatpush.msra.mxu0 0.0
    %2549 = vmatpush.msra.mxu0 0.0
    %2550 = vmatpush.msra.mxu0 0.0
    %2551 = vmatpush.msra.mxu0 0.0
    %2552 = vmatpush.msra.mxu0 0.0
    %2553 = vmatpush.msra.mxu0 0.0
    %2554 = vmatpush.msra.mxu0 %v2518
    %2555 = vmatpush.msra.mxu0 %v2516
    %2556 = vmatpush.msra.mxu0 %v2514
    %2557 = vmatpush.msra.mxu0 %v2512
    %2558 = vmatmul.f32.gmra.mxu0 %v2520
    %v2559 = vpop.f32.mrf.mxu0
    %v2560 = vadd.f32 0.0, %v2559
    %2561 = vdwg.mxu0
    %v2562 = vadd.f32 %v2508, %v2540
    %v2563 = vadd.f32 %v2509, %v2560
    %s2564 = scalar_lea.vmem [#allocation7], 640
    %v2565 = vld [vmem:[%s2564] sm:$0xff]
    %v2566 = vld [vmem:[%s2564 + $0x8] sm:$0xff]
    %v2567 = vld [vmem:[%s2564 + $0x10] sm:$0xff]
    %v2568 = vld [vmem:[%s2564 + $0x18] sm:$0xff]
    %v2569 = vld [vmem:[%s2564 + $0x20] sm:$0xff]
    %v2570 = vld [vmem:[%s2564 + $0x28] sm:$0xff]
    %v2571 = vld [vmem:[%s2564 + $0x30] sm:$0xff]
    %v2572 = vld [vmem:[%s2564 + $0x38] sm:$0xff]
    %v2574 = vsel %vm1275, %v2454, 0
    %2576 = vmatpush.msra.mxu0 0.0
    %2577 = vmatpush.msra.mxu0 0.0
    %2578 = vmatpush.msra.mxu0 0.0
    %2579 = vmatpush.msra.mxu0 0.0
    %2580 = vmatpush.msra.mxu0 0.0
    %2581 = vmatpush.msra.mxu0 0.0
    %2582 = vmatpush.msra.mxu0 0.0
    %2583 = vmatpush.msra.mxu0 0.0
    %2584 = vmatpush.msra.mxu0 0.0
    %2585 = vmatpush.msra.mxu0 0.0
    %2586 = vmatpush.msra.mxu0 0.0
    %2587 = vmatpush.msra.mxu0 0.0
    %2588 = vmatpush.msra.mxu0 %v2571
    %2589 = vmatpush.msra.mxu0 %v2569
    %2590 = vmatpush.msra.mxu0 %v2567
    %2591 = vmatpush.msra.mxu0 %v2565
    %2592 = vmatmul.f32.gmra.mxu0 %v2574
    %v2593 = vpop.f32.mrf.mxu0
    %v2594 = vadd.f32 0.0, %v2593
    %2595 = vdwg.mxu0
    %2596 = vmatpush.msra.mxu0 0.0
    %2597 = vmatpush.msra.mxu0 0.0
    %2598 = vmatpush.msra.mxu0 0.0
    %2599 = vmatpush.msra.mxu0 0.0
    %2600 = vmatpush.msra.mxu0 0.0
    %2601 = vmatpush.msra.mxu0 0.0
    %2602 = vmatpush.msra.mxu0 0.0
    %2603 = vmatpush.msra.mxu0 0.0
    %2604 = vmatpush.msra.mxu0 0.0
    %2605 = vmatpush.msra.mxu0 0.0
    %2606 = vmatpush.msra.mxu0 0.0
    %2607 = vmatpush.msra.mxu0 0.0
    %2608 = vmatpush.msra.mxu0 %v2572
    %2609 = vmatpush.msra.mxu0 %v2570
    %2610 = vmatpush.msra.mxu0 %v2568
    %2611 = vmatpush.msra.mxu0 %v2566
    %2612 = vmatmul.f32.gmra.mxu0 %v2574
    %v2613 = vpop.f32.mrf.mxu0
    %v2614 = vadd.f32 0.0, %v2613
    %2615 = vdwg.mxu0
    %v2616 = vadd.f32 %v2562, %v2594
    %v2617 = vadd.f32 %v2563, %v2614
    %s2618 = scalar_lea.vmem [#allocation7], 704
    %v2619 = vld [vmem:[%s2618] sm:$0xff]
    %v2620 = vld [vmem:[%s2618 + $0x8] sm:$0xff]
    %v2621 = vld [vmem:[%s2618 + $0x10] sm:$0xff]
    %v2622 = vld [vmem:[%s2618 + $0x18] sm:$0xff]
    %v2623 = vld [vmem:[%s2618 + $0x20] sm:$0xff]
    %v2624 = vld [vmem:[%s2618 + $0x28] sm:$0xff]
    %v2625 = vld [vmem:[%s2618 + $0x30] sm:$0xff]
    %v2626 = vld [vmem:[%s2618 + $0x38] sm:$0xff]
    %v2628 = vsel %vm1275, %v2455, 0
    %2630 = vmatpush.msra.mxu0 0.0
    %2631 = vmatpush.msra.mxu0 0.0
    %2632 = vmatpush.msra.mxu0 0.0
    %2633 = vmatpush.msra.mxu0 0.0
    %2634 = vmatpush.msra.mxu0 0.0
    %2635 = vmatpush.msra.mxu0 0.0
    %2636 = vmatpush.msra.mxu0 0.0
    %2637 = vmatpush.msra.mxu0 0.0
    %2638 = vmatpush.msra.mxu0 0.0
    %2639 = vmatpush.msra.mxu0 0.0
    %2640 = vmatpush.msra.mxu0 0.0
    %2641 = vmatpush.msra.mxu0 0.0
    %2642 = vmatpush.msra.mxu0 %v2625
    %2643 = vmatpush.msra.mxu0 %v2623
    %2644 = vmatpush.msra.mxu0 %v2621
    %2645 = vmatpush.msra.mxu0 %v2619
    %2646 = vmatmul.f32.gmra.mxu0 %v2628
    %v2647 = vpop.f32.mrf.mxu0
    %v2648 = vadd.f32 0.0, %v2647
    %2649 = vdwg.mxu0
    %2650 = vmatpush.msra.mxu0 0.0
    %2651 = vmatpush.msra.mxu0 0.0
    %2652 = vmatpush.msra.mxu0 0.0
    %2653 = vmatpush.msra.mxu0 0.0
    %2654 = vmatpush.msra.mxu0 0.0
    %2655 = vmatpush.msra.mxu0 0.0
    %2656 = vmatpush.msra.mxu0 0.0
    %2657 = vmatpush.msra.mxu0 0.0
    %2658 = vmatpush.msra.mxu0 0.0
    %2659 = vmatpush.msra.mxu0 0.0
    %2660 = vmatpush.msra.mxu0 0.0
    %2661 = vmatpush.msra.mxu0 0.0
    %2662 = vmatpush.msra.mxu0 %v2626
    %2663 = vmatpush.msra.mxu0 %v2624
    %2664 = vmatpush.msra.mxu0 %v2622
    %2665 = vmatpush.msra.mxu0 %v2620
    %2666 = vmatmul.f32.gmra.mxu0 %v2628
    %v2667 = vpop.f32.mrf.mxu0
    %v2668 = vadd.f32 0.0, %v2667
    %2669 = vdwg.mxu0
    %v2670 = vadd.f32 %v2616, %v2648
    %v2671 = vadd.f32 %v2617, %v2668
    %2672 = vmatpush.msra.mxu0 0.0
    %2673 = vmatpush.msra.mxu0 0.0
    %2674 = vmatpush.msra.mxu0 0.0
    %2675 = vmatpush.msra.mxu0 0.0
    %2676 = vmatpush.msra.mxu0 0.0
    %2677 = vmatpush.msra.mxu0 0.0
    %2678 = vmatpush.msra.mxu0 0.0
    %2679 = vmatpush.msra.mxu0 0.0
    %2680 = vmatpush.msra.mxu0 %v733
    %2681 = vmatpush.msra.mxu0 %v732
    %2682 = vmatpush.msra.mxu0 %v731
    %2683 = vmatpush.msra.mxu0 %v730
    %2684 = vmatpush.msra.mxu0 %v729
    %2685 = vmatpush.msra.mxu0 %v728
    %2686 = vmatpush.msra.mxu0 %v727
    %2687 = vmatpush.msra.mxu0 %v726
    %2688 = vmatmul.f32.gmra.mxu0 %v1714
    %v2689 = vpop.f32.mrf.mxu0
    %v2690 = vadd.f32 0.0, %v2689
    %2691 = vmatmul.f32.gmra.mxu0 %v1717
    %v2692 = vpop.f32.mrf.mxu0
    %v2693 = vadd.f32 0.0, %v2692
    %2694 = vmatmul.f32.gmra.mxu0 %v1720
    %v2695 = vpop.f32.mrf.mxu0
    %v2696 = vadd.f32 0.0, %v2695
    %2697 = vmatmul.f32.gmra.mxu0 %v1723
    %v2698 = vpop.f32.mrf.mxu0
    %v2699 = vadd.f32 0.0, %v2698
    %2700 = vdwg.mxu0
    %2701 = vmatpush.msra.mxu0 0.0
    %2702 = vmatpush.msra.mxu0 0.0
    %2703 = vmatpush.msra.mxu0 0.0
    %2704 = vmatpush.msra.mxu0 0.0
    %2705 = vmatpush.msra.mxu0 0.0
    %2706 = vmatpush.msra.mxu0 0.0
    %2707 = vmatpush.msra.mxu0 0.0
    %2708 = vmatpush.msra.mxu0 0.0
    %2709 = vmatpush.msra.mxu0 %v724
    %2710 = vmatpush.msra.mxu0 %v723
    %2711 = vmatpush.msra.mxu0 %v722
    %2712 = vmatpush.msra.mxu0 %v721
    %2713 = vmatpush.msra.mxu0 %v720
    %2714 = vmatpush.msra.mxu0 %v719
    %2715 = vmatpush.msra.mxu0 %v718
    %2716 = vmatpush.msra.mxu0 %v717
    %2717 = vmatmul.f32.gmra.mxu0 %v1665
    %v2718 = vpop.f32.mrf.mxu0
    %v2719 = vadd.f32 %v2690, %v2718
    %2720 = vmatmul.f32.gmra.mxu0 %v1668
    %v2721 = vpop.f32.mrf.mxu0
    %v2722 = vadd.f32 %v2693, %v2721
    %2723 = vmatmul.f32.gmra.mxu0 %v1671
    %v2724 = vpop.f32.mrf.mxu0
    %v2725 = vadd.f32 %v2696, %v2724
    %2726 = vmatmul.f32.gmra.mxu0 %v1674
    %v2727 = vpop.f32.mrf.mxu0
    %v2728 = vadd.f32 %v2699, %v2727
    %2729 = vdwg.mxu0
    %2730 = vmatpush.msra.mxu0 0.0
    %2731 = vmatpush.msra.mxu0 0.0
    %2732 = vmatpush.msra.mxu0 0.0
    %2733 = vmatpush.msra.mxu0 0.0
    %2734 = vmatpush.msra.mxu0 0.0
    %2735 = vmatpush.msra.mxu0 0.0
    %2736 = vmatpush.msra.mxu0 0.0
    %2737 = vmatpush.msra.mxu0 0.0
    %2738 = vmatpush.msra.mxu0 %v818
    %2739 = vmatpush.msra.mxu0 %v817
    %2740 = vmatpush.msra.mxu0 %v816
    %2741 = vmatpush.msra.mxu0 %v815
    %2742 = vmatpush.msra.mxu0 %v814
    %2743 = vmatpush.msra.mxu0 %v813
    %2744 = vmatpush.msra.mxu0 %v812
    %2745 = vmatpush.msra.mxu0 %v811
    %2746 = vmatmul.f32.gmra.mxu0 %v1763
    %v2747 = vpop.f32.mrf.mxu0
    %v2748 = vadd.f32 0.0, %v2747
    %2749 = vmatmul.f32.gmra.mxu0 %v1766
    %v2750 = vpop.f32.mrf.mxu0
    %v2751 = vadd.f32 0.0, %v2750
    %2752 = vmatmul.f32.gmra.mxu0 %v1769
    %v2753 = vpop.f32.mrf.mxu0
    %v2754 = vadd.f32 0.0, %v2753
    %2755 = vmatmul.f32.gmra.mxu0 %v1772
    %v2756 = vpop.f32.mrf.mxu0
    %v2757 = vadd.f32 0.0, %v2756
    %2758 = vdwg.mxu0
    %v2759 = vadd.f32 %v2719, %v2748
    %v2760 = vadd.f32 %v2722, %v2751
    %v2761 = vadd.f32 %v2725, %v2754
    %v2762 = vadd.f32 %v2728, %v2757
    %2763 = vmatpush.msra.mxu0 0.0
    %2764 = vmatpush.msra.mxu0 0.0
    %2765 = vmatpush.msra.mxu0 0.0
    %2766 = vmatpush.msra.mxu0 0.0
    %2767 = vmatpush.msra.mxu0 0.0
    %2768 = vmatpush.msra.mxu0 0.0
    %2769 = vmatpush.msra.mxu0 0.0
    %2770 = vmatpush.msra.mxu0 0.0
    %2771 = vmatpush.msra.mxu0 %v875
    %2772 = vmatpush.msra.mxu0 %v874
    %2773 = vmatpush.msra.mxu0 %v873
    %2774 = vmatpush.msra.mxu0 %v872
    %2775 = vmatpush.msra.mxu0 %v871
    %2776 = vmatpush.msra.mxu0 %v870
    %2777 = vmatpush.msra.mxu0 %v869
    %2778 = vmatpush.msra.mxu0 %v868
    %2779 = vmatmul.f32.gmra.mxu0 %v2266
    %v2780 = vpop.f32.mrf.mxu0
    %v2781 = vadd.f32 0.0, %v2780
    %2782 = vmatmul.f32.gmra.mxu0 %v2269
    %v2783 = vpop.f32.mrf.mxu0
    %v2784 = vadd.f32 0.0, %v2783
    %2785 = vmatmul.f32.gmra.mxu0 %v2272
    %v2786 = vpop.f32.mrf.mxu0
    %v2787 = vadd.f32 0.0, %v2786
    %2788 = vmatmul.f32.gmra.mxu0 %v2275
    %v2789 = vpop.f32.mrf.mxu0
    %v2790 = vadd.f32 0.0, %v2789
    %2791 = vdwg.mxu0
    %v2792 = vadd.f32 %v2759, %v2781
    %v2793 = vadd.f32 %v2760, %v2784
    %v2794 = vadd.f32 %v2761, %v2787
    %v2795 = vadd.f32 %v2762, %v2790
    %2796 = vmatpush.msra.mxu0 0.0
    %2797 = vmatpush.msra.mxu0 0.0
    %2798 = vmatpush.msra.mxu0 0.0
    %2799 = vmatpush.msra.mxu0 0.0
    %2800 = vmatpush.msra.mxu0 0.0
    %2801 = vmatpush.msra.mxu0 0.0
    %2802 = vmatpush.msra.mxu0 0.0
    %2803 = vmatpush.msra.mxu0 0.0
    %2804 = vmatpush.msra.mxu0 %v932
    %2805 = vmatpush.msra.mxu0 %v931
    %2806 = vmatpush.msra.mxu0 %v930
    %2807 = vmatpush.msra.mxu0 %v929
    %2808 = vmatpush.msra.mxu0 %v928
    %2809 = vmatpush.msra.mxu0 %v927
    %2810 = vmatpush.msra.mxu0 %v926
    %2811 = vmatpush.msra.mxu0 %v925
    %2812 = vmatmul.f32.gmra.mxu0 %v2315
    %v2813 = vpop.f32.mrf.mxu0
    %v2814 = vadd.f32 0.0, %v2813
    %2815 = vmatmul.f32.gmra.mxu0 %v2318
    %v2816 = vpop.f32.mrf.mxu0
    %v2817 = vadd.f32 0.0, %v2816
    %2818 = vmatmul.f32.gmra.mxu0 %v2321
    %v2819 = vpop.f32.mrf.mxu0
    %v2820 = vadd.f32 0.0, %v2819
    %2821 = vmatmul.f32.gmra.mxu0 %v2324
    %v2822 = vpop.f32.mrf.mxu0
    %v2823 = vadd.f32 0.0, %v2822
    %2824 = vdwg.mxu0
    %v2825 = vadd.f32 %v2792, %v2814
    %v2826 = vadd.f32 %v2793, %v2817
    %v2827 = vadd.f32 %v2794, %v2820
    %v2828 = vadd.f32 %v2795, %v2823
    %2829 = vmatpush.msra.mxu0 0.0
    %2830 = vmatpush.msra.mxu0 0.0
    %2831 = vmatpush.msra.mxu0 0.0
    %2832 = vmatpush.msra.mxu0 0.0
    %2833 = vmatpush.msra.mxu0 0.0
    %2834 = vmatpush.msra.mxu0 0.0
    %2835 = vmatpush.msra.mxu0 0.0
    %2836 = vmatpush.msra.mxu0 0.0
    %2837 = vmatpush.msra.mxu0 %v989
    %2838 = vmatpush.msra.mxu0 %v988
    %2839 = vmatpush.msra.mxu0 %v987
    %2840 = vmatpush.msra.mxu0 %v986
    %2841 = vmatpush.msra.mxu0 %v985
    %2842 = vmatpush.msra.mxu0 %v984
    %2843 = vmatpush.msra.mxu0 %v983
    %2844 = vmatpush.msra.mxu0 %v982
    %2845 = vmatmul.f32.gmra.mxu0 %v2364
    %v2846 = vpop.f32.mrf.mxu0
    %v2847 = vadd.f32 0.0, %v2846
    %2848 = vmatmul.f32.gmra.mxu0 %v2367
    %v2849 = vpop.f32.mrf.mxu0
    %v2850 = vadd.f32 0.0, %v2849
    %2851 = vmatmul.f32.gmra.mxu0 %v2370
    %v2852 = vpop.f32.mrf.mxu0
    %v2853 = vadd.f32 0.0, %v2852
    %2854 = vmatmul.f32.gmra.mxu0 %v2373
    %v2855 = vpop.f32.mrf.mxu0
    %v2856 = vadd.f32 0.0, %v2855
    %2857 = vdwg.mxu0
    %v2858 = vadd.f32 %v2825, %v2847
    %v2859 = vadd.f32 %v2826, %v2850
    %v2860 = vadd.f32 %v2827, %v2853
    %v2861 = vadd.f32 %v2828, %v2856
    %s2862 = scalar_lea.vmem [#allocation2], 240
    %v2863 = vld [vmem:[%s2862] sm:$0xff]
    %v2864 = vld [vmem:[%s2862 + $0x8] sm:$0xff]
    %v2865 = vld [vmem:[%s2862 + $0x10] sm:$0xff]
    %v2866 = vld [vmem:[%s2862 + $0x18] sm:$0xff]
    %v2868 = vsel %vm130, %v2863, 0
    %v2871 = vsel %vm130, %v2864, 0
    %v2874 = vsel %vm130, %v2865, 0
    %v2877 = vsel %vm130, %v2866, 0
    %2879 = vmatpush.msra.mxu0 0.0
    %2880 = vmatpush.msra.mxu0 0.0
    %2881 = vmatpush.msra.mxu0 0.0
    %2882 = vmatpush.msra.mxu0 0.0
    %2883 = vmatpush.msra.mxu0 0.0
    %2884 = vmatpush.msra.mxu0 0.0
    %2885 = vmatpush.msra.mxu0 0.0
    %2886 = vmatpush.msra.mxu0 0.0
    %2887 = vmatpush.msra.mxu0 %v1046
    %2888 = vmatpush.msra.mxu0 %v1045
    %2889 = vmatpush.msra.mxu0 %v1044
    %2890 = vmatpush.msra.mxu0 %v1043
    %2891 = vmatpush.msra.mxu0 %v1042
    %2892 = vmatpush.msra.mxu0 %v1041
    %2893 = vmatpush.msra.mxu0 %v1040
    %2894 = vmatpush.msra.mxu0 %v1039
    %2895 = vmatmul.f32.gmra.mxu0 %v2868
    %v2896 = vpop.f32.mrf.mxu0
    %v2897 = vadd.f32 0.0, %v2896
    %2898 = vmatmul.f32.gmra.mxu0 %v2871
    %v2899 = vpop.f32.mrf.mxu0
    %v2900 = vadd.f32 0.0, %v2899
    %2901 = vmatmul.f32.gmra.mxu0 %v2874
    %v2902 = vpop.f32.mrf.mxu0
    %v2903 = vadd.f32 0.0, %v2902
    %2904 = vmatmul.f32.gmra.mxu0 %v2877
    %v2905 = vpop.f32.mrf.mxu0
    %v2906 = vadd.f32 0.0, %v2905
    %2907 = vdwg.mxu0
    %v2908 = vadd.f32 %v2858, %v2897
    %v2909 = vadd.f32 %v2859, %v2900
    %v2910 = vadd.f32 %v2860, %v2903
    %v2911 = vadd.f32 %v2861, %v2906
    %v2912 = vld [vmem:[%s2862 + $0x8] sm:$0xff]
    %v2913 = vld [vmem:[%s2862 + $0x10] sm:$0xff]
    %v2914 = vld [vmem:[%s2862 + $0x18] sm:$0xff]
    %v2915 = vld [vmem:[%s2862 + $0x20] sm:$0xff]
    %v2917 = vsel %vm130, %v2912, 0
    %v2920 = vsel %vm130, %v2913, 0
    %v2923 = vsel %vm130, %v2914, 0
    %v2926 = vsel %vm130, %v2915, 0
    %2928 = vmatpush.msra.mxu0 0.0
    %2929 = vmatpush.msra.mxu0 0.0
    %2930 = vmatpush.msra.mxu0 0.0
    %2931 = vmatpush.msra.mxu0 0.0
    %2932 = vmatpush.msra.mxu0 0.0
    %2933 = vmatpush.msra.mxu0 0.0
    %2934 = vmatpush.msra.mxu0 0.0
    %2935 = vmatpush.msra.mxu0 0.0
    %2936 = vmatpush.msra.mxu0 %v1103
    %2937 = vmatpush.msra.mxu0 %v1102
    %2938 = vmatpush.msra.mxu0 %v1101
    %2939 = vmatpush.msra.mxu0 %v1100
    %2940 = vmatpush.msra.mxu0 %v1099
    %2941 = vmatpush.msra.mxu0 %v1098
    %2942 = vmatpush.msra.mxu0 %v1097
    %2943 = vmatpush.msra.mxu0 %v1096
    %2944 = vmatmul.f32.gmra.mxu0 %v2917
    %v2945 = vpop.f32.mrf.mxu0
    %v2946 = vadd.f32 0.0, %v2945
    %2947 = vmatmul.f32.gmra.mxu0 %v2920
    %v2948 = vpop.f32.mrf.mxu0
    %v2949 = vadd.f32 0.0, %v2948
    %2950 = vmatmul.f32.gmra.mxu0 %v2923
    %v2951 = vpop.f32.mrf.mxu0
    %v2952 = vadd.f32 0.0, %v2951
    %2953 = vmatmul.f32.gmra.mxu0 %v2926
    %v2954 = vpop.f32.mrf.mxu0
    %v2955 = vadd.f32 0.0, %v2954
    %2956 = vdwg.mxu0
    %v2957 = vadd.f32 %v2908, %v2946
    %v2958 = vadd.f32 %v2909, %v2949
    %v2959 = vadd.f32 %v2910, %v2952
    %v2960 = vadd.f32 %v2911, %v2955
    %v2961 = vld [vmem:[%s2862 + $0x10] sm:$0xff]
    %v2962 = vld [vmem:[%s2862 + $0x18] sm:$0xff]
    %v2963 = vld [vmem:[%s2862 + $0x20] sm:$0xff]
    %v2964 = vld [vmem:[%s2862 + $0x28] sm:$0xff]
    %v2966 = vsel %vm130, %v2961, 0
    %v2969 = vsel %vm130, %v2962, 0
    %v2972 = vsel %vm130, %v2963, 0
    %v2975 = vsel %vm130, %v2964, 0
    %2977 = vmatpush.msra.mxu0 0.0
    %2978 = vmatpush.msra.mxu0 0.0
    %2979 = vmatpush.msra.mxu0 0.0
    %2980 = vmatpush.msra.mxu0 0.0
    %2981 = vmatpush.msra.mxu0 0.0
    %2982 = vmatpush.msra.mxu0 0.0
    %2983 = vmatpush.msra.mxu0 0.0
    %2984 = vmatpush.msra.mxu0 0.0
    %2985 = vmatpush.msra.mxu0 %v1160
    %2986 = vmatpush.msra.mxu0 %v1159
    %2987 = vmatpush.msra.mxu0 %v1158
    %2988 = vmatpush.msra.mxu0 %v1157
    %2989 = vmatpush.msra.mxu0 %v1156
    %2990 = vmatpush.msra.mxu0 %v1155
    %2991 = vmatpush.msra.mxu0 %v1154
    %2992 = vmatpush.msra.mxu0 %v1153
    %2993 = vmatmul.f32.gmra.mxu0 %v2966
    %v2994 = vpop.f32.mrf.mxu0
    %v2995 = vadd.f32 0.0, %v2994
    %2996 = vmatmul.f32.gmra.mxu0 %v2969
    %v2997 = vpop.f32.mrf.mxu0
    %v2998 = vadd.f32 0.0, %v2997
    %2999 = vmatmul.f32.gmra.mxu0 %v2972
    %v3000 = vpop.f32.mrf.mxu0
    %v3001 = vadd.f32 0.0, %v3000
    %3002 = vmatmul.f32.gmra.mxu0 %v2975
    %v3003 = vpop.f32.mrf.mxu0
    %v3004 = vadd.f32 0.0, %v3003
    %3005 = vdwg.mxu0
    %v3006 = vadd.f32 %v2957, %v2995
    %v3007 = vadd.f32 %v2958, %v2998
    %v3008 = vadd.f32 %v2959, %v3001
    %v3009 = vadd.f32 %v2960, %v3004
    %3014 = vrot.lane.b32.xlu0 %v3006, 96
    %v3015 = vpop.permute.xlu0 %3014
    %3016 = vrot.lane.b32.xlu0 %v3007, 96
    %v3017 = vpop.permute.xlu0 %3016
    %3018 = vrot.lane.b32.xlu0 %v3008, 96
    %v3019 = vpop.permute.xlu0 %3018
    %3020 = vrot.lane.b32.xlu0 %v3009, 96
    %v3021 = vpop.permute.xlu0 %3020
    %v3026 = vmax.f32 %v3006, %v3015
    %v3027 = vmax.f32 %v3007, %v3017
    %v3028 = vmax.f32 %v3008, %v3019
    %v3029 = vmax.f32 %v3009, %v3021
    %3034 = vrot.lane.b32.xlu0 %v3026, 64
    %v3035 = vpop.permute.xlu0 %3034
    %3036 = vrot.lane.b32.xlu0 %v3027, 64
    %v3037 = vpop.permute.xlu0 %3036
    %3038 = vrot.lane.b32.xlu0 %v3028, 64
    %v3039 = vpop.permute.xlu0 %3038
    %3040 = vrot.lane.b32.xlu0 %v3029, 64
    %v3041 = vpop.permute.xlu0 %3040
    %v3046 = vmax.f32 %v3026, %v3035
    %v3047 = vmax.f32 %v3027, %v3037
    %v3048 = vmax.f32 %v3028, %v3039
    %v3049 = vmax.f32 %v3029, %v3041
    %v3050 = vadd.f32 %v3046, %v1248
    %v3051 = vadd.f32 %v3047, %v1248
    %v3052 = vadd.f32 %v3048, %v1248
    %v3053 = vadd.f32 %v3049, %v1248
    %v3054 = vmax.f32 %v3050, 0.0
    %v3055 = vmax.f32 %v3051, 0.0
    %v3056 = vmax.f32 %v3052, 0.0
    %v3057 = vmax.f32 %v3053, 0.0
    %s3058 = scalar_lea.vmem [#allocation7], 768
    %v3059 = vld [vmem:[%s3058] sm:$0xff]
    %v3060 = vld [vmem:[%s3058 + $0x8] sm:$0xff]
    %v3061 = vld [vmem:[%s3058 + $0x10] sm:$0xff]
    %v3062 = vld [vmem:[%s3058 + $0x18] sm:$0xff]
    %v3063 = vld [vmem:[%s3058 + $0x20] sm:$0xff]
    %v3064 = vld [vmem:[%s3058 + $0x28] sm:$0xff]
    %v3065 = vld [vmem:[%s3058 + $0x30] sm:$0xff]
    %v3066 = vld [vmem:[%s3058 + $0x38] sm:$0xff]
    %v3068 = vsel %vm1275, %v3054, 0
    %3070 = vmatpush.msra.mxu0 0.0
    %3071 = vmatpush.msra.mxu0 0.0
    %3072 = vmatpush.msra.mxu0 0.0
    %3073 = vmatpush.msra.mxu0 0.0
    %3074 = vmatpush.msra.mxu0 0.0
    %3075 = vmatpush.msra.mxu0 0.0
    %3076 = vmatpush.msra.mxu0 0.0
    %3077 = vmatpush.msra.mxu0 0.0
    %3078 = vmatpush.msra.mxu0 0.0
    %3079 = vmatpush.msra.mxu0 0.0
    %3080 = vmatpush.msra.mxu0 0.0
    %3081 = vmatpush.msra.mxu0 0.0
    %3082 = vmatpush.msra.mxu0 %v3065
    %3083 = vmatpush.msra.mxu0 %v3063
    %3084 = vmatpush.msra.mxu0 %v3061
    %3085 = vmatpush.msra.mxu0 %v3059
    %3086 = vmatmul.f32.gmra.mxu0 %v3068
    %v3087 = vpop.f32.mrf.mxu0
    %v3088 = vadd.f32 0.0, %v3087
    %3089 = vdwg.mxu0
    %3090 = vmatpush.msra.mxu0 0.0
    %3091 = vmatpush.msra.mxu0 0.0
    %3092 = vmatpush.msra.mxu0 0.0
    %3093 = vmatpush.msra.mxu0 0.0
    %3094 = vmatpush.msra.mxu0 0.0
    %3095 = vmatpush.msra.mxu0 0.0
    %3096 = vmatpush.msra.mxu0 0.0
    %3097 = vmatpush.msra.mxu0 0.0
    %3098 = vmatpush.msra.mxu0 0.0
    %3099 = vmatpush.msra.mxu0 0.0
    %3100 = vmatpush.msra.mxu0 0.0
    %3101 = vmatpush.msra.mxu0 0.0
    %3102 = vmatpush.msra.mxu0 %v3066
    %3103 = vmatpush.msra.mxu0 %v3064
    %3104 = vmatpush.msra.mxu0 %v3062
    %3105 = vmatpush.msra.mxu0 %v3060
    %3106 = vmatmul.f32.gmra.mxu0 %v3068
    %v3107 = vpop.f32.mrf.mxu0
    %v3108 = vadd.f32 0.0, %v3107
    %3109 = vdwg.mxu0
    %v3110 = vadd.f32 %v2670, %v3088
    %v3111 = vadd.f32 %v2671, %v3108
    %s3112 = scalar_lea.vmem [#allocation7], 832
    %v3113 = vld [vmem:[%s3112] sm:$0xff]
    %v3114 = vld [vmem:[%s3112 + $0x8] sm:$0xff]
    %v3115 = vld [vmem:[%s3112 + $0x10] sm:$0xff]
    %v3116 = vld [vmem:[%s3112 + $0x18] sm:$0xff]
    %v3117 = vld [vmem:[%s3112 + $0x20] sm:$0xff]
    %v3118 = vld [vmem:[%s3112 + $0x28] sm:$0xff]
    %v3119 = vld [vmem:[%s3112 + $0x30] sm:$0xff]
    %v3120 = vld [vmem:[%s3112 + $0x38] sm:$0xff]
    %v3122 = vsel %vm1275, %v3055, 0
    %3124 = vmatpush.msra.mxu0 0.0
    %3125 = vmatpush.msra.mxu0 0.0
    %3126 = vmatpush.msra.mxu0 0.0
    %3127 = vmatpush.msra.mxu0 0.0
    %3128 = vmatpush.msra.mxu0 0.0
    %3129 = vmatpush.msra.mxu0 0.0
    %3130 = vmatpush.msra.mxu0 0.0
    %3131 = vmatpush.msra.mxu0 0.0
    %3132 = vmatpush.msra.mxu0 0.0
    %3133 = vmatpush.msra.mxu0 0.0
    %3134 = vmatpush.msra.mxu0 0.0
    %3135 = vmatpush.msra.mxu0 0.0
    %3136 = vmatpush.msra.mxu0 %v3119
    %3137 = vmatpush.msra.mxu0 %v3117
    %3138 = vmatpush.msra.mxu0 %v3115
    %3139 = vmatpush.msra.mxu0 %v3113
    %3140 = vmatmul.f32.gmra.mxu0 %v3122
    %v3141 = vpop.f32.mrf.mxu0
    %v3142 = vadd.f32 0.0, %v3141
    %3143 = vdwg.mxu0
    %3144 = vmatpush.msra.mxu0 0.0
    %3145 = vmatpush.msra.mxu0 0.0
    %3146 = vmatpush.msra.mxu0 0.0
    %3147 = vmatpush.msra.mxu0 0.0
    %3148 = vmatpush.msra.mxu0 0.0
    %3149 = vmatpush.msra.mxu0 0.0
    %3150 = vmatpush.msra.mxu0 0.0
    %3151 = vmatpush.msra.mxu0 0.0
    %3152 = vmatpush.msra.mxu0 0.0
    %3153 = vmatpush.msra.mxu0 0.0
    %3154 = vmatpush.msra.mxu0 0.0
    %3155 = vmatpush.msra.mxu0 0.0
    %3156 = vmatpush.msra.mxu0 %v3120
    %3157 = vmatpush.msra.mxu0 %v3118
    %3158 = vmatpush.msra.mxu0 %v3116
    %3159 = vmatpush.msra.mxu0 %v3114
    %3160 = vmatmul.f32.gmra.mxu0 %v3122
    %v3161 = vpop.f32.mrf.mxu0
    %v3162 = vadd.f32 0.0, %v3161
    %3163 = vdwg.mxu0
    %v3164 = vadd.f32 %v3110, %v3142
    %v3165 = vadd.f32 %v3111, %v3162
    %s3166 = scalar_lea.vmem [#allocation7], 896
    %v3167 = vld [vmem:[%s3166] sm:$0xff]
    %v3168 = vld [vmem:[%s3166 + $0x8] sm:$0xff]
    %v3169 = vld [vmem:[%s3166 + $0x10] sm:$0xff]
    %v3170 = vld [vmem:[%s3166 + $0x18] sm:$0xff]
    %v3171 = vld [vmem:[%s3166 + $0x20] sm:$0xff]
    %v3172 = vld [vmem:[%s3166 + $0x28] sm:$0xff]
    %v3173 = vld [vmem:[%s3166 + $0x30] sm:$0xff]
    %v3174 = vld [vmem:[%s3166 + $0x38] sm:$0xff]
    %v3176 = vsel %vm1275, %v3056, 0
    %3178 = vmatpush.msra.mxu0 0.0
    %3179 = vmatpush.msra.mxu0 0.0
    %3180 = vmatpush.msra.mxu0 0.0
    %3181 = vmatpush.msra.mxu0 0.0
    %3182 = vmatpush.msra.mxu0 0.0
    %3183 = vmatpush.msra.mxu0 0.0
    %3184 = vmatpush.msra.mxu0 0.0
    %3185 = vmatpush.msra.mxu0 0.0
    %3186 = vmatpush.msra.mxu0 0.0
    %3187 = vmatpush.msra.mxu0 0.0
    %3188 = vmatpush.msra.mxu0 0.0
    %3189 = vmatpush.msra.mxu0 0.0
    %3190 = vmatpush.msra.mxu0 %v3173
    %3191 = vmatpush.msra.mxu0 %v3171
    %3192 = vmatpush.msra.mxu0 %v3169
    %3193 = vmatpush.msra.mxu0 %v3167
    %3194 = vmatmul.f32.gmra.mxu0 %v3176
    %v3195 = vpop.f32.mrf.mxu0
    %v3196 = vadd.f32 0.0, %v3195
    %3197 = vdwg.mxu0
    %3198 = vmatpush.msra.mxu0 0.0
    %3199 = vmatpush.msra.mxu0 0.0
    %3200 = vmatpush.msra.mxu0 0.0
    %3201 = vmatpush.msra.mxu0 0.0
    %3202 = vmatpush.msra.mxu0 0.0
    %3203 = vmatpush.msra.mxu0 0.0
    %3204 = vmatpush.msra.mxu0 0.0
    %3205 = vmatpush.msra.mxu0 0.0
    %3206 = vmatpush.msra.mxu0 0.0
    %3207 = vmatpush.msra.mxu0 0.0
    %3208 = vmatpush.msra.mxu0 0.0
    %3209 = vmatpush.msra.mxu0 0.0
    %3210 = vmatpush.msra.mxu0 %v3174
    %3211 = vmatpush.msra.mxu0 %v3172
    %3212 = vmatpush.msra.mxu0 %v3170
    %3213 = vmatpush.msra.mxu0 %v3168
    %3214 = vmatmul.f32.gmra.mxu0 %v3176
    %v3215 = vpop.f32.mrf.mxu0
    %v3216 = vadd.f32 0.0, %v3215
    %3217 = vdwg.mxu0
    %v3218 = vadd.f32 %v3164, %v3196
    %v3219 = vadd.f32 %v3165, %v3216
    %s3220 = scalar_lea.vmem [#allocation7], 960
    %v3221 = vld [vmem:[%s3220] sm:$0xff]
    %v3222 = vld [vmem:[%s3220 + $0x8] sm:$0xff]
    %v3223 = vld [vmem:[%s3220 + $0x10] sm:$0xff]
    %v3224 = vld [vmem:[%s3220 + $0x18] sm:$0xff]
    %v3225 = vld [vmem:[%s3220 + $0x20] sm:$0xff]
    %v3226 = vld [vmem:[%s3220 + $0x28] sm:$0xff]
    %v3227 = vld [vmem:[%s3220 + $0x30] sm:$0xff]
    %v3228 = vld [vmem:[%s3220 + $0x38] sm:$0xff]
    %v3230 = vsel %vm1275, %v3057, 0
    %3232 = vmatpush.msra.mxu0 0.0
    %3233 = vmatpush.msra.mxu0 0.0
    %3234 = vmatpush.msra.mxu0 0.0
    %3235 = vmatpush.msra.mxu0 0.0
    %3236 = vmatpush.msra.mxu0 0.0
    %3237 = vmatpush.msra.mxu0 0.0
    %3238 = vmatpush.msra.mxu0 0.0
    %3239 = vmatpush.msra.mxu0 0.0
    %3240 = vmatpush.msra.mxu0 0.0
    %3241 = vmatpush.msra.mxu0 0.0
    %3242 = vmatpush.msra.mxu0 0.0
    %3243 = vmatpush.msra.mxu0 0.0
    %3244 = vmatpush.msra.mxu0 %v3227
    %3245 = vmatpush.msra.mxu0 %v3225
    %3246 = vmatpush.msra.mxu0 %v3223
    %3247 = vmatpush.msra.mxu0 %v3221
    %3248 = vmatmul.f32.gmra.mxu0 %v3230
    %v3249 = vpop.f32.mrf.mxu0
    %v3250 = vadd.f32 0.0, %v3249
    %3251 = vdwg.mxu0
    %3252 = vmatpush.msra.mxu0 0.0
    %3253 = vmatpush.msra.mxu0 0.0
    %3254 = vmatpush.msra.mxu0 0.0
    %3255 = vmatpush.msra.mxu0 0.0
    %3256 = vmatpush.msra.mxu0 0.0
    %3257 = vmatpush.msra.mxu0 0.0
    %3258 = vmatpush.msra.mxu0 0.0
    %3259 = vmatpush.msra.mxu0 0.0
    %3260 = vmatpush.msra.mxu0 0.0
    %3261 = vmatpush.msra.mxu0 0.0
    %3262 = vmatpush.msra.mxu0 0.0
    %3263 = vmatpush.msra.mxu0 0.0
    %3264 = vmatpush.msra.mxu0 %v3228
    %3265 = vmatpush.msra.mxu0 %v3226
    %3266 = vmatpush.msra.mxu0 %v3224
    %3267 = vmatpush.msra.mxu0 %v3222
    %3268 = vmatmul.f32.gmra.mxu0 %v3230
    %v3269 = vpop.f32.mrf.mxu0
    %v3270 = vadd.f32 0.0, %v3269
    %3271 = vdwg.mxu0
    %v3272 = vadd.f32 %v3218, %v3250
    %v3273 = vadd.f32 %v3219, %v3270
    %v3274 = vld [vmem:[#allocation8] sm:$0xff]
    %v3275 = vld [vmem:[#allocation8 + $0x8] sm:$0xff]
    %v3276 = vld [vmem:[#allocation8 + $0x10] sm:$0xff]
    %v3277 = vld [vmem:[#allocation8 + $0x18] sm:$0xff]
    %v3278 = vld [vmem:[#allocation8 + $0x20] sm:$0xff]
    %v3279 = vld [vmem:[#allocation8 + $0x28] sm:$0xff]
    %v3280 = vld [vmem:[#allocation8 + $0x30] sm:$0xff]
    %v3281 = vld [vmem:[#allocation8 + $0x38] sm:$0xff]
    %v3282 = vld [vmem:[#allocation8 + $0x40] sm:$0xff]
    %v3283 = vld [vmem:[#allocation8 + $0x48] sm:$0xff]
    %v3284 = vld [vmem:[#allocation8 + $0x50] sm:$0xff]
    %v3285 = vld [vmem:[#allocation8 + $0x58] sm:$0xff]
    %v3286 = vld [vmem:[#allocation8 + $0x60] sm:$0xff]
    %v3287 = vld [vmem:[#allocation8 + $0x68] sm:$0xff]
    %v3288 = vld [vmem:[#allocation8 + $0x70] sm:$0xff]
    %v3289 = vld [vmem:[#allocation8 + $0x78] sm:$0xff]
    %v3290 = vld [vmem:[#allocation8 + $0x80] sm:$0xff]
    %v3291 = vld [vmem:[#allocation8 + $0x88] sm:$0xff]
    %v3292 = vld [vmem:[#allocation8 + $0x90] sm:$0xff]
    %v3293 = vld [vmem:[#allocation8 + $0x98] sm:$0xff]
    %v3294 = vld [vmem:[#allocation8 + $0xa0] sm:$0xff]
    %v3295 = vld [vmem:[#allocation8 + $0xa8] sm:$0xff]
    %v3296 = vld [vmem:[#allocation8 + $0xb0] sm:$0xff]
    %v3297 = vld [vmem:[#allocation8 + $0xb8] sm:$0xff]
    %v3298 = vld [vmem:[#allocation8 + $0xc0] sm:$0xff]
    %v3299 = vld [vmem:[#allocation8 + $0xc8] sm:$0xff]
    %v3300 = vld [vmem:[#allocation8 + $0xd0] sm:$0xff]
    %v3301 = vld [vmem:[#allocation8 + $0xd8] sm:$0xff]
    %v3302 = vld [vmem:[#allocation8 + $0xe0] sm:$0xff]
    %v3303 = vld [vmem:[#allocation8 + $0xe8] sm:$0xff]
    %v3304 = vld [vmem:[#allocation8 + $0xf0] sm:$0xff]
    %v3305 = vld [vmem:[#allocation8 + $0xf8] sm:$0xff]
    %3306 = vmatpush.msra.mxu0 %v3289
    %3307 = vmatpush.msra.mxu0 %v3288
    %3308 = vmatpush.msra.mxu0 %v3287
    %3309 = vmatpush.msra.mxu0 %v3286
    %3310 = vmatpush.msra.mxu0 %v3285
    %3311 = vmatpush.msra.mxu0 %v3284
    %3312 = vmatpush.msra.mxu0 %v3283
    %3313 = vmatpush.msra.mxu0 %v3282
    %3314 = vmatpush.msra.mxu0 %v3281
    %3315 = vmatpush.msra.mxu0 %v3280
    %3316 = vmatpush.msra.mxu0 %v3279
    %3317 = vmatpush.msra.mxu0 %v3278
    %3318 = vmatpush.msra.mxu0 %v3277
    %3319 = vmatpush.msra.mxu0 %v3276
    %3320 = vmatpush.msra.mxu0 %v3275
    %3321 = vmatpush.msra.mxu0 %v3274
    %3322 = vmatmul.f32.gmra.mxu0 %v3272
    %v3323 = vpop.f32.mrf.mxu0
    %v3324 = vadd.f32 0.0, %v3323
    %3325 = vdwg.mxu0
    %3326 = vmatpush.msra.mxu0 %v3305
    %3327 = vmatpush.msra.mxu0 %v3304
    %3328 = vmatpush.msra.mxu0 %v3303
    %3329 = vmatpush.msra.mxu0 %v3302
    %3330 = vmatpush.msra.mxu0 %v3301
    %3331 = vmatpush.msra.mxu0 %v3300
    %3332 = vmatpush.msra.mxu0 %v3299
    %3333 = vmatpush.msra.mxu0 %v3298
    %3334 = vmatpush.msra.mxu0 %v3297
    %3335 = vmatpush.msra.mxu0 %v3296
    %3336 = vmatpush.msra.mxu0 %v3295
    %3337 = vmatpush.msra.mxu0 %v3294
    %3338 = vmatpush.msra.mxu0 %v3293
    %3339 = vmatpush.msra.mxu0 %v3292
    %3340 = vmatpush.msra.mxu0 %v3291
    %3341 = vmatpush.msra.mxu0 %v3290
    %3342 = vmatmul.f32.gmra.mxu0 %v3273
    %v3343 = vpop.f32.mrf.mxu0
    %v3344 = vadd.f32 %v3324, %v3343
    %3345 = vdwg.mxu0
    %3346 = vmatpush.msra.mxu0 %v332
    %3347 = vmatpush.msra.mxu0 %v331
    %3348 = vmatpush.msra.mxu0 %v330
    %3349 = vmatpush.msra.mxu0 %v329
    %3350 = vmatpush.msra.mxu0 %v328
    %3351 = vmatpush.msra.mxu0 %v327
    %3352 = vmatpush.msra.mxu0 %v326
    %3353 = vmatpush.msra.mxu0 %v325
    %3354 = vmatpush.msra.mxu0 %v324
    %3355 = vmatpush.msra.mxu0 %v323
    %3356 = vmatpush.msra.mxu0 %v322
    %3357 = vmatpush.msra.mxu0 %v321
    %3358 = vmatpush.msra.mxu0 %v320
    %3359 = vmatpush.msra.mxu0 %v319
    %3360 = vmatpush.msra.mxu0 %v318
    %3361 = vmatpush.msra.mxu0 %v317
    %3362 = vmatmul.f32.gmra.mxu0 %v309
    %v3363 = vpop.f32.mrf.mxu0
    %v3364 = vadd.f32 %v3344, %v3363
    %3365 = vdwg.mxu0
    %3366 = vmatpush.msra.mxu0 %v348
    %3367 = vmatpush.msra.mxu0 %v347
    %3368 = vmatpush.msra.mxu0 %v346
    %3369 = vmatpush.msra.mxu0 %v345
    %3370 = vmatpush.msra.mxu0 %v344
    %3371 = vmatpush.msra.mxu0 %v343
    %3372 = vmatpush.msra.mxu0 %v342
    %3373 = vmatpush.msra.mxu0 %v341
    %3374 = vmatpush.msra.mxu0 %v340
    %3375 = vmatpush.msra.mxu0 %v339
    %3376 = vmatpush.msra.mxu0 %v338
    %3377 = vmatpush.msra.mxu0 %v337
    %3378 = vmatpush.msra.mxu0 %v336
    %3379 = vmatpush.msra.mxu0 %v335
    %3380 = vmatpush.msra.mxu0 %v334
    %3381 = vmatpush.msra.mxu0 %v333
    %3382 = vmatmul.f32.gmra.mxu0 %v310
    %v3383 = vpop.f32.mrf.mxu0
    %v3384 = vadd.f32 %v3364, %v3383
    %3385 = vdwg.mxu0
    %3386 = vmatpush.msra.mxu0 %v364
    %3387 = vmatpush.msra.mxu0 %v363
    %3388 = vmatpush.msra.mxu0 %v362
    %3389 = vmatpush.msra.mxu0 %v361
    %3390 = vmatpush.msra.mxu0 %v360
    %3391 = vmatpush.msra.mxu0 %v359
    %3392 = vmatpush.msra.mxu0 %v358
    %3393 = vmatpush.msra.mxu0 %v357
    %3394 = vmatpush.msra.mxu0 %v356
    %3395 = vmatpush.msra.mxu0 %v355
    %3396 = vmatpush.msra.mxu0 %v354
    %3397 = vmatpush.msra.mxu0 %v353
    %3398 = vmatpush.msra.mxu0 %v352
    %3399 = vmatpush.msra.mxu0 %v351
    %3400 = vmatpush.msra.mxu0 %v350
    %3401 = vmatpush.msra.mxu0 %v349
    %3402 = vmatmul.f32.gmra.mxu0 %v311
    %v3403 = vpop.f32.mrf.mxu0
    %v3404 = vadd.f32 %v3384, %v3403
    %3405 = vdwg.mxu0
    %3406 = vmatpush.msra.mxu0 %v380
    %3407 = vmatpush.msra.mxu0 %v379
    %3408 = vmatpush.msra.mxu0 %v378
    %3409 = vmatpush.msra.mxu0 %v377
    %3410 = vmatpush.msra.mxu0 %v376
    %3411 = vmatpush.msra.mxu0 %v375
    %3412 = vmatpush.msra.mxu0 %v374
    %3413 = vmatpush.msra.mxu0 %v373
    %3414 = vmatpush.msra.mxu0 %v372
    %3415 = vmatpush.msra.mxu0 %v371
    %3416 = vmatpush.msra.mxu0 %v370
    %3417 = vmatpush.msra.mxu0 %v369
    %3418 = vmatpush.msra.mxu0 %v368
    %3419 = vmatpush.msra.mxu0 %v367
    %3420 = vmatpush.msra.mxu0 %v366
    %3421 = vmatpush.msra.mxu0 %v365
    %3422 = vmatmul.f32.gmra.mxu0 %v312
    %v3423 = vpop.f32.mrf.mxu0
    %v3424 = vadd.f32 %v3404, %v3423
    %3425 = vdwg.mxu0
    %3426 = vmatpush.msra.mxu0 %v396
    %3427 = vmatpush.msra.mxu0 %v395
    %3428 = vmatpush.msra.mxu0 %v394
    %3429 = vmatpush.msra.mxu0 %v393
    %3430 = vmatpush.msra.mxu0 %v392
    %3431 = vmatpush.msra.mxu0 %v391
    %3432 = vmatpush.msra.mxu0 %v390
    %3433 = vmatpush.msra.mxu0 %v389
    %3434 = vmatpush.msra.mxu0 %v388
    %3435 = vmatpush.msra.mxu0 %v387
    %3436 = vmatpush.msra.mxu0 %v386
    %3437 = vmatpush.msra.mxu0 %v385
    %3438 = vmatpush.msra.mxu0 %v384
    %3439 = vmatpush.msra.mxu0 %v383
    %3440 = vmatpush.msra.mxu0 %v382
    %3441 = vmatpush.msra.mxu0 %v381
    %3442 = vmatmul.f32.gmra.mxu0 %v313
    %v3443 = vpop.f32.mrf.mxu0
    %v3444 = vadd.f32 %v3424, %v3443
    %3445 = vdwg.mxu0
    %3446 = vmatpush.msra.mxu0 %v412
    %3447 = vmatpush.msra.mxu0 %v411
    %3448 = vmatpush.msra.mxu0 %v410
    %3449 = vmatpush.msra.mxu0 %v409
    %3450 = vmatpush.msra.mxu0 %v408
    %3451 = vmatpush.msra.mxu0 %v407
    %3452 = vmatpush.msra.mxu0 %v406
    %3453 = vmatpush.msra.mxu0 %v405
    %3454 = vmatpush.msra.mxu0 %v404
    %3455 = vmatpush.msra.mxu0 %v403
    %3456 = vmatpush.msra.mxu0 %v402
    %3457 = vmatpush.msra.mxu0 %v401
    %3458 = vmatpush.msra.mxu0 %v400
    %3459 = vmatpush.msra.mxu0 %v399
    %3460 = vmatpush.msra.mxu0 %v398
    %3461 = vmatpush.msra.mxu0 %v397
    %3462 = vmatmul.f32.gmra.mxu0 %v314
    %v3463 = vpop.f32.mrf.mxu0
    %v3464 = vadd.f32 %v3444, %v3463
    %3465 = vdwg.mxu0
    %3466 = vmatpush.msra.mxu0 %v428
    %3467 = vmatpush.msra.mxu0 %v427
    %3468 = vmatpush.msra.mxu0 %v426
    %3469 = vmatpush.msra.mxu0 %v425
    %3470 = vmatpush.msra.mxu0 %v424
    %3471 = vmatpush.msra.mxu0 %v423
    %3472 = vmatpush.msra.mxu0 %v422
    %3473 = vmatpush.msra.mxu0 %v421
    %3474 = vmatpush.msra.mxu0 %v420
    %3475 = vmatpush.msra.mxu0 %v419
    %3476 = vmatpush.msra.mxu0 %v418
    %3477 = vmatpush.msra.mxu0 %v417
    %3478 = vmatpush.msra.mxu0 %v416
    %3479 = vmatpush.msra.mxu0 %v415
    %3480 = vmatpush.msra.mxu0 %v414
    %3481 = vmatpush.msra.mxu0 %v413
    %3482 = vmatmul.f32.gmra.mxu0 %v315
    %v3483 = vpop.f32.mrf.mxu0
    %v3484 = vadd.f32 %v3464, %v3483
    %3485 = vdwg.mxu0
    %3486 = vmatpush.msra.mxu0 %v444
    %3487 = vmatpush.msra.mxu0 %v443
    %3488 = vmatpush.msra.mxu0 %v442
    %3489 = vmatpush.msra.mxu0 %v441
    %3490 = vmatpush.msra.mxu0 %v440
    %3491 = vmatpush.msra.mxu0 %v439
    %3492 = vmatpush.msra.mxu0 %v438
    %3493 = vmatpush.msra.mxu0 %v437
    %3494 = vmatpush.msra.mxu0 %v436
    %3495 = vmatpush.msra.mxu0 %v435
    %3496 = vmatpush.msra.mxu0 %v434
    %3497 = vmatpush.msra.mxu0 %v433
    %3498 = vmatpush.msra.mxu0 %v432
    %3499 = vmatpush.msra.mxu0 %v431
    %3500 = vmatpush.msra.mxu0 %v430
    %3501 = vmatpush.msra.mxu0 %v429
    %3502 = vmatmul.f32.gmra.mxu0 %v316
    %v3503 = vpop.f32.mrf.mxu0
    %v3504 = vadd.f32 %v3484, %v3503
    %3505 = vdwg.mxu0
    %v3506 = vld [vmem:[%s9] sm:$0x1]
    %v3508 = vperm.slane %v3506, 0
    %v3510 = vadd.f32 %v3504, %v3508
    %3511 = vst [vmem:[%s10] sm:$0xff] %v3510
    // Predicated region
    $region58: #{conv_lassonet_forward.1} parent=1 // pred_check
      _
    $region59: #{conv_lassonet_forward.1} parent=1 // pred_check_branch
      %3513 = sbr.rel (0) target = $region61
    $region60: #{conv_lassonet_forward.1} parent=1 // pred_region
      _
    $region61: #{conv_lassonet_forward.1} parent=1 // pred_fallthru
      _
    // Predicated region
    $region62: #{conv_lassonet_forward.1} parent=1 // pred_check
      _
    $region63: #{conv_lassonet_forward.1} parent=1 // pred_check_branch
      %3515 = sbr.rel (0) target = $region65
    $region64: #{conv_lassonet_forward.1} parent=1 // pred_region
      _
    $region65: #{conv_lassonet_forward.1} parent=1 // pred_fallthru
      _
    %3516 = vsyncpa [#allocation4], 1
    %3517 = vsyncpa [#allocation6], 1
    %3518 = vsyncpa [#allocation9], 1

</llo_original>
